<compile_context>
chip_gen: v7x
topology: tpu7x:2x2x1
jax: 0.10.0
libtpu: 0.0.40
codegen_flags: <defaults>
</compile_context>

<pallas_src>
import functools

import jax
import jax.numpy as jnp
from jax import lax
from jax.experimental import pallas as pl
from jax.experimental.pallas import tpu as pltpu

# ---- model hyper-parameters (match the PyTorch module defaults) -------------
NUM_CLASSES = 72
NC_PAD = 128       # lane-dense padded class dim (sliced back to 72 outside)
C_IN = 32          # input_channels_per_cue
C_CONV = 64        # conv_channels
K = 5              # kernel_size
PAD = K // 2
EMBED = 64         # embed_dim (== conv_channels, so no extra projection)
HEADS = 4
HEAD_DIM = EMBED // HEADS
L = 16             # small demo sequence length
EPS_BN = 1e-5
EPS_LN = 1e-5


def _round_up(n, m):
    return ((n + m - 1) // m) * m


# ------------------------------- kernel --------------------------------------
def sound_loc_kernel(
    x_ref,       # (3, TB*L, K*C_IN)   compute dtype, conv1 im2col done in wrapper
    w1_ref,      # (3, K*C_IN, C_CONV) compute dtype, BN1 scale folded in
    sh1_ref,     # (3, 1, C_CONV)      f32 folded conv1-bias + BN1 shift
    w2_ref,      # (3, K*C_CONV, C_CONV)
    sh2_ref,     # (3, 1, C_CONV)
    wattn_ref,   # (3, 1, C_CONV)      attention-pooling score weight (f32)
    wqkv_ref,    # (EMBED, 3*EMBED)    fused QKV projection (x @ W layout)
    bqkv_ref,    # (1, 3*EMBED)        f32
    wo_ref,      # (EMBED, EMBED)
    bo_ref,      # (1, EMBED)
    whead_ref,   # (EMBED, EMBED)      f32, block-diag head indicator / sqrt(dh)
    gamma_ref,   # (1, EMBED)          LayerNorm weight
    beta_ref,    # (1, EMBED)          LayerNorm bias
    wfc_ref,     # (3, EMBED, NC_PAD)  final FC split per cue token
    bfc_ref,     # (1, NC_PAD)
    out_ref,     # (TB, NC_PAD)        f32 logits (classes padded to 128)
    *,
    approx_recip,
):
    tb = out_ref.shape[0]
    cdtype = w2_ref.dtype

    def mm(a, w):
        # cast the LHS to the (possibly bf16) weight dtype; accumulate in f32
        return jnp.dot(a.astype(w.dtype), w, preferred_element_type=jnp.float32)

    def rcp(x):
        return pl.reciprocal(x, approx=approx_recip)

    # zero-pad block for conv2 — hoisted out of the cue loop (no CSE otherwise)
    zpad = jnp.zeros((tb, PAD, C_CONV), cdtype)

    # ---------------- 3 cue branches -----------------------------------------
    ctxs = []
    for i in range(3):
        # conv1: one im2col matmul; taps already expanded in the wrapper.
        h = mm(x_ref[i], w1_ref[i])                           # (TB*L, C_CONV) f32
        h = jnp.maximum(h + sh1_ref[i], 0.0)

        # conv2: pad + im2col in the compute dtype (bf16 on the fast path).
        h3 = h.astype(cdtype).reshape(tb, L, C_CONV)
        hp = jnp.concatenate([zpad, h3, zpad], axis=1)        # (TB, L+2*PAD, C)
        cols2 = jnp.concatenate([hp[:, k:k + L, :] for k in range(K)],
                                axis=-1)                      # (TB, L, K*C_CONV)
        f = mm(cols2.reshape(tb * L, K * C_CONV), w2_ref[i])
        feat = jnp.maximum(f + sh2_ref[i], 0.0).reshape(tb, L, C_CONV)   # f32

        # self-attention pooling over L (the attn_score bias is constant over
        # L and cancels in the softmax).
        scores = jnp.sum(feat * wattn_ref[i], axis=-1, keepdims=True)    # (TB,L,1)
        m = jnp.max(scores, axis=1, keepdims=True)
        e = jnp.exp(scores - m)
        wts = e * rcp(jnp.sum(e, axis=1, keepdims=True))
        ctxs.append(jnp.sum(feat * wts, axis=1))              # (TB, EMBED) f32

    # token-major sequence: row t*TB + b  <->  (sample b, cue token t)
    seq = jnp.concatenate(ctxs, axis=0)                       # (3*TB, EMBED)

    # ---------------- multi-head self-attention over the 3 cue tokens --------
    # fused QKV: one (3*TB,64)@(64,192) matmul, then lane-slice q / k / v
    qkv = mm(seq, wqkv_ref[...]) + bqkv_ref[...]
    q = qkv[:, :EMBED]
    k_ = qkv[:, EMBED:2 * EMBED]
    v = qkv[:, 2 * EMBED:]

    qs = [q[t * tb:(t + 1) * tb, :] for t in range(3)]
    ks = [k_[t * tb:(t + 1) * tb, :] for t in range(3)]
    vs = [v[t * tb:(t + 1) * tb, :] for t in range(3)]

    # Per-head scores via one (9*TB,64)@(64,64) matmul against a scaled
    # block-diagonal head indicator. The score for each head comes back
    # broadcast across that head's 16 lanes, so the softmax and the weighted
    # V-sum stay full-width (no 16-lane slices, no XLU reductions).
    prods = jnp.concatenate([qs[t] * ks[u] for t in range(3) for u in range(3)],
                            axis=0)                           # (9*TB, EMBED)
    s_all = jnp.dot(prods, whead_ref[...], preferred_element_type=jnp.float32)

    tok_ctx = []
    for t in range(3):                                        # query token
        s = [s_all[(3 * t + u) * tb:(3 * t + u + 1) * tb, :] for u in range(3)]
        m = jnp.maximum(jnp.maximum(s[0], s[1]), s[2])
        e = [jnp.exp(su - m) for su in s]
        rd = rcp(e[0] + e[1] + e[2])
        tok_ctx.append((e[0] * vs[0] + e[1] * vs[1] + e[2] * vs[2]) * rd)
    attn = jnp.concatenate(tok_ctx, axis=0)                   # (3*TB, EMBED)
    attn = mm(attn, wo_ref[...]) + bo_ref[...]

    # ---------------- LayerNorm over the embedding axis ----------------------
    mu = jnp.mean(attn, axis=-1, keepdims=True)
    var = jnp.mean((attn - mu) ** 2, axis=-1, keepdims=True)
    y = (attn - mu) * lax.rsqrt(var + EPS_LN) * gamma_ref[...] + beta_ref[...]

    # ---------------- final FC: three accumulating 64-deep matmuls -----------
    acc = mm(y[0:tb, :], wfc_ref[0])
    acc += mm(y[tb:2 * tb, :], wfc_ref[1])
    acc += mm(y[2 * tb:3 * tb, :], wfc_ref[2])
    out_ref[...] = acc + bfc_ref[...]                         # (TB, NC_PAD)


# ------------------------------ wrapper ---------------------------------------
def forward_pallas(x, p, compute_dtype=jnp.bfloat16, block_b=128):
    """x: (B, 3, C_IN, L) float32 — same axis convention as the PyTorch model.

    block_b: batch tile per grid step. Keep <=128 on v7x (64 MiB VMEM/TC, and
    aim for >=2 grid steps so both TensorCores get work); 256 is fine on
    v6e/v5e (128 MiB VMEM)."""
    B = x.shape[0]
    tb = min(_round_up(block_b, 8), _round_up(B, 8))   # batch tile, multiple of 8
    Bp = _round_up(B, tb)
    if Bp != B:
        x = jnp.pad(x, ((0, Bp - B), (0, 0), (0, 0), (0, 0)))

    # Glue (not hot path): NCL -> channel-last, pad L, expand the K conv taps
    # (conv1 im2col) and cast to the compute dtype. Layout (3, Bp*L, K*C_IN)
    # so each grid step reads a (3, tb*L, K*C_IN) slab that feeds the MXU
    # directly with no in-kernel slicing/concat for conv1.
    xt = jnp.transpose(x, (0, 1, 3, 2))                        # (Bp, 3, L, C_IN)
    xt = jnp.pad(xt, ((0, 0), (0, 0), (PAD, PAD), (0, 0)))
    cols1 = jnp.concatenate([xt[:, :, k:k + L, :] for k in range(K)], axis=-1)
    cols1 = jnp.transpose(cols1, (1, 0, 2, 3)).reshape(3, Bp * L, K * C_IN)
    cols1 = cols1.astype(compute_dtype)

    def fold_bn(layer):
        sc = p[f'bn{layer}_g'] / jnp.sqrt(p[f'bn{layer}_rv'] + EPS_BN)      # (3,C)
        sh = p[f'conv{layer}_b'] * sc + (p[f'bn{layer}_b'] - p[f'bn{layer}_rm'] * sc)
        return sc, sh

    sc1, sh1 = fold_bn(0)
    sc2, sh2 = fold_bn(1)
    # conv weights -> im2col layout (3, K*Cin, Cout); fold the BN scale in.
    w1 = jnp.transpose(p['conv0_w'], (0, 3, 2, 1)).reshape(3, K * C_IN, C_CONV)
    w1 = (w1 * sc1[:, None, :]).astype(compute_dtype)
    w2 = jnp.transpose(p['conv1_w'], (0, 3, 2, 1)).reshape(3, K * C_CONV, C_CONV)
    w2 = (w2 * sc2[:, None, :]).astype(compute_dtype)
    sh1 = sh1[:, None, :]
    sh2 = sh2[:, None, :]
    wattn = p['attn_w']                                        # (3, 1, C_CONV)

    # fused QKV weights (x @ W layout), out-projection, LayerNorm
    wqkv = jnp.concatenate([p['wq'].T, p['wk'].T, p['wv'].T],
                           axis=1).astype(compute_dtype)       # (64, 192)
    bqkv = jnp.concatenate([p['bq'], p['bk'], p['bv']])[None, :]
    wo = p['wo'].T.astype(compute_dtype)
    bo = p['bo'][None, :]
    head_ids = jnp.arange(EMBED) // HEAD_DIM
    whead = ((head_ids[:, None] == head_ids[None, :]).astype(jnp.float32)
             / jnp.sqrt(float(HEAD_DIM)))                      # (64, 64) f32
    gamma = p['ln_g'][None, :]
    beta = p['ln_b'][None, :]
    # final fc: classes padded to a lane-dense 128-wide output, split per token
    wfc = jnp.pad(p['fc_w'].T, ((0, 0), (0, NC_PAD - NUM_CLASSES)))
    wfc = wfc.reshape(3, EMBED, NC_PAD).astype(compute_dtype)
    bfc = jnp.pad(p['fc_b'], (0, NC_PAD - NUM_CLASSES))[None, :]

    def full_spec(shape):
        n = len(shape)
        return pl.BlockSpec(shape, lambda g, _n=n: (0,) * _n)

    in_specs = [
        pl.BlockSpec((3, tb * L, K * C_IN), lambda g: (0, g, 0)),
        full_spec((3, K * C_IN, C_CONV)),
        full_spec((3, 1, C_CONV)),
        full_spec((3, K * C_CONV, C_CONV)),
        full_spec((3, 1, C_CONV)),
        full_spec((3, 1, C_CONV)),
        full_spec((EMBED, 3 * EMBED)),
        full_spec((1, 3 * EMBED)),
        full_spec((EMBED, EMBED)),
        full_spec((1, EMBED)),
        full_spec((EMBED, EMBED)),
        full_spec((1, EMBED)),
        full_spec((1, EMBED)),
        full_spec((3, EMBED, NC_PAD)),
        full_spec((1, NC_PAD)),
    ]

    kernel = functools.partial(sound_loc_kernel,
                               approx_recip=(compute_dtype != jnp.float32))
    out = pl.pallas_call(
        kernel,
        out_shape=jax.ShapeDtypeStruct((Bp, NC_PAD), jnp.float32),
        grid_spec=pltpu.PrefetchScalarGridSpec(
            num_scalar_prefetch=0,
            grid=(Bp // tb,),
            in_specs=in_specs,
            out_specs=pl.BlockSpec((tb, NC_PAD), lambda g: (g, 0)),
        ),
        compiler_params=pltpu.CompilerParams(
            dimension_semantics=("parallel",),
            vmem_limit_bytes=48 * 1024 * 1024),   # under v7x's 64 MiB/TC
    )(cols1, w1, sh1, w2, sh2, wattn, wqkv, bqkv, wo, bo, whead,
      gamma, beta, wfc, bfc)
    return out[:B, :NUM_CLASSES]


# --------------------- deterministic parameter init ---------------------------
def init_params(key):
    keys = iter(jax.random.split(key, 40))

    def rnd(shape, scale=0.1):
        return scale * jax.random.normal(next(keys), shape, jnp.float32)

    p = {}
    # per-cue conv stacks (3 branches, PyTorch layout (Cout, Cin, K))
    p['conv0_w'] = rnd((3, C_CONV, C_IN, K))
    p['conv0_b'] = rnd((3, C_CONV))
    p['conv1_w'] = rnd((3, C_CONV, C_CONV, K))
    p['conv1_b'] = rnd((3, C_CONV))
    for layer in (0, 1):
        p[f'bn{layer}_g'] = 1.0 + rnd((3, C_CONV))
        p[f'bn{layer}_b'] = rnd((3, C_CONV))
        p[f'bn{layer}_rm'] = rnd((3, C_CONV))
        p[f'bn{layer}_rv'] = 1.0 + 0.1 * jnp.abs(
            jax.random.normal(next(keys), (3, C_CONV), jnp.float32))
    # attention pooling (per cue): Linear(64 -> 1)
    p['attn_w'] = rnd((3, 1, C_CONV))
    p['attn_b'] = rnd((3, 1))
    # multi-head attention (PyTorch convention: y = x @ W.T + b)
    p['wq'] = rnd((EMBED, EMBED)); p['bq'] = rnd((EMBED,))
    p['wk'] = rnd((EMBED, EMBED)); p['bk'] = rnd((EMBED,))
    p['wv'] = rnd((EMBED, EMBED)); p['bv'] = rnd((EMBED,))
    p['wo'] = rnd((EMBED, EMBED)); p['bo'] = rnd((EMBED,))
    # LayerNorm
    p['ln_g'] = 1.0 + rnd((EMBED,)); p['ln_b'] = rnd((EMBED,))
    # final fc: Linear(3*EMBED -> NUM_CLASSES)
    p['fc_w'] = rnd((NUM_CLASSES, 3 * EMBED)); p['fc_b'] = rnd((NUM_CLASSES,))
    return p


# --------------------- pure-JAX reference (PyTorch semantics) -----------------
def reference_forward(x, p):
    B = x.shape[0]
    cue_vecs = []
    for i in range(3):
        h = x[:, i]                                            # (B, C_IN, L)
        for layer in range(2):
            w = p[f'conv{layer}_w'][i]
            b = p[f'conv{layer}_b'][i]
            h = lax.conv_general_dilated(h, w, window_strides=(1,),
                                         padding=[(PAD, PAD)],
                                         dimension_numbers=('NCH', 'OIH', 'NCH'))
            h = h + b[None, :, None]
            g = p[f'bn{layer}_g'][i]; be = p[f'bn{layer}_b'][i]
            rm = p[f'bn{layer}_rm'][i]; rv = p[f'bn{layer}_rv'][i]
            h = (h - rm[None, :, None]) / jnp.sqrt(rv[None, :, None] + EPS_BN)
            h = h * g[None, :, None] + be[None, :, None]
            h = jnp.maximum(h, 0.0)
        feat = jnp.transpose(h, (0, 2, 1))                     # (B, L, C_CONV)
        scores = feat @ p['attn_w'][i].T + p['attn_b'][i]      # (B, L, 1)
        wts = jax.nn.softmax(scores, axis=1)
        cue_vecs.append(jnp.sum(feat * wts, axis=1))           # (B, EMBED)
    seq = jnp.stack(cue_vecs, axis=1)                          # (B, 3, EMBED)

    q = seq @ p['wq'].T + p['bq']
    k = seq @ p['wk'].T + p['bk']
    v = seq @ p['wv'].T + p['bv']

    def split(t):
        return t.reshape(B, 3, HEADS, HEAD_DIM).transpose(0, 2, 1, 3)

    qh, kh, vh = split(q), split(k), split(v)
    att = (qh @ jnp.swapaxes(kh, -1, -2)) / jnp.sqrt(HEAD_DIM)
    pr = jax.nn.softmax(att, axis=-1)
    o = (pr @ vh).transpose(0, 2, 1, 3).reshape(B, 3, EMBED)
    o = o @ p['wo'].T + p['bo']

    mu = o.mean(-1, keepdims=True)
    var = ((o - mu) ** 2).mean(-1, keepdims=True)
    o = (o - mu) / jnp.sqrt(var + EPS_LN) * p['ln_g'] + p['ln_b']

    combined = o.reshape(B, 3 * EMBED)
    return combined @ p['fc_w'].T + p['fc_b']


# ------------------------------------ main -------------------------------------
if __name__ == "__main__":
    key = jax.random.PRNGKey(0)
    pkey, xkey = jax.random.split(key)
    params = init_params(pkey)

    B = 12                          # not a multiple of the block -> exercises padding
    x = jax.random.normal(xkey, (B, 3, C_IN, L), jnp.float32)

    ref = reference_forward(x, params)

    # f32-operand path (exact reciprocal): tight numerical check of kernel math.
    out_f32 = jax.block_until_ready(
        forward_pallas(x, params, compute_dtype=jnp.float32, block_b=8))
    assert out_f32.shape == (B, NUM_CLASSES)
    if not jnp.allclose(out_f32, ref, rtol=2e-3, atol=2e-3):
        raise AssertionError(
            f"f32 mismatch vs reference: max abs err = {jnp.max(jnp.abs(out_f32 - ref))}")

    # bf16-operand fast path: error bounded by bf16 operand rounding; check
    # relative RMS instead of a tight elementwise tolerance.
    out_bf16 = jax.block_until_ready(
        forward_pallas(x, params, compute_dtype=jnp.bfloat16, block_b=8))
    rel_rms = jnp.sqrt(jnp.mean((out_bf16 - ref) ** 2) / jnp.mean(ref ** 2))
    if not rel_rms < 0.05:
        raise AssertionError(f"bf16 path error too large: rel RMS = {rel_rms}")

    print("KERNEL_OK")
</pallas_src>

<mosaic_0001>
module attributes {stable_mosaic.version = 11 : i64} {
  func.func @sound_loc_kernel(%arg0: i32, %arg1: memref<3x128x160xf32, #tpu.memory_space<vmem>>, %arg2: memref<3x160x64xf32, #tpu.memory_space<vmem>>, %arg3: memref<3x1x64xf32, #tpu.memory_space<vmem>>, %arg4: memref<3x320x64xf32, #tpu.memory_space<vmem>>, %arg5: memref<3x1x64xf32, #tpu.memory_space<vmem>>, %arg6: memref<3x1x64xf32, #tpu.memory_space<vmem>>, %arg7: memref<64x192xf32, #tpu.memory_space<vmem>>, %arg8: memref<1x192xf32, #tpu.memory_space<vmem>>, %arg9: memref<64x64xf32, #tpu.memory_space<vmem>>, %arg10: memref<1x64xf32, #tpu.memory_space<vmem>>, %arg11: memref<64x64xf32, #tpu.memory_space<vmem>>, %arg12: memref<1x64xf32, #tpu.memory_space<vmem>>, %arg13: memref<1x64xf32, #tpu.memory_space<vmem>>, %arg14: memref<3x64x128xf32, #tpu.memory_space<vmem>>, %arg15: memref<1x128xf32, #tpu.memory_space<vmem>>, %arg16: memref<8x128xf32, #tpu.memory_space<vmem>>) attributes {dimension_semantics = [#tpu.dimension_semantics<parallel>], iteration_bounds = array<i64: 2>, scalar_prefetch = 0 : i64, scratch_operands = 0 : i64, tpu.core_type = #tpu.core_type<tc>, window_params = [{transform_indices = @transform_0, window_bounds = array<i64: 3, 128, 160>}, {pipeline_mode = #tpu.pipeline_mode<synchronous>, transform_indices = @transform_1, window_bounds = array<i64: 3, 160, 64>}, {pipeline_mode = #tpu.pipeline_mode<synchronous>, transform_indices = @transform_2, window_bounds = array<i64: 3, 1, 64>}, {pipeline_mode = #tpu.pipeline_mode<synchronous>, transform_indices = @transform_3, window_bounds = array<i64: 3, 320, 64>}, {pipeline_mode = #tpu.pipeline_mode<synchronous>, transform_indices = @transform_4, window_bounds = array<i64: 3, 1, 64>}, {pipeline_mode = #tpu.pipeline_mode<synchronous>, transform_indices = @transform_5, window_bounds = array<i64: 3, 1, 64>}, {pipeline_mode = #tpu.pipeline_mode<synchronous>, transform_indices = @transform_6, window_bounds = array<i64: 64, 192>}, {pipeline_mode = #tpu.pipeline_mode<synchronous>, transform_indices = @transform_7, window_bounds = array<i64: 1, 192>}, {pipeline_mode = #tpu.pipeline_mode<synchronous>, transform_indices = @transform_8, window_bounds = array<i64: 64, 64>}, {pipeline_mode = #tpu.pipeline_mode<synchronous>, transform_indices = @transform_9, window_bounds = array<i64: 1, 64>}, {pipeline_mode = #tpu.pipeline_mode<synchronous>, transform_indices = @transform_10, window_bounds = array<i64: 64, 64>}, {pipeline_mode = #tpu.pipeline_mode<synchronous>, transform_indices = @transform_11, window_bounds = array<i64: 1, 64>}, {pipeline_mode = #tpu.pipeline_mode<synchronous>, transform_indices = @transform_12, window_bounds = array<i64: 1, 64>}, {pipeline_mode = #tpu.pipeline_mode<synchronous>, transform_indices = @transform_13, window_bounds = array<i64: 3, 64, 128>}, {pipeline_mode = #tpu.pipeline_mode<synchronous>, transform_indices = @transform_14, window_bounds = array<i64: 1, 128>}, {transform_indices = @transform_15, window_bounds = array<i64: 8, 128>}]} {
    %cst = arith.constant 0.000000e+00 : f32
    %0 = vector.broadcast %cst : f32 to vector<8x2x64xf32>
    %c0 = arith.constant 0 : index
    %c0_0 = arith.constant 0 : index
    %c0_1 = arith.constant 0 : index
    %1 = vector.load %arg1[%c0, %c0_0, %c0_1] : memref<3x128x160xf32, #tpu.memory_space<vmem>>, vector<1x128x160xf32>
    %2 = vector.shape_cast %1 : vector<1x128x160xf32> to vector<128x160xf32>
    %c0_2 = arith.constant 0 : index
    %c0_3 = arith.constant 0 : index
    %c0_4 = arith.constant 0 : index
    %3 = vector.load %arg2[%c0_2, %c0_3, %c0_4] : memref<3x160x64xf32, #tpu.memory_space<vmem>>, vector<1x160x64xf32>
    %4 = vector.shape_cast %3 : vector<1x160x64xf32> to vector<160x64xf32>
    %cst_5 = arith.constant dense<0.000000e+00> : vector<128x64xf32>
    %5 = tpu.matmul %2, %4, %cst_5 {dimension_numbers = #tpu.dot_dimension_numbers<[1], [0], [0], [1], [0, 0, 1, 1], [], []>} : vector<128x160xf32>, vector<160x64xf32>, vector<128x64xf32> -> vector<128x64xf32>
    %c0_6 = arith.constant 0 : index
    %c0_7 = arith.constant 0 : index
    %c0_8 = arith.constant 0 : index
    %6 = vector.load %arg3[%c0_6, %c0_7, %c0_8] : memref<3x1x64xf32, #tpu.memory_space<vmem>>, vector<1x1x64xf32>
    %7 = vector.shape_cast %6 : vector<1x1x64xf32> to vector<1x64xf32>
    %8 = vector.broadcast %7 : vector<1x64xf32> to vector<128x64xf32>
    %9 = arith.addf %5, %8 : vector<128x64xf32>
    %cst_9 = arith.constant 0.000000e+00 : f32
    %10 = vector.broadcast %cst_9 : f32 to vector<128x64xf32>
    %11 = arith.maximumf %9, %10 : vector<128x64xf32>
    %12 = vector.shape_cast %11 : vector<128x64xf32> to vector<8x16x64xf32>
    %13 = tpu.concatenate %0, %12, %0 in 1 : vector<8x2x64xf32>, vector<8x16x64xf32>, vector<8x2x64xf32> -> vector<8x20x64xf32>
    %14 = vector.extract_strided_slice %13 {offsets = [0, 0, 0], sizes = [8, 16, 64], strides = [1, 1, 1]} : vector<8x20x64xf32> to vector<8x16x64xf32>
    %15 = vector.extract_strided_slice %13 {offsets = [0, 1, 0], sizes = [8, 16, 64], strides = [1, 1, 1]} : vector<8x20x64xf32> to vector<8x16x64xf32>
    %16 = vector.extract_strided_slice %13 {offsets = [0, 2, 0], sizes = [8, 16, 64], strides = [1, 1, 1]} : vector<8x20x64xf32> to vector<8x16x64xf32>
    %17 = vector.extract_strided_slice %13 {offsets = [0, 3, 0], sizes = [8, 16, 64], strides = [1, 1, 1]} : vector<8x20x64xf32> to vector<8x16x64xf32>
    %18 = vector.extract_strided_slice %13 {offsets = [0, 4, 0], sizes = [8, 16, 64], strides = [1, 1, 1]} : vector<8x20x64xf32> to vector<8x16x64xf32>
    %19 = tpu.concatenate %14, %15, %16, %17, %18 in 2 : vector<8x16x64xf32>, vector<8x16x64xf32>, vector<8x16x64xf32>, vector<8x16x64xf32>, vector<8x16x64xf32> -> vector<8x16x320xf32>
    %20 = vector.shape_cast %19 : vector<8x16x320xf32> to vector<128x320xf32>
    %c0_10 = arith.constant 0 : index
    %c0_11 = arith.constant 0 : index
    %c0_12 = arith.constant 0 : index
    %21 = vector.load %arg4[%c0_10, %c0_11, %c0_12] : memref<3x320x64xf32, #tpu.memory_space<vmem>>, vector<1x320x64xf32>
    %22 = vector.shape_cast %21 : vector<1x320x64xf32> to vector<320x64xf32>
    %cst_13 = arith.constant dense<0.000000e+00> : vector<128x64xf32>
    %23 = tpu.matmul %20, %22, %cst_13 {dimension_numbers = #tpu.dot_dimension_numbers<[1], [0], [0], [1], [0, 0, 1, 1], [], []>} : vector<128x320xf32>, vector<320x64xf32>, vector<128x64xf32> -> vector<128x64xf32>
    %c0_14 = arith.constant 0 : index
    %c0_15 = arith.constant 0 : index
    %c0_16 = arith.constant 0 : index
    %24 = vector.load %arg5[%c0_14, %c0_15, %c0_16] : memref<3x1x64xf32, #tpu.memory_space<vmem>>, vector<1x1x64xf32>
    %25 = vector.shape_cast %24 : vector<1x1x64xf32> to vector<1x64xf32>
    %26 = vector.broadcast %25 : vector<1x64xf32> to vector<128x64xf32>
    %27 = arith.addf %23, %26 : vector<128x64xf32>
    %cst_17 = arith.constant 0.000000e+00 : f32
    %28 = vector.broadcast %cst_17 : f32 to vector<128x64xf32>
    %29 = arith.maximumf %27, %28 : vector<128x64xf32>
    %30 = vector.shape_cast %29 : vector<128x64xf32> to vector<8x16x64xf32>
    %c0_18 = arith.constant 0 : index
    %c0_19 = arith.constant 0 : index
    %c0_20 = arith.constant 0 : index
    %31 = vector.load %arg6[%c0_18, %c0_19, %c0_20] : memref<3x1x64xf32, #tpu.memory_space<vmem>>, vector<1x1x64xf32>
    %32 = vector.shape_cast %31 : vector<1x1x64xf32> to vector<1x64xf32>
    %33 = vector.shape_cast %32 : vector<1x64xf32> to vector<1x1x64xf32>
    %34 = vector.broadcast %33 : vector<1x1x64xf32> to vector<8x16x64xf32>
    %35 = arith.mulf %30, %34 : vector<8x16x64xf32>
    %cst_21 = arith.constant dense<0.000000e+00> : vector<8x16xf32>
    %36 = vector.multi_reduction <add>, %35, %cst_21 [2] : vector<8x16x64xf32> to vector<8x16xf32>
    %37 = vector.shape_cast %36 : vector<8x16xf32> to vector<8x16x1xf32>
    %cst_22 = arith.constant dense<0xFF800000> : vector<8x1xf32>
    %38 = vector.multi_reduction <maximumf>, %37, %cst_22 [1] : vector<8x16x1xf32> to vector<8x1xf32>
    %39 = vector.shape_cast %38 : vector<8x1xf32> to vector<8x1x1xf32>
    %40 = vector.broadcast %39 : vector<8x1x1xf32> to vector<8x16x1xf32>
    %41 = arith.subf %37, %40 : vector<8x16x1xf32>
    %42 = math.exp %41 : vector<8x16x1xf32>
    %cst_23 = arith.constant dense<0.000000e+00> : vector<8x1xf32>
    %43 = vector.multi_reduction <add>, %42, %cst_23 [1] : vector<8x16x1xf32> to vector<8x1xf32>
    %44 = vector.shape_cast %43 : vector<8x1xf32> to vector<8x1x1xf32>
    %45 = tpu.reciprocal %44 : vector<8x1x1xf32> -> vector<8x1x1xf32>
    %46 = vector.broadcast %45 : vector<8x1x1xf32> to vector<8x16x1xf32>
    %47 = arith.mulf %42, %46 : vector<8x16x1xf32>
    %48 = vector.broadcast %47 : vector<8x16x1xf32> to vector<8x16x64xf32>
    %49 = arith.mulf %30, %48 : vector<8x16x64xf32>
    %cst_24 = arith.constant dense<0.000000e+00> : vector<8x64xf32>
    %50 = vector.multi_reduction <add>, %49, %cst_24 [1] : vector<8x16x64xf32> to vector<8x64xf32>
    %c1 = arith.constant 1 : index
    %c0_25 = arith.constant 0 : index
    %c0_26 = arith.constant 0 : index
    %51 = vector.load %arg1[%c1, %c0_25, %c0_26] : memref<3x128x160xf32, #tpu.memory_space<vmem>>, vector<1x128x160xf32>
    %52 = vector.shape_cast %51 : vector<1x128x160xf32> to vector<128x160xf32>
    %c1_27 = arith.constant 1 : index
    %c0_28 = arith.constant 0 : index
    %c0_29 = arith.constant 0 : index
    %53 = vector.load %arg2[%c1_27, %c0_28, %c0_29] : memref<3x160x64xf32, #tpu.memory_space<vmem>>, vector<1x160x64xf32>
    %54 = vector.shape_cast %53 : vector<1x160x64xf32> to vector<160x64xf32>
    %cst_30 = arith.constant dense<0.000000e+00> : vector<128x64xf32>
    %55 = tpu.matmul %52, %54, %cst_30 {dimension_numbers = #tpu.dot_dimension_numbers<[1], [0], [0], [1], [0, 0, 1, 1], [], []>} : vector<128x160xf32>, vector<160x64xf32>, vector<128x64xf32> -> vector<128x64xf32>
    %c1_31 = arith.constant 1 : index
    %c0_32 = arith.constant 0 : index
    %c0_33 = arith.constant 0 : index
    %56 = vector.load %arg3[%c1_31, %c0_32, %c0_33] : memref<3x1x64xf32, #tpu.memory_space<vmem>>, vector<1x1x64xf32>
    %57 = vector.shape_cast %56 : vector<1x1x64xf32> to vector<1x64xf32>
    %58 = vector.broadcast %57 : vector<1x64xf32> to vector<128x64xf32>
    %59 = arith.addf %55, %58 : vector<128x64xf32>
    %cst_34 = arith.constant 0.000000e+00 : f32
    %60 = vector.broadcast %cst_34 : f32 to vector<128x64xf32>
    %61 = arith.maximumf %59, %60 : vector<128x64xf32>
    %62 = vector.shape_cast %61 : vector<128x64xf32> to vector<8x16x64xf32>
    %63 = tpu.concatenate %0, %62, %0 in 1 : vector<8x2x64xf32>, vector<8x16x64xf32>, vector<8x2x64xf32> -> vector<8x20x64xf32>
    %64 = vector.extract_strided_slice %63 {offsets = [0, 0, 0], sizes = [8, 16, 64], strides = [1, 1, 1]} : vector<8x20x64xf32> to vector<8x16x64xf32>
    %65 = vector.extract_strided_slice %63 {offsets = [0, 1, 0], sizes = [8, 16, 64], strides = [1, 1, 1]} : vector<8x20x64xf32> to vector<8x16x64xf32>
    %66 = vector.extract_strided_slice %63 {offsets = [0, 2, 0], sizes = [8, 16, 64], strides = [1, 1, 1]} : vector<8x20x64xf32> to vector<8x16x64xf32>
    %67 = vector.extract_strided_slice %63 {offsets = [0, 3, 0], sizes = [8, 16, 64], strides = [1, 1, 1]} : vector<8x20x64xf32> to vector<8x16x64xf32>
    %68 = vector.extract_strided_slice %63 {offsets = [0, 4, 0], sizes = [8, 16, 64], strides = [1, 1, 1]} : vector<8x20x64xf32> to vector<8x16x64xf32>
    %69 = tpu.concatenate %64, %65, %66, %67, %68 in 2 : vector<8x16x64xf32>, vector<8x16x64xf32>, vector<8x16x64xf32>, vector<8x16x64xf32>, vector<8x16x64xf32> -> vector<8x16x320xf32>
    %70 = vector.shape_cast %69 : vector<8x16x320xf32> to vector<128x320xf32>
    %c1_35 = arith.constant 1 : index
    %c0_36 = arith.constant 0 : index
    %c0_37 = arith.constant 0 : index
    %71 = vector.load %arg4[%c1_35, %c0_36, %c0_37] : memref<3x320x64xf32, #tpu.memory_space<vmem>>, vector<1x320x64xf32>
    %72 = vector.shape_cast %71 : vector<1x320x64xf32> to vector<320x64xf32>
    %cst_38 = arith.constant dense<0.000000e+00> : vector<128x64xf32>
    %73 = tpu.matmul %70, %72, %cst_38 {dimension_numbers = #tpu.dot_dimension_numbers<[1], [0], [0], [1], [0, 0, 1, 1], [], []>} : vector<128x320xf32>, vector<320x64xf32>, vector<128x64xf32> -> vector<128x64xf32>
    %c1_39 = arith.constant 1 : index
    %c0_40 = arith.constant 0 : index
    %c0_41 = arith.constant 0 : index
    %74 = vector.load %arg5[%c1_39, %c0_40, %c0_41] : memref<3x1x64xf32, #tpu.memory_space<vmem>>, vector<1x1x64xf32>
    %75 = vector.shape_cast %74 : vector<1x1x64xf32> to vector<1x64xf32>
    %76 = vector.broadcast %75 : vector<1x64xf32> to vector<128x64xf32>
    %77 = arith.addf %73, %76 : vector<128x64xf32>
    %cst_42 = arith.constant 0.000000e+00 : f32
    %78 = vector.broadcast %cst_42 : f32 to vector<128x64xf32>
    %79 = arith.maximumf %77, %78 : vector<128x64xf32>
    %80 = vector.shape_cast %79 : vector<128x64xf32> to vector<8x16x64xf32>
    %c1_43 = arith.constant 1 : index
    %c0_44 = arith.constant 0 : index
    %c0_45 = arith.constant 0 : index
    %81 = vector.load %arg6[%c1_43, %c0_44, %c0_45] : memref<3x1x64xf32, #tpu.memory_space<vmem>>, vector<1x1x64xf32>
    %82 = vector.shape_cast %81 : vector<1x1x64xf32> to vector<1x64xf32>
    %83 = vector.shape_cast %82 : vector<1x64xf32> to vector<1x1x64xf32>
    %84 = vector.broadcast %83 : vector<1x1x64xf32> to vector<8x16x64xf32>
    %85 = arith.mulf %80, %84 : vector<8x16x64xf32>
    %cst_46 = arith.constant dense<0.000000e+00> : vector<8x16xf32>
    %86 = vector.multi_reduction <add>, %85, %cst_46 [2] : vector<8x16x64xf32> to vector<8x16xf32>
    %87 = vector.shape_cast %86 : vector<8x16xf32> to vector<8x16x1xf32>
    %cst_47 = arith.constant dense<0xFF800000> : vector<8x1xf32>
    %88 = vector.multi_reduction <maximumf>, %87, %cst_47 [1] : vector<8x16x1xf32> to vector<8x1xf32>
    %89 = vector.shape_cast %88 : vector<8x1xf32> to vector<8x1x1xf32>
    %90 = vector.broadcast %89 : vector<8x1x1xf32> to vector<8x16x1xf32>
    %91 = arith.subf %87, %90 : vector<8x16x1xf32>
    %92 = math.exp %91 : vector<8x16x1xf32>
    %cst_48 = arith.constant dense<0.000000e+00> : vector<8x1xf32>
    %93 = vector.multi_reduction <add>, %92, %cst_48 [1] : vector<8x16x1xf32> to vector<8x1xf32>
    %94 = vector.shape_cast %93 : vector<8x1xf32> to vector<8x1x1xf32>
    %95 = tpu.reciprocal %94 : vector<8x1x1xf32> -> vector<8x1x1xf32>
    %96 = vector.broadcast %95 : vector<8x1x1xf32> to vector<8x16x1xf32>
    %97 = arith.mulf %92, %96 : vector<8x16x1xf32>
    %98 = vector.broadcast %97 : vector<8x16x1xf32> to vector<8x16x64xf32>
    %99 = arith.mulf %80, %98 : vector<8x16x64xf32>
    %cst_49 = arith.constant dense<0.000000e+00> : vector<8x64xf32>
    %100 = vector.multi_reduction <add>, %99, %cst_49 [1] : vector<8x16x64xf32> to vector<8x64xf32>
    %c2 = arith.constant 2 : index
    %c0_50 = arith.constant 0 : index
    %c0_51 = arith.constant 0 : index
    %101 = vector.load %arg1[%c2, %c0_50, %c0_51] : memref<3x128x160xf32, #tpu.memory_space<vmem>>, vector<1x128x160xf32>
    %102 = vector.shape_cast %101 : vector<1x128x160xf32> to vector<128x160xf32>
    %c2_52 = arith.constant 2 : index
    %c0_53 = arith.constant 0 : index
    %c0_54 = arith.constant 0 : index
    %103 = vector.load %arg2[%c2_52, %c0_53, %c0_54] : memref<3x160x64xf32, #tpu.memory_space<vmem>>, vector<1x160x64xf32>
    %104 = vector.shape_cast %103 : vector<1x160x64xf32> to vector<160x64xf32>
    %cst_55 = arith.constant dense<0.000000e+00> : vector<128x64xf32>
    %105 = tpu.matmul %102, %104, %cst_55 {dimension_numbers = #tpu.dot_dimension_numbers<[1], [0], [0], [1], [0, 0, 1, 1], [], []>} : vector<128x160xf32>, vector<160x64xf32>, vector<128x64xf32> -> vector<128x64xf32>
    %c2_56 = arith.constant 2 : index
    %c0_57 = arith.constant 0 : index
    %c0_58 = arith.constant 0 : index
    %106 = vector.load %arg3[%c2_56, %c0_57, %c0_58] : memref<3x1x64xf32, #tpu.memory_space<vmem>>, vector<1x1x64xf32>
    %107 = vector.shape_cast %106 : vector<1x1x64xf32> to vector<1x64xf32>
    %108 = vector.broadcast %107 : vector<1x64xf32> to vector<128x64xf32>
    %109 = arith.addf %105, %108 : vector<128x64xf32>
    %cst_59 = arith.constant 0.000000e+00 : f32
    %110 = vector.broadcast %cst_59 : f32 to vector<128x64xf32>
    %111 = arith.maximumf %109, %110 : vector<128x64xf32>
    %112 = vector.shape_cast %111 : vector<128x64xf32> to vector<8x16x64xf32>
    %113 = tpu.concatenate %0, %112, %0 in 1 : vector<8x2x64xf32>, vector<8x16x64xf32>, vector<8x2x64xf32> -> vector<8x20x64xf32>
    %114 = vector.extract_strided_slice %113 {offsets = [0, 0, 0], sizes = [8, 16, 64], strides = [1, 1, 1]} : vector<8x20x64xf32> to vector<8x16x64xf32>
    %115 = vector.extract_strided_slice %113 {offsets = [0, 1, 0], sizes = [8, 16, 64], strides = [1, 1, 1]} : vector<8x20x64xf32> to vector<8x16x64xf32>
    %116 = vector.extract_strided_slice %113 {offsets = [0, 2, 0], sizes = [8, 16, 64], strides = [1, 1, 1]} : vector<8x20x64xf32> to vector<8x16x64xf32>
    %117 = vector.extract_strided_slice %113 {offsets = [0, 3, 0], sizes = [8, 16, 64], strides = [1, 1, 1]} : vector<8x20x64xf32> to vector<8x16x64xf32>
    %118 = vector.extract_strided_slice %113 {offsets = [0, 4, 0], sizes = [8, 16, 64], strides = [1, 1, 1]} : vector<8x20x64xf32> to vector<8x16x64xf32>
    %119 = tpu.concatenate %114, %115, %116, %117, %118 in 2 : vector<8x16x64xf32>, vector<8x16x64xf32>, vector<8x16x64xf32>, vector<8x16x64xf32>, vector<8x16x64xf32> -> vector<8x16x320xf32>
    %120 = vector.shape_cast %119 : vector<8x16x320xf32> to vector<128x320xf32>
    %c2_60 = arith.constant 2 : index
    %c0_61 = arith.constant 0 : index
    %c0_62 = arith.constant 0 : index
    %121 = vector.load %arg4[%c2_60, %c0_61, %c0_62] : memref<3x320x64xf32, #tpu.memory_space<vmem>>, vector<1x320x64xf32>
    %122 = vector.shape_cast %121 : vector<1x320x64xf32> to vector<320x64xf32>
    %cst_63 = arith.constant dense<0.000000e+00> : vector<128x64xf32>
    %123 = tpu.matmul %120, %122, %cst_63 {dimension_numbers = #tpu.dot_dimension_numbers<[1], [0], [0], [1], [0, 0, 1, 1], [], []>} : vector<128x320xf32>, vector<320x64xf32>, vector<128x64xf32> -> vector<128x64xf32>
    %c2_64 = arith.constant 2 : index
    %c0_65 = arith.constant 0 : index
    %c0_66 = arith.constant 0 : index
    %124 = vector.load %arg5[%c2_64, %c0_65, %c0_66] : memref<3x1x64xf32, #tpu.memory_space<vmem>>, vector<1x1x64xf32>
    %125 = vector.shape_cast %124 : vector<1x1x64xf32> to vector<1x64xf32>
    %126 = vector.broadcast %125 : vector<1x64xf32> to vector<128x64xf32>
    %127 = arith.addf %123, %126 : vector<128x64xf32>
    %cst_67 = arith.constant 0.000000e+00 : f32
    %128 = vector.broadcast %cst_67 : f32 to vector<128x64xf32>
    %129 = arith.maximumf %127, %128 : vector<128x64xf32>
    %130 = vector.shape_cast %129 : vector<128x64xf32> to vector<8x16x64xf32>
    %c2_68 = arith.constant 2 : index
    %c0_69 = arith.constant 0 : index
    %c0_70 = arith.constant 0 : index
    %131 = vector.load %arg6[%c2_68, %c0_69, %c0_70] : memref<3x1x64xf32, #tpu.memory_space<vmem>>, vector<1x1x64xf32>
    %132 = vector.shape_cast %131 : vector<1x1x64xf32> to vector<1x64xf32>
    %133 = vector.shape_cast %132 : vector<1x64xf32> to vector<1x1x64xf32>
    %134 = vector.broadcast %133 : vector<1x1x64xf32> to vector<8x16x64xf32>
    %135 = arith.mulf %130, %134 : vector<8x16x64xf32>
    %cst_71 = arith.constant dense<0.000000e+00> : vector<8x16xf32>
    %136 = vector.multi_reduction <add>, %135, %cst_71 [2] : vector<8x16x64xf32> to vector<8x16xf32>
    %137 = vector.shape_cast %136 : vector<8x16xf32> to vector<8x16x1xf32>
    %cst_72 = arith.constant dense<0xFF800000> : vector<8x1xf32>
    %138 = vector.multi_reduction <maximumf>, %137, %cst_72 [1] : vector<8x16x1xf32> to vector<8x1xf32>
    %139 = vector.shape_cast %138 : vector<8x1xf32> to vector<8x1x1xf32>
    %140 = vector.broadcast %139 : vector<8x1x1xf32> to vector<8x16x1xf32>
    %141 = arith.subf %137, %140 : vector<8x16x1xf32>
    %142 = math.exp %141 : vector<8x16x1xf32>
    %cst_73 = arith.constant dense<0.000000e+00> : vector<8x1xf32>
    %143 = vector.multi_reduction <add>, %142, %cst_73 [1] : vector<8x16x1xf32> to vector<8x1xf32>
    %144 = vector.shape_cast %143 : vector<8x1xf32> to vector<8x1x1xf32>
    %145 = tpu.reciprocal %144 : vector<8x1x1xf32> -> vector<8x1x1xf32>
    %146 = vector.broadcast %145 : vector<8x1x1xf32> to vector<8x16x1xf32>
    %147 = arith.mulf %142, %146 : vector<8x16x1xf32>
    %148 = vector.broadcast %147 : vector<8x16x1xf32> to vector<8x16x64xf32>
    %149 = arith.mulf %130, %148 : vector<8x16x64xf32>
    %cst_74 = arith.constant dense<0.000000e+00> : vector<8x64xf32>
    %150 = vector.multi_reduction <add>, %149, %cst_74 [1] : vector<8x16x64xf32> to vector<8x64xf32>
    %151 = tpu.concatenate %50, %100, %150 in 0 : vector<8x64xf32>, vector<8x64xf32>, vector<8x64xf32> -> vector<24x64xf32>
    %c0_75 = arith.constant 0 : index
    %c0_76 = arith.constant 0 : index
    %152 = vector.load %arg7[%c0_75, %c0_76] : memref<64x192xf32, #tpu.memory_space<vmem>>, vector<64x192xf32>
    %cst_77 = arith.constant dense<0.000000e+00> : vector<24x192xf32>
    %153 = tpu.matmul %151, %152, %cst_77 {dimension_numbers = #tpu.dot_dimension_numbers<[1], [0], [0], [1], [0, 0, 1, 1], [], []>} : vector<24x64xf32>, vector<64x192xf32>, vector<24x192xf32> -> vector<24x192xf32>
    %c0_78 = arith.constant 0 : index
    %c0_79 = arith.constant 0 : index
    %154 = vector.load %arg8[%c0_78, %c0_79] : memref<1x192xf32, #tpu.memory_space<vmem>>, vector<1x192xf32>
    %155 = vector.broadcast %154 : vector<1x192xf32> to vector<24x192xf32>
    %156 = arith.addf %153, %155 : vector<24x192xf32>
    %157 = vector.extract_strided_slice %156 {offsets = [0, 0], sizes = [24, 64], strides = [1, 1]} : vector<24x192xf32> to vector<24x64xf32>
    %158 = vector.extract_strided_slice %156 {offsets = [0, 64], sizes = [24, 64], strides = [1, 1]} : vector<24x192xf32> to vector<24x64xf32>
    %159 = vector.extract_strided_slice %156 {offsets = [0, 128], sizes = [24, 64], strides = [1, 1]} : vector<24x192xf32> to vector<24x64xf32>
    %160 = vector.extract_strided_slice %157 {offsets = [0, 0], sizes = [8, 64], strides = [1, 1]} : vector<24x64xf32> to vector<8x64xf32>
    %161 = vector.extract_strided_slice %157 {offsets = [8, 0], sizes = [8, 64], strides = [1, 1]} : vector<24x64xf32> to vector<8x64xf32>
    %162 = vector.extract_strided_slice %157 {offsets = [16, 0], sizes = [8, 64], strides = [1, 1]} : vector<24x64xf32> to vector<8x64xf32>
    %163 = vector.extract_strided_slice %158 {offsets = [0, 0], sizes = [8, 64], strides = [1, 1]} : vector<24x64xf32> to vector<8x64xf32>
    %164 = vector.extract_strided_slice %158 {offsets = [8, 0], sizes = [8, 64], strides = [1, 1]} : vector<24x64xf32> to vector<8x64xf32>
    %165 = vector.extract_strided_slice %158 {offsets = [16, 0], sizes = [8, 64], strides = [1, 1]} : vector<24x64xf32> to vector<8x64xf32>
    %166 = vector.extract_strided_slice %159 {offsets = [0, 0], sizes = [8, 64], strides = [1, 1]} : vector<24x64xf32> to vector<8x64xf32>
    %167 = vector.extract_strided_slice %159 {offsets = [8, 0], sizes = [8, 64], strides = [1, 1]} : vector<24x64xf32> to vector<8x64xf32>
    %168 = vector.extract_strided_slice %159 {offsets = [16, 0], sizes = [8, 64], strides = [1, 1]} : vector<24x64xf32> to vector<8x64xf32>
    %169 = arith.mulf %160, %163 : vector<8x64xf32>
    %170 = arith.mulf %160, %164 : vector<8x64xf32>
    %171 = arith.mulf %160, %165 : vector<8x64xf32>
    %172 = arith.mulf %161, %163 : vector<8x64xf32>
    %173 = arith.mulf %161, %164 : vector<8x64xf32>
    %174 = arith.mulf %161, %165 : vector<8x64xf32>
    %175 = arith.mulf %162, %163 : vector<8x64xf32>
    %176 = arith.mulf %162, %164 : vector<8x64xf32>
    %177 = arith.mulf %162, %165 : vector<8x64xf32>
    %178 = tpu.concatenate %169, %170, %171, %172, %173, %174, %175, %176, %177 in 0 : vector<8x64xf32>, vector<8x64xf32>, vector<8x64xf32>, vector<8x64xf32>, vector<8x64xf32>, vector<8x64xf32>, vector<8x64xf32>, vector<8x64xf32>, vector<8x64xf32> -> vector<72x64xf32>
    %c0_80 = arith.constant 0 : index
    %c0_81 = arith.constant 0 : index
    %179 = vector.load %arg11[%c0_80, %c0_81] : memref<64x64xf32, #tpu.memory_space<vmem>>, vector<64x64xf32>
    %cst_82 = arith.constant dense<0.000000e+00> : vector<72x64xf32>
    %180 = tpu.matmul %178, %179, %cst_82 {dimension_numbers = #tpu.dot_dimension_numbers<[1], [0], [0], [1], [0, 0, 1, 1], [], []>} : vector<72x64xf32>, vector<64x64xf32>, vector<72x64xf32> -> vector<72x64xf32>
    %181 = vector.extract_strided_slice %180 {offsets = [0, 0], sizes = [8, 64], strides = [1, 1]} : vector<72x64xf32> to vector<8x64xf32>
    %182 = vector.extract_strided_slice %180 {offsets = [8, 0], sizes = [8, 64], strides = [1, 1]} : vector<72x64xf32> to vector<8x64xf32>
    %183 = vector.extract_strided_slice %180 {offsets = [16, 0], sizes = [8, 64], strides = [1, 1]} : vector<72x64xf32> to vector<8x64xf32>
    %184 = arith.maximumf %181, %182 : vector<8x64xf32>
    %185 = arith.maximumf %184, %183 : vector<8x64xf32>
    %186 = arith.subf %181, %185 : vector<8x64xf32>
    %187 = math.exp %186 : vector<8x64xf32>
    %188 = arith.subf %182, %185 : vector<8x64xf32>
    %189 = math.exp %188 : vector<8x64xf32>
    %190 = arith.subf %183, %185 : vector<8x64xf32>
    %191 = math.exp %190 : vector<8x64xf32>
    %192 = arith.addf %187, %189 : vector<8x64xf32>
    %193 = arith.addf %192, %191 : vector<8x64xf32>
    %194 = tpu.reciprocal %193 : vector<8x64xf32> -> vector<8x64xf32>
    %195 = arith.mulf %187, %166 : vector<8x64xf32>
    %196 = arith.mulf %189, %167 : vector<8x64xf32>
    %197 = arith.addf %195, %196 : vector<8x64xf32>
    %198 = arith.mulf %191, %168 : vector<8x64xf32>
    %199 = arith.addf %197, %198 : vector<8x64xf32>
    %200 = arith.mulf %199, %194 : vector<8x64xf32>
    %201 = vector.extract_strided_slice %180 {offsets = [24, 0], sizes = [8, 64], strides = [1, 1]} : vector<72x64xf32> to vector<8x64xf32>
    %202 = vector.extract_strided_slice %180 {offsets = [32, 0], sizes = [8, 64], strides = [1, 1]} : vector<72x64xf32> to vector<8x64xf32>
    %203 = vector.extract_strided_slice %180 {offsets = [40, 0], sizes = [8, 64], strides = [1, 1]} : vector<72x64xf32> to vector<8x64xf32>
    %204 = arith.maximumf %201, %202 : vector<8x64xf32>
    %205 = arith.maximumf %204, %203 : vector<8x64xf32>
    %206 = arith.subf %201, %205 : vector<8x64xf32>
    %207 = math.exp %206 : vector<8x64xf32>
    %208 = arith.subf %202, %205 : vector<8x64xf32>
    %209 = math.exp %208 : vector<8x64xf32>
    %210 = arith.subf %203, %205 : vector<8x64xf32>
    %211 = math.exp %210 : vector<8x64xf32>
    %212 = arith.addf %207, %209 : vector<8x64xf32>
    %213 = arith.addf %212, %211 : vector<8x64xf32>
    %214 = tpu.reciprocal %213 : vector<8x64xf32> -> vector<8x64xf32>
    %215 = arith.mulf %207, %166 : vector<8x64xf32>
    %216 = arith.mulf %209, %167 : vector<8x64xf32>
    %217 = arith.addf %215, %216 : vector<8x64xf32>
    %218 = arith.mulf %211, %168 : vector<8x64xf32>
    %219 = arith.addf %217, %218 : vector<8x64xf32>
    %220 = arith.mulf %219, %214 : vector<8x64xf32>
    %221 = vector.extract_strided_slice %180 {offsets = [48, 0], sizes = [8, 64], strides = [1, 1]} : vector<72x64xf32> to vector<8x64xf32>
    %222 = vector.extract_strided_slice %180 {offsets = [56, 0], sizes = [8, 64], strides = [1, 1]} : vector<72x64xf32> to vector<8x64xf32>
    %223 = vector.extract_strided_slice %180 {offsets = [64, 0], sizes = [8, 64], strides = [1, 1]} : vector<72x64xf32> to vector<8x64xf32>
    %224 = arith.maximumf %221, %222 : vector<8x64xf32>
    %225 = arith.maximumf %224, %223 : vector<8x64xf32>
    %226 = arith.subf %221, %225 : vector<8x64xf32>
    %227 = math.exp %226 : vector<8x64xf32>
    %228 = arith.subf %222, %225 : vector<8x64xf32>
    %229 = math.exp %228 : vector<8x64xf32>
    %230 = arith.subf %223, %225 : vector<8x64xf32>
    %231 = math.exp %230 : vector<8x64xf32>
    %232 = arith.addf %227, %229 : vector<8x64xf32>
    %233 = arith.addf %232, %231 : vector<8x64xf32>
    %234 = tpu.reciprocal %233 : vector<8x64xf32> -> vector<8x64xf32>
    %235 = arith.mulf %227, %166 : vector<8x64xf32>
    %236 = arith.mulf %229, %167 : vector<8x64xf32>
    %237 = arith.addf %235, %236 : vector<8x64xf32>
    %238 = arith.mulf %231, %168 : vector<8x64xf32>
    %239 = arith.addf %237, %238 : vector<8x64xf32>
    %240 = arith.mulf %239, %234 : vector<8x64xf32>
    %241 = tpu.concatenate %200, %220, %240 in 0 : vector<8x64xf32>, vector<8x64xf32>, vector<8x64xf32> -> vector<24x64xf32>
    %c0_83 = arith.constant 0 : index
    %c0_84 = arith.constant 0 : index
    %242 = vector.load %arg9[%c0_83, %c0_84] : memref<64x64xf32, #tpu.memory_space<vmem>>, vector<64x64xf32>
    %cst_85 = arith.constant dense<0.000000e+00> : vector<24x64xf32>
    %243 = tpu.matmul %241, %242, %cst_85 {dimension_numbers = #tpu.dot_dimension_numbers<[1], [0], [0], [1], [0, 0, 1, 1], [], []>} : vector<24x64xf32>, vector<64x64xf32>, vector<24x64xf32> -> vector<24x64xf32>
    %c0_86 = arith.constant 0 : index
    %c0_87 = arith.constant 0 : index
    %244 = vector.load %arg10[%c0_86, %c0_87] : memref<1x64xf32, #tpu.memory_space<vmem>>, vector<1x64xf32>
    %245 = vector.broadcast %244 : vector<1x64xf32> to vector<24x64xf32>
    %246 = arith.addf %243, %245 : vector<24x64xf32>
    %cst_88 = arith.constant dense<0.000000e+00> : vector<24xf32>
    %247 = vector.multi_reduction <add>, %246, %cst_88 [1] : vector<24x64xf32> to vector<24xf32>
    %248 = vector.shape_cast %247 : vector<24xf32> to vector<24x1xf32>
    %cst_89 = arith.constant 6.400000e+01 : f32
    %249 = vector.broadcast %cst_89 : f32 to vector<24x1xf32>
    %250 = arith.divf %248, %249 : vector<24x1xf32>
    %251 = vector.broadcast %250 : vector<24x1xf32> to vector<24x64xf32>
    %252 = arith.subf %246, %251 : vector<24x64xf32>
    %253 = arith.mulf %252, %252 : vector<24x64xf32>
    %cst_90 = arith.constant dense<0.000000e+00> : vector<24xf32>
    %254 = vector.multi_reduction <add>, %253, %cst_90 [1] : vector<24x64xf32> to vector<24xf32>
    %255 = vector.shape_cast %254 : vector<24xf32> to vector<24x1xf32>
    %cst_91 = arith.constant 6.400000e+01 : f32
    %256 = vector.broadcast %cst_91 : f32 to vector<24x1xf32>
    %257 = arith.divf %255, %256 : vector<24x1xf32>
    %258 = vector.broadcast %250 : vector<24x1xf32> to vector<24x64xf32>
    %259 = arith.subf %246, %258 : vector<24x64xf32>
    %cst_92 = arith.constant 9.99999974E-6 : f32
    %260 = vector.broadcast %cst_92 : f32 to vector<24x1xf32>
    %261 = arith.addf %257, %260 : vector<24x1xf32>
    %262 = math.rsqrt %261 : vector<24x1xf32>
    %263 = vector.broadcast %262 : vector<24x1xf32> to vector<24x64xf32>
    %264 = arith.mulf %259, %263 : vector<24x64xf32>
    %c0_93 = arith.constant 0 : index
    %c0_94 = arith.constant 0 : index
    %265 = vector.load %arg12[%c0_93, %c0_94] : memref<1x64xf32, #tpu.memory_space<vmem>>, vector<1x64xf32>
    %266 = vector.broadcast %265 : vector<1x64xf32> to vector<24x64xf32>
    %267 = arith.mulf %264, %266 : vector<24x64xf32>
    %c0_95 = arith.constant 0 : index
    %c0_96 = arith.constant 0 : index
    %268 = vector.load %arg13[%c0_95, %c0_96] : memref<1x64xf32, #tpu.memory_space<vmem>>, vector<1x64xf32>
    %269 = vector.broadcast %268 : vector<1x64xf32> to vector<24x64xf32>
    %270 = arith.addf %267, %269 : vector<24x64xf32>
    %271 = vector.extract_strided_slice %270 {offsets = [0, 0], sizes = [8, 64], strides = [1, 1]} : vector<24x64xf32> to vector<8x64xf32>
    %c0_97 = arith.constant 0 : index
    %c0_98 = arith.constant 0 : index
    %c0_99 = arith.constant 0 : index
    %272 = vector.load %arg14[%c0_97, %c0_98, %c0_99] : memref<3x64x128xf32, #tpu.memory_space<vmem>>, vector<1x64x128xf32>
    %273 = vector.shape_cast %272 : vector<1x64x128xf32> to vector<64x128xf32>
    %cst_100 = arith.constant dense<0.000000e+00> : vector<8x128xf32>
    %274 = tpu.matmul %271, %273, %cst_100 {dimension_numbers = #tpu.dot_dimension_numbers<[1], [0], [0], [1], [0, 0, 1, 1], [], []>} : vector<8x64xf32>, vector<64x128xf32>, vector<8x128xf32> -> vector<8x128xf32>
    %275 = vector.extract_strided_slice %270 {offsets = [8, 0], sizes = [8, 64], strides = [1, 1]} : vector<24x64xf32> to vector<8x64xf32>
    %c1_101 = arith.constant 1 : index
    %c0_102 = arith.constant 0 : index
    %c0_103 = arith.constant 0 : index
    %276 = vector.load %arg14[%c1_101, %c0_102, %c0_103] : memref<3x64x128xf32, #tpu.memory_space<vmem>>, vector<1x64x128xf32>
    %277 = vector.shape_cast %276 : vector<1x64x128xf32> to vector<64x128xf32>
    %cst_104 = arith.constant dense<0.000000e+00> : vector<8x128xf32>
    %278 = tpu.matmul %275, %277, %cst_104 {dimension_numbers = #tpu.dot_dimension_numbers<[1], [0], [0], [1], [0, 0, 1, 1], [], []>} : vector<8x64xf32>, vector<64x128xf32>, vector<8x128xf32> -> vector<8x128xf32>
    %279 = arith.addf %274, %278 : vector<8x128xf32>
    %280 = vector.extract_strided_slice %270 {offsets = [16, 0], sizes = [8, 64], strides = [1, 1]} : vector<24x64xf32> to vector<8x64xf32>
    %c2_105 = arith.constant 2 : index
    %c0_106 = arith.constant 0 : index
    %c0_107 = arith.constant 0 : index
    %281 = vector.load %arg14[%c2_105, %c0_106, %c0_107] : memref<3x64x128xf32, #tpu.memory_space<vmem>>, vector<1x64x128xf32>
    %282 = vector.shape_cast %281 : vector<1x64x128xf32> to vector<64x128xf32>
    %cst_108 = arith.constant dense<0.000000e+00> : vector<8x128xf32>
    %283 = tpu.matmul %280, %282, %cst_108 {dimension_numbers = #tpu.dot_dimension_numbers<[1], [0], [0], [1], [0, 0, 1, 1], [], []>} : vector<8x64xf32>, vector<64x128xf32>, vector<8x128xf32> -> vector<8x128xf32>
    %284 = arith.addf %279, %283 : vector<8x128xf32>
    %c0_109 = arith.constant 0 : index
    %c0_110 = arith.constant 0 : index
    %285 = vector.load %arg15[%c0_109, %c0_110] : memref<1x128xf32, #tpu.memory_space<vmem>>, vector<1x128xf32>
    %286 = vector.broadcast %285 : vector<1x128xf32> to vector<8x128xf32>
    %287 = arith.addf %284, %286 : vector<8x128xf32>
    %c0_111 = arith.constant 0 : index
    %c0_112 = arith.constant 0 : index
    %288 = vector.load %arg16[%c0_111, %c0_112] : memref<8x128xf32, #tpu.memory_space<vmem>>, vector<8x128xf32>
    tpu.vector_store %arg16[%c0_111, %c0_112], %287 {strides = array<i32>} : memref<8x128xf32, #tpu.memory_space<vmem>>, vector<8x128xf32>,
    return
  }
  func.func @transform_0(%arg0: i32) -> (i32, i32, i32) {
    %c0_i32 = arith.constant 0 : i32
    %c0_i32_0 = arith.constant 0 : i32
    %c0_i32_1 = arith.constant 0 : i32
    return %c0_i32, %arg0, %c0_i32_0 : i32, i32, i32
  }
  func.func @transform_1(%arg0: i32) -> (i32, i32, i32) {
    %c0_i32 = arith.constant 0 : i32
    %c0_i32_0 = arith.constant 0 : i32
    %c0_i32_1 = arith.constant 0 : i32
    %c0_i32_2 = arith.constant 0 : i32
    return %c0_i32, %c0_i32_0, %c0_i32_1 : i32, i32, i32
  }
  func.func @transform_2(%arg0: i32) -> (i32, i32, i32) {
    %c0_i32 = arith.constant 0 : i32
    %c0_i32_0 = arith.constant 0 : i32
    %c0_i32_1 = arith.constant 0 : i32
    %c0_i32_2 = arith.constant 0 : i32
    return %c0_i32, %c0_i32_0, %c0_i32_1 : i32, i32, i32
  }
  func.func @transform_3(%arg0: i32) -> (i32, i32, i32) {
    %c0_i32 = arith.constant 0 : i32
    %c0_i32_0 = arith.constant 0 : i32
    %c0_i32_1 = arith.constant 0 : i32
    %c0_i32_2 = arith.constant 0 : i32
    return %c0_i32, %c0_i32_0, %c0_i32_1 : i32, i32, i32
  }
  func.func @transform_4(%arg0: i32) -> (i32, i32, i32) {
    %c0_i32 = arith.constant 0 : i32
    %c0_i32_0 = arith.constant 0 : i32
    %c0_i32_1 = arith.constant 0 : i32
    %c0_i32_2 = arith.constant 0 : i32
    return %c0_i32, %c0_i32_0, %c0_i32_1 : i32, i32, i32
  }
  func.func @transform_5(%arg0: i32) -> (i32, i32, i32) {
    %c0_i32 = arith.constant 0 : i32
    %c0_i32_0 = arith.constant 0 : i32
    %c0_i32_1 = arith.constant 0 : i32
    %c0_i32_2 = arith.constant 0 : i32
    return %c0_i32, %c0_i32_0, %c0_i32_1 : i32, i32, i32
  }
  func.func @transform_6(%arg0: i32) -> (i32, i32) {
    %c0_i32 = arith.constant 0 : i32
    %c0_i32_0 = arith.constant 0 : i32
    %c0_i32_1 = arith.constant 0 : i32
    return %c0_i32, %c0_i32_0 : i32, i32
  }
  func.func @transform_7(%arg0: i32) -> (i32, i32) {
    %c0_i32 = arith.constant 0 : i32
    %c0_i32_0 = arith.constant 0 : i32
    %c0_i32_1 = arith.constant 0 : i32
    return %c0_i32, %c0_i32_0 : i32, i32
  }
  func.func @transform_8(%arg0: i32) -> (i32, i32) {
    %c0_i32 = arith.constant 0 : i32
    %c0_i32_0 = arith.constant 0 : i32
    %c0_i32_1 = arith.constant 0 : i32
    return %c0_i32, %c0_i32_0 : i32, i32
  }
  func.func @transform_9(%arg0: i32) -> (i32, i32) {
    %c0_i32 = arith.constant 0 : i32
    %c0_i32_0 = arith.constant 0 : i32
    %c0_i32_1 = arith.constant 0 : i32
    return %c0_i32, %c0_i32_0 : i32, i32
  }
  func.func @transform_10(%arg0: i32) -> (i32, i32) {
    %c0_i32 = arith.constant 0 : i32
    %c0_i32_0 = arith.constant 0 : i32
    %c0_i32_1 = arith.constant 0 : i32
    return %c0_i32, %c0_i32_0 : i32, i32
  }
  func.func @transform_11(%arg0: i32) -> (i32, i32) {
    %c0_i32 = arith.constant 0 : i32
    %c0_i32_0 = arith.constant 0 : i32
    %c0_i32_1 = arith.constant 0 : i32
    return %c0_i32, %c0_i32_0 : i32, i32
  }
  func.func @transform_12(%arg0: i32) -> (i32, i32) {
    %c0_i32 = arith.constant 0 : i32
    %c0_i32_0 = arith.constant 0 : i32
    %c0_i32_1 = arith.constant 0 : i32
    return %c0_i32, %c0_i32_0 : i32, i32
  }
  func.func @transform_13(%arg0: i32) -> (i32, i32, i32) {
    %c0_i32 = arith.constant 0 : i32
    %c0_i32_0 = arith.constant 0 : i32
    %c0_i32_1 = arith.constant 0 : i32
    %c0_i32_2 = arith.constant 0 : i32
    return %c0_i32, %c0_i32_0, %c0_i32_1 : i32, i32, i32
  }
  func.func @transform_14(%arg0: i32) -> (i32, i32) {
    %c0_i32 = arith.constant 0 : i32
    %c0_i32_0 = arith.constant 0 : i32
    %c0_i32_1 = arith.constant 0 : i32
    return %c0_i32, %c0_i32_0 : i32, i32
  }
  func.func @transform_15(%arg0: i32) -> (i32, i32) {
    %c0_i32 = arith.constant 0 : i32
    %c0_i32_0 = arith.constant 0 : i32
    return %arg0, %c0_i32 : i32, i32
  }
}

</mosaic_0001>

<llo_original>
// kernel: tpu_custom_call.1
$region0: #{tpu_custom_call.1}
  #allocation0 [shape = 'u32[]', space=smem, size = 0x4, offset = 0x4, fixed_abs, tag = 'smem constant byte address 0x4 - core index']
  #allocation1 [shape = 'u32[144,128]{1,0:T(1,128)}', space=vmem, size = 0x12000, scoped, tag = 'internal scratch']
  %s0 = inlined_call_operand.vmem [shape: f32[3,256,160], index: 0, kind: input, shape index: {}]
  %s1 = inlined_call_operand.vmem [shape: f32[3,160,64], index: 1, kind: input, shape index: {}]
  %s2 = inlined_call_operand.vmem [shape: f32[3,1,64], index: 2, kind: input, shape index: {}]
  %s3 = inlined_call_operand.vmem [shape: f32[3,320,64], index: 3, kind: input, shape index: {}]
  %s4 = inlined_call_operand.vmem [shape: f32[3,1,64], index: 4, kind: input, shape index: {}]
  %s5 = inlined_call_operand.vmem [shape: f32[3,1,64], index: 5, kind: input, shape index: {}]
  %s6 = inlined_call_operand.vmem [shape: f32[64,192], index: 6, kind: input, shape index: {}]
  %s7 = inlined_call_operand.vmem [shape: f32[1,192], index: 7, kind: input, shape index: {}]
  %s8 = inlined_call_operand.vmem [shape: f32[64,64], index: 8, kind: input, shape index: {}]
  %s9 = inlined_call_operand.vmem [shape: f32[1,64], index: 9, kind: input, shape index: {}]
  %s10 = inlined_call_operand.vmem [shape: f32[64,64], index: 10, kind: input, shape index: {}]
  %s11 = inlined_call_operand.vmem [shape: f32[1,64], index: 11, kind: input, shape index: {}]
  %s12 = inlined_call_operand.vmem [shape: f32[1,64], index: 12, kind: input, shape index: {}]
  %s13 = inlined_call_operand.vmem [shape: f32[3,64,128], index: 13, kind: input, shape index: {}]
  %s14 = inlined_call_operand.vmem [shape: f32[1,128], index: 14, kind: input, shape index: {}]
  %s15 = inlined_call_operand.hbm [shape: f32[16,128], index: 15, kind: output, shape index: {}]
  %s16 = sld [smem:[#allocation0]]
  $region116: #{tpu_custom_call.1} parent=0
    _
  %s18 = ssub.s32 1, %s16
  %s19 = scalar_select 0, %s18, %s16
  $region1: #{tpu_custom_call.1} parent=0
    #allocation2 [shape = 'u8[786432]{0}', space=vmem, size = 0xc0000, scoped, tag = 'input window, operand 0']
    #allocation3 [shape = 'u8[8192]{0}', space=vmem, size = 0x2000, scoped, tag = 'output window, operand 0']
    #allocation4 [shape = 's32[2]{0}', space=sflag, size = 0x8, scoped, tag = 'scoped memory for tpu_custom_call.1']
    %20 = vsyncpa [#allocation4], 0
    %s21 = scalar_lea.sflag [#allocation4], 1
    %22 = vsyncpa %s21, 0
    loop: start=0, step=1, limit=4
    $region2: #{tpu_custom_call.1} parent=1 // loop_pre_header
      _
    $region3: #{tpu_custom_call.1} parent=1 // loop_header
      %s24 = sphi 0, %s28
      %p25 = scmp.ge.s32.totalorder %s24, 4
      %s34 = sphi 0, %s36
      %s37 = sphi 0, %s34
      %s38 = sphi 0, %s37
      %s54 = sphi 0, %s38
      %s58 = sphi 0, %s58
      %s60 = sphi 0, %s58
      %s61 = sphi 0, %s60
      %s75 = sphi 0, %s61
      %s79 = sphi 0, %s79
      %s81 = sphi 0, %s79
      %s82 = sphi 0, %s81
      %s96 = sphi 0, %s82
      %s100 = sphi 0, %s100
      %s102 = sphi 0, %s100
      %s103 = sphi 0, %s102
      %s117 = sphi 0, %s103
      %s121 = sphi 0, %s121
      %s123 = sphi 0, %s121
      %s124 = sphi 0, %s123
      %s138 = sphi 0, %s124
      %s142 = sphi 0, %s142
      %s144 = sphi 0, %s142
      %s145 = sphi 0, %s144
      %s159 = sphi 0, %s145
      %s163 = sphi 0, %s163
      %s165 = sphi 0, %s163
      %s166 = sphi 0, %s165
      %s180 = sphi 0, %s166
      %s184 = sphi 0, %s184
      %s186 = sphi 0, %s184
      %s187 = sphi 0, %s186
      %s201 = sphi 0, %s187
      %s205 = sphi 0, %s205
      %s207 = sphi 0, %s205
      %s208 = sphi 0, %s207
      %s222 = sphi 0, %s208
      %s226 = sphi 0, %s226
      %s228 = sphi 0, %s226
      %s229 = sphi 0, %s228
      %s243 = sphi 0, %s229
      %s247 = sphi 0, %s247
      %s249 = sphi 0, %s247
      %s250 = sphi 0, %s249
      %s264 = sphi 0, %s250
      %s268 = sphi 0, %s268
      %s270 = sphi 0, %s268
      %s271 = sphi 0, %s270
      %s285 = sphi 0, %s271
      %s289 = sphi 0, %s289
      %s291 = sphi 0, %s289
      %s292 = sphi 0, %s291
      %s306 = sphi 0, %s292
      %s310 = sphi 0, %s310
      %s312 = sphi 0, %s310
      %s313 = sphi 0, %s312
      %s327 = sphi 0, %s313
      %s331 = sphi 0, %s331
      %s333 = sphi 0, %s331
      %s334 = sphi 0, %s333
      %s348 = sphi 0, %s334
      %s354 = sphi 0, %s356
      %s357 = sphi 0, %s354
      %s358 = sphi 0, %s357
      %s374 = sphi 0, %s358
    $region4: #{tpu_custom_call.1} parent=1 // loop_header_branch
      %27 = sbr.rel (%p25) target = $region8
    $region5: #{tpu_custom_call.1} parent=1 // loop_body
      %s29 = ssub.s32 %s24, 1
      %s30 = ssub.s32 %s24, 2
      %s31 = sadd.s32 %s24, 1
      %s32 = ssub.s32 %s24, %s31
      %p33 = scmp.eq.s32.totalorder %s32, 0
      %s35 = sadd.s32 %s34, 1
      %s36 = scalar_select %p33, %s34, %s35
      %p39 = pneg %p33
      %p40 = scmp.eq.s32.totalorder %s24, 1
      %p41 = por %p39, %p40
      %p42 = scmp.ne.s32.totalorder %s34, %s37
      %p43 = scmp.eq.s32.totalorder %s24, 0
      %p44 = por %p42, %p43
      %p45 = scmp.ne.s32.totalorder %s34, %s37
      %p46 = scmp.eq.s32.totalorder %s29, 1
      %p47 = por %p45, %p46
      %p48 = scmp.ne.s32.totalorder %s37, %s38
      %p49 = scmp.eq.s32.totalorder %s29, 0
      %p50 = por %p48, %p49
      %p51 = scmp.ne.s32.totalorder %s37, %s38
      %p52 = scmp.eq.s32.totalorder %s30, 1
      %p53 = por %p51, %p52
      %p55 = scmp.ne.s32.totalorder %s38, %s54
      %p56 = scmp.eq.s32.totalorder %s30, 0
      %p57 = por %p55, %p56
      %s59 = sadd.s32 %s58, 1
      %p62 = scmp.eq.s32.totalorder %s24, 1
      %p63 = scmp.ne.s32.totalorder %s58, %s60
      %p64 = scmp.eq.s32.totalorder %s24, 0
      %p65 = por %p63, %p64
      %p66 = scmp.ne.s32.totalorder %s58, %s60
      %p67 = scmp.eq.s32.totalorder %s29, 1
      %p68 = por %p66, %p67
      %p69 = scmp.ne.s32.totalorder %s60, %s61
      %p70 = scmp.eq.s32.totalorder %s29, 0
      %p71 = por %p69, %p70
      %p72 = scmp.ne.s32.totalorder %s60, %s61
      %p73 = scmp.eq.s32.totalorder %s30, 1
      %p74 = por %p72, %p73
      %p76 = scmp.ne.s32.totalorder %s61, %s75
      %p77 = scmp.eq.s32.totalorder %s30, 0
      %p78 = por %p76, %p77
      %s80 = sadd.s32 %s79, 1
      %p83 = scmp.eq.s32.totalorder %s24, 1
      %p84 = scmp.ne.s32.totalorder %s79, %s81
      %p85 = scmp.eq.s32.totalorder %s24, 0
      %p86 = por %p84, %p85
      %p87 = scmp.ne.s32.totalorder %s79, %s81
      %p88 = scmp.eq.s32.totalorder %s29, 1
      %p89 = por %p87, %p88
      %p90 = scmp.ne.s32.totalorder %s81, %s82
      %p91 = scmp.eq.s32.totalorder %s29, 0
      %p92 = por %p90, %p91
      %p93 = scmp.ne.s32.totalorder %s81, %s82
      %p94 = scmp.eq.s32.totalorder %s30, 1
      %p95 = por %p93, %p94
      %p97 = scmp.ne.s32.totalorder %s82, %s96
      %p98 = scmp.eq.s32.totalorder %s30, 0
      %p99 = por %p97, %p98
      %s101 = sadd.s32 %s100, 1
      %p104 = scmp.eq.s32.totalorder %s24, 1
      %p105 = scmp.ne.s32.totalorder %s100, %s102
      %p106 = scmp.eq.s32.totalorder %s24, 0
      %p107 = por %p105, %p106
      %p108 = scmp.ne.s32.totalorder %s100, %s102
      %p109 = scmp.eq.s32.totalorder %s29, 1
      %p110 = por %p108, %p109
      %p111 = scmp.ne.s32.totalorder %s102, %s103
      %p112 = scmp.eq.s32.totalorder %s29, 0
      %p113 = por %p111, %p112
      %p114 = scmp.ne.s32.totalorder %s102, %s103
      %p115 = scmp.eq.s32.totalorder %s30, 1
      %p116 = por %p114, %p115
      %p118 = scmp.ne.s32.totalorder %s103, %s117
      %p119 = scmp.eq.s32.totalorder %s30, 0
      %p120 = por %p118, %p119
      %s122 = sadd.s32 %s121, 1
      %p125 = scmp.eq.s32.totalorder %s24, 1
      %p126 = scmp.ne.s32.totalorder %s121, %s123
      %p127 = scmp.eq.s32.totalorder %s24, 0
      %p128 = por %p126, %p127
      %p129 = scmp.ne.s32.totalorder %s121, %s123
      %p130 = scmp.eq.s32.totalorder %s29, 1
      %p131 = por %p129, %p130
      %p132 = scmp.ne.s32.totalorder %s123, %s124
      %p133 = scmp.eq.s32.totalorder %s29, 0
      %p134 = por %p132, %p133
      %p135 = scmp.ne.s32.totalorder %s123, %s124
      %p136 = scmp.eq.s32.totalorder %s30, 1
      %p137 = por %p135, %p136
      %p139 = scmp.ne.s32.totalorder %s124, %s138
      %p140 = scmp.eq.s32.totalorder %s30, 0
      %p141 = por %p139, %p140
      %s143 = sadd.s32 %s142, 1
      %p146 = scmp.eq.s32.totalorder %s24, 1
      %p147 = scmp.ne.s32.totalorder %s142, %s144
      %p148 = scmp.eq.s32.totalorder %s24, 0
      %p149 = por %p147, %p148
      %p150 = scmp.ne.s32.totalorder %s142, %s144
      %p151 = scmp.eq.s32.totalorder %s29, 1
      %p152 = por %p150, %p151
      %p153 = scmp.ne.s32.totalorder %s144, %s145
      %p154 = scmp.eq.s32.totalorder %s29, 0
      %p155 = por %p153, %p154
      %p156 = scmp.ne.s32.totalorder %s144, %s145
      %p157 = scmp.eq.s32.totalorder %s30, 1
      %p158 = por %p156, %p157
      %p160 = scmp.ne.s32.totalorder %s145, %s159
      %p161 = scmp.eq.s32.totalorder %s30, 0
      %p162 = por %p160, %p161
      %s164 = sadd.s32 %s163, 1
      %p167 = scmp.eq.s32.totalorder %s24, 1
      %p168 = scmp.ne.s32.totalorder %s163, %s165
      %p169 = scmp.eq.s32.totalorder %s24, 0
      %p170 = por %p168, %p169
      %p171 = scmp.ne.s32.totalorder %s163, %s165
      %p172 = scmp.eq.s32.totalorder %s29, 1
      %p173 = por %p171, %p172
      %p174 = scmp.ne.s32.totalorder %s165, %s166
      %p175 = scmp.eq.s32.totalorder %s29, 0
      %p176 = por %p174, %p175
      %p177 = scmp.ne.s32.totalorder %s165, %s166
      %p178 = scmp.eq.s32.totalorder %s30, 1
      %p179 = por %p177, %p178
      %p181 = scmp.ne.s32.totalorder %s166, %s180
      %p182 = scmp.eq.s32.totalorder %s30, 0
      %p183 = por %p181, %p182
      %s185 = sadd.s32 %s184, 1
      %p188 = scmp.eq.s32.totalorder %s24, 1
      %p189 = scmp.ne.s32.totalorder %s184, %s186
      %p190 = scmp.eq.s32.totalorder %s24, 0
      %p191 = por %p189, %p190
      %p192 = scmp.ne.s32.totalorder %s184, %s186
      %p193 = scmp.eq.s32.totalorder %s29, 1
      %p194 = por %p192, %p193
      %p195 = scmp.ne.s32.totalorder %s186, %s187
      %p196 = scmp.eq.s32.totalorder %s29, 0
      %p197 = por %p195, %p196
      %p198 = scmp.ne.s32.totalorder %s186, %s187
      %p199 = scmp.eq.s32.totalorder %s30, 1
      %p200 = por %p198, %p199
      %p202 = scmp.ne.s32.totalorder %s187, %s201
      %p203 = scmp.eq.s32.totalorder %s30, 0
      %p204 = por %p202, %p203
      %s206 = sadd.s32 %s205, 1
      %p209 = scmp.eq.s32.totalorder %s24, 1
      %p210 = scmp.ne.s32.totalorder %s205, %s207
      %p211 = scmp.eq.s32.totalorder %s24, 0
      %p212 = por %p210, %p211
      %p213 = scmp.ne.s32.totalorder %s205, %s207
      %p214 = scmp.eq.s32.totalorder %s29, 1
      %p215 = por %p213, %p214
      %p216 = scmp.ne.s32.totalorder %s207, %s208
      %p217 = scmp.eq.s32.totalorder %s29, 0
      %p218 = por %p216, %p217
      %p219 = scmp.ne.s32.totalorder %s207, %s208
      %p220 = scmp.eq.s32.totalorder %s30, 1
      %p221 = por %p219, %p220
      %p223 = scmp.ne.s32.totalorder %s208, %s222
      %p224 = scmp.eq.s32.totalorder %s30, 0
      %p225 = por %p223, %p224
      %s227 = sadd.s32 %s226, 1
      %p230 = scmp.eq.s32.totalorder %s24, 1
      %p231 = scmp.ne.s32.totalorder %s226, %s228
      %p232 = scmp.eq.s32.totalorder %s24, 0
      %p233 = por %p231, %p232
      %p234 = scmp.ne.s32.totalorder %s226, %s228
      %p235 = scmp.eq.s32.totalorder %s29, 1
      %p236 = por %p234, %p235
      %p237 = scmp.ne.s32.totalorder %s228, %s229
      %p238 = scmp.eq.s32.totalorder %s29, 0
      %p239 = por %p237, %p238
      %p240 = scmp.ne.s32.totalorder %s228, %s229
      %p241 = scmp.eq.s32.totalorder %s30, 1
      %p242 = por %p240, %p241
      %p244 = scmp.ne.s32.totalorder %s229, %s243
      %p245 = scmp.eq.s32.totalorder %s30, 0
      %p246 = por %p244, %p245
      %s248 = sadd.s32 %s247, 1
      %p251 = scmp.eq.s32.totalorder %s24, 1
      %p252 = scmp.ne.s32.totalorder %s247, %s249
      %p253 = scmp.eq.s32.totalorder %s24, 0
      %p254 = por %p252, %p253
      %p255 = scmp.ne.s32.totalorder %s247, %s249
      %p256 = scmp.eq.s32.totalorder %s29, 1
      %p257 = por %p255, %p256
      %p258 = scmp.ne.s32.totalorder %s249, %s250
      %p259 = scmp.eq.s32.totalorder %s29, 0
      %p260 = por %p258, %p259
      %p261 = scmp.ne.s32.totalorder %s249, %s250
      %p262 = scmp.eq.s32.totalorder %s30, 1
      %p263 = por %p261, %p262
      %p265 = scmp.ne.s32.totalorder %s250, %s264
      %p266 = scmp.eq.s32.totalorder %s30, 0
      %p267 = por %p265, %p266
      %s269 = sadd.s32 %s268, 1
      %p272 = scmp.eq.s32.totalorder %s24, 1
      %p273 = scmp.ne.s32.totalorder %s268, %s270
      %p274 = scmp.eq.s32.totalorder %s24, 0
      %p275 = por %p273, %p274
      %p276 = scmp.ne.s32.totalorder %s268, %s270
      %p277 = scmp.eq.s32.totalorder %s29, 1
      %p278 = por %p276, %p277
      %p279 = scmp.ne.s32.totalorder %s270, %s271
      %p280 = scmp.eq.s32.totalorder %s29, 0
      %p281 = por %p279, %p280
      %p282 = scmp.ne.s32.totalorder %s270, %s271
      %p283 = scmp.eq.s32.totalorder %s30, 1
      %p284 = por %p282, %p283
      %p286 = scmp.ne.s32.totalorder %s271, %s285
      %p287 = scmp.eq.s32.totalorder %s30, 0
      %p288 = por %p286, %p287
      %s290 = sadd.s32 %s289, 1
      %p293 = scmp.eq.s32.totalorder %s24, 1
      %p294 = scmp.ne.s32.totalorder %s289, %s291
      %p295 = scmp.eq.s32.totalorder %s24, 0
      %p296 = por %p294, %p295
      %p297 = scmp.ne.s32.totalorder %s289, %s291
      %p298 = scmp.eq.s32.totalorder %s29, 1
      %p299 = por %p297, %p298
      %p300 = scmp.ne.s32.totalorder %s291, %s292
      %p301 = scmp.eq.s32.totalorder %s29, 0
      %p302 = por %p300, %p301
      %p303 = scmp.ne.s32.totalorder %s291, %s292
      %p304 = scmp.eq.s32.totalorder %s30, 1
      %p305 = por %p303, %p304
      %p307 = scmp.ne.s32.totalorder %s292, %s306
      %p308 = scmp.eq.s32.totalorder %s30, 0
      %p309 = por %p307, %p308
      %s311 = sadd.s32 %s310, 1
      %p314 = scmp.eq.s32.totalorder %s24, 1
      %p315 = scmp.ne.s32.totalorder %s310, %s312
      %p316 = scmp.eq.s32.totalorder %s24, 0
      %p317 = por %p315, %p316
      %p318 = scmp.ne.s32.totalorder %s310, %s312
      %p319 = scmp.eq.s32.totalorder %s29, 1
      %p320 = por %p318, %p319
      %p321 = scmp.ne.s32.totalorder %s312, %s313
      %p322 = scmp.eq.s32.totalorder %s29, 0
      %p323 = por %p321, %p322
      %p324 = scmp.ne.s32.totalorder %s312, %s313
      %p325 = scmp.eq.s32.totalorder %s30, 1
      %p326 = por %p324, %p325
      %p328 = scmp.ne.s32.totalorder %s313, %s327
      %p329 = scmp.eq.s32.totalorder %s30, 0
      %p330 = por %p328, %p329
      %s332 = sadd.s32 %s331, 1
      %p335 = scmp.eq.s32.totalorder %s24, 1
      %p336 = scmp.ne.s32.totalorder %s331, %s333
      %p337 = scmp.eq.s32.totalorder %s24, 0
      %p338 = por %p336, %p337
      %p339 = scmp.ne.s32.totalorder %s331, %s333
      %p340 = scmp.eq.s32.totalorder %s29, 1
      %p341 = por %p339, %p340
      %p342 = scmp.ne.s32.totalorder %s333, %s334
      %p343 = scmp.eq.s32.totalorder %s29, 0
      %p344 = por %p342, %p343
      %p345 = scmp.ne.s32.totalorder %s333, %s334
      %p346 = scmp.eq.s32.totalorder %s30, 1
      %p347 = por %p345, %p346
      %p349 = scmp.ne.s32.totalorder %s334, %s348
      %p350 = scmp.eq.s32.totalorder %s30, 0
      %p351 = por %p349, %p350
      %s352 = ssub.s32 %s24, %s31
      %p353 = scmp.eq.s32.totalorder %s352, 0
      %s355 = sadd.s32 %s354, 1
      %s356 = scalar_select %p353, %s354, %s355
      %p359 = pneg %p353
      %p360 = scmp.eq.s32.totalorder %s24, 1
      %p361 = por %p359, %p360
      %p362 = scmp.ne.s32.totalorder %s354, %s357
      %p363 = scmp.eq.s32.totalorder %s24, 0
      %p364 = por %p362, %p363
      %p365 = scmp.ne.s32.totalorder %s354, %s357
      %p366 = scmp.eq.s32.totalorder %s29, 1
      %p367 = por %p365, %p366
      %p368 = scmp.ne.s32.totalorder %s357, %s358
      %p369 = scmp.eq.s32.totalorder %s29, 0
      %p370 = por %p368, %p369
      %p371 = scmp.ne.s32.totalorder %s357, %s358
      %p372 = scmp.eq.s32.totalorder %s30, 1
      %p373 = por %p371, %p372
      %p375 = scmp.ne.s32.totalorder %s358, %s374
      %p376 = scmp.eq.s32.totalorder %s30, 0
      %p377 = por %p375, %p376
      %p378 = scmp.le.s32.totalorder 1, %s24
      %p379 = scmp.lt.s32.totalorder %s24, 3
      %p380 = pnand %p378, %p379
      %p381 = pneg %p380
      // Predicated region
      $region9: #{tpu_custom_call.1} parent=5 // pred_check
        _
      $region10: #{tpu_custom_call.1} parent=5 // pred_check_branch
        %383 = sbr.rel (%p380) target = $region12
      $region11: #{tpu_custom_call.1} parent=5 // pred_region
        %s384 = ssub.s32 %s24, 1
        // Predicated region
        $region13: #{tpu_custom_call.1} parent=11 // pred_check
          %p385 = pneg %p71
        $region14: #{tpu_custom_call.1} parent=11 // pred_check_branch
          %387 = sbr.rel (%p385) target = $region16
        $region15: #{tpu_custom_call.1} parent=11 // pred_region
          _
        $region16: #{tpu_custom_call.1} parent=11 // pred_fallthru
          _
        // Predicated region
        $region17: #{tpu_custom_call.1} parent=11 // pred_check
          %p388 = pneg %p92
        $region18: #{tpu_custom_call.1} parent=11 // pred_check_branch
          %390 = sbr.rel (%p388) target = $region20
        $region19: #{tpu_custom_call.1} parent=11 // pred_region
          _
        $region20: #{tpu_custom_call.1} parent=11 // pred_fallthru
          _
        // Predicated region
        $region21: #{tpu_custom_call.1} parent=11 // pred_check
          %p391 = pneg %p113
        $region22: #{tpu_custom_call.1} parent=11 // pred_check_branch
          %393 = sbr.rel (%p391) target = $region24
        $region23: #{tpu_custom_call.1} parent=11 // pred_region
          _
        $region24: #{tpu_custom_call.1} parent=11 // pred_fallthru
          _
        // Predicated region
        $region25: #{tpu_custom_call.1} parent=11 // pred_check
          %p394 = pneg %p134
        $region26: #{tpu_custom_call.1} parent=11 // pred_check_branch
          %396 = sbr.rel (%p394) target = $region28
        $region27: #{tpu_custom_call.1} parent=11 // pred_region
          _
        $region28: #{tpu_custom_call.1} parent=11 // pred_fallthru
          _
        // Predicated region
        $region29: #{tpu_custom_call.1} parent=11 // pred_check
          %p397 = pneg %p155
        $region30: #{tpu_custom_call.1} parent=11 // pred_check_branch
          %399 = sbr.rel (%p397) target = $region32
        $region31: #{tpu_custom_call.1} parent=11 // pred_region
          _
        $region32: #{tpu_custom_call.1} parent=11 // pred_fallthru
          _
        // Predicated region
        $region33: #{tpu_custom_call.1} parent=11 // pred_check
          %p400 = pneg %p176
        $region34: #{tpu_custom_call.1} parent=11 // pred_check_branch
          %402 = sbr.rel (%p400) target = $region36
        $region35: #{tpu_custom_call.1} parent=11 // pred_region
          _
        $region36: #{tpu_custom_call.1} parent=11 // pred_fallthru
          _
        // Predicated region
        $region37: #{tpu_custom_call.1} parent=11 // pred_check
          %p403 = pneg %p197
        $region38: #{tpu_custom_call.1} parent=11 // pred_check_branch
          %405 = sbr.rel (%p403) target = $region40
        $region39: #{tpu_custom_call.1} parent=11 // pred_region
          _
        $region40: #{tpu_custom_call.1} parent=11 // pred_fallthru
          _
        // Predicated region
        $region41: #{tpu_custom_call.1} parent=11 // pred_check
          %p406 = pneg %p218
        $region42: #{tpu_custom_call.1} parent=11 // pred_check_branch
          %408 = sbr.rel (%p406) target = $region44
        $region43: #{tpu_custom_call.1} parent=11 // pred_region
          _
        $region44: #{tpu_custom_call.1} parent=11 // pred_fallthru
          _
        // Predicated region
        $region45: #{tpu_custom_call.1} parent=11 // pred_check
          %p409 = pneg %p239
        $region46: #{tpu_custom_call.1} parent=11 // pred_check_branch
          %411 = sbr.rel (%p409) target = $region48
        $region47: #{tpu_custom_call.1} parent=11 // pred_region
          _
        $region48: #{tpu_custom_call.1} parent=11 // pred_fallthru
          _
        // Predicated region
        $region49: #{tpu_custom_call.1} parent=11 // pred_check
          %p412 = pneg %p260
        $region50: #{tpu_custom_call.1} parent=11 // pred_check_branch
          %414 = sbr.rel (%p412) target = $region52
        $region51: #{tpu_custom_call.1} parent=11 // pred_region
          _
        $region52: #{tpu_custom_call.1} parent=11 // pred_fallthru
          _
        // Predicated region
        $region53: #{tpu_custom_call.1} parent=11 // pred_check
          %p415 = pneg %p281
        $region54: #{tpu_custom_call.1} parent=11 // pred_check_branch
          %417 = sbr.rel (%p415) target = $region56
        $region55: #{tpu_custom_call.1} parent=11 // pred_region
          _
        $region56: #{tpu_custom_call.1} parent=11 // pred_fallthru
          _
        // Predicated region
        $region57: #{tpu_custom_call.1} parent=11 // pred_check
          %p418 = pneg %p302
        $region58: #{tpu_custom_call.1} parent=11 // pred_check_branch
          %420 = sbr.rel (%p418) target = $region60
        $region59: #{tpu_custom_call.1} parent=11 // pred_region
          _
        $region60: #{tpu_custom_call.1} parent=11 // pred_fallthru
          _
        // Predicated region
        $region61: #{tpu_custom_call.1} parent=11 // pred_check
          %p421 = pneg %p323
        $region62: #{tpu_custom_call.1} parent=11 // pred_check_branch
          %423 = sbr.rel (%p421) target = $region64
        $region63: #{tpu_custom_call.1} parent=11 // pred_region
          _
        $region64: #{tpu_custom_call.1} parent=11 // pred_fallthru
          _
        // Predicated region
        $region65: #{tpu_custom_call.1} parent=11 // pred_check
          %p424 = pneg %p344
        $region66: #{tpu_custom_call.1} parent=11 // pred_check_branch
          %426 = sbr.rel (%p424) target = $region68
        $region67: #{tpu_custom_call.1} parent=11 // pred_region
          _
        $region68: #{tpu_custom_call.1} parent=11 // pred_fallthru
          _
      $region12: #{tpu_custom_call.1} parent=5 // pred_fallthru
        _
      %p427 = scmp.lt.s32.totalorder %s24, 2
      // Predicated region
      $region69: #{tpu_custom_call.1} parent=5 // pred_check
        %p428 = pneg %p427
      $region70: #{tpu_custom_call.1} parent=5 // pred_check_branch
        %430 = sbr.rel (%p428) target = $region72
      $region71: #{tpu_custom_call.1} parent=5 // pred_region
        // Predicated region
        $region73: #{tpu_custom_call.1} parent=71 // pred_check
          %p431 = pneg %p44
        $region74: #{tpu_custom_call.1} parent=71 // pred_check_branch
          %433 = sbr.rel (%p431) target = $region76
        $region75: #{tpu_custom_call.1} parent=71 // pred_region
          %s434 = sand.u32 %s34, 1
          %s435 = sand.u32 %s34, 1
          %s436 = smul.addr %s435, 768
          %s437 = scalar_lea.vmem [#allocation2], %s436
          %s438 = smul.u32 16, %s24
          %s439 = smul.addr %s438, 2
          %s440 = smul.addr %s439, 8
          %s441 = scalar_lea.vmem %s0, %s440
          // Predicated region
          $region77: #{tpu_custom_call.1} parent=75 // pred_check
            _
          $region78: #{tpu_custom_call.1} parent=75 // pred_check_branch
            %443 = sbr.rel (0) target = $region80
          $region79: #{tpu_custom_call.1} parent=75 // pred_region
            // Predicated region
            $region81: #{tpu_custom_call.1} parent=79 // pred_check
              _
            $region82: #{tpu_custom_call.1} parent=79 // pred_check_branch
              %445 = sbr.rel (0) target = $region84
            $region83: #{tpu_custom_call.1} parent=79 // pred_region
              loop: start=0, step=1, limit=1
              $region85: #{tpu_custom_call.1} parent=83 // loop_pre_header
                _
              $region86: #{tpu_custom_call.1} parent=83 // loop_header
                %s447 = sphi 0, %s451
                %p448 = scmp.ge.s32.totalorder %s447, 1
                %s452 = sphi %s441, %s441
                %s453 = sphi %s437, %s437
              $region87: #{tpu_custom_call.1} parent=83 // loop_header_branch
                %450 = sbr.rel (%p448) target = $region91
              $region88: #{tpu_custom_call.1} parent=83 // loop_body
                %v454 = vld [vmem:[%s452] sm:$0xff]
                %455 = vst [vmem:[%s453] sm:$0xff] %v454
                %v456 = vld [vmem:[%s452 + $0x8] sm:$0xff]
                %457 = vst [vmem:[%s453 + $0x8] sm:$0xff] %v456
                %v458 = vld [vmem:[%s452 + $0x10] sm:$0xff]
                %459 = vst [vmem:[%s453 + $0x10] sm:$0xff] %v458
                %v460 = vld [vmem:[%s452 + $0x18] sm:$0xff]
                %461 = vst [vmem:[%s453 + $0x18] sm:$0xff] %v460
                %v462 = vld [vmem:[%s452 + $0x20] sm:$0xff]
                %463 = vst [vmem:[%s453 + $0x20] sm:$0xff] %v462
                %v464 = vld [vmem:[%s452 + $0x28] sm:$0xff]
                %465 = vst [vmem:[%s453 + $0x28] sm:$0xff] %v464
                %v466 = vld [vmem:[%s452 + $0x30] sm:$0xff]
                %467 = vst [vmem:[%s453 + $0x30] sm:$0xff] %v466
                %v468 = vld [vmem:[%s452 + $0x38] sm:$0xff]
                %469 = vst [vmem:[%s453 + $0x38] sm:$0xff] %v468
                %v470 = vld [vmem:[%s452 + $0x40] sm:$0xff]
                %471 = vst [vmem:[%s453 + $0x40] sm:$0xff] %v470
                %v472 = vld [vmem:[%s452 + $0x48] sm:$0xff]
                %473 = vst [vmem:[%s453 + $0x48] sm:$0xff] %v472
                %v474 = vld [vmem:[%s452 + $0x50] sm:$0xff]
                %475 = vst [vmem:[%s453 + $0x50] sm:$0xff] %v474
                %v476 = vld [vmem:[%s452 + $0x58] sm:$0xff]
                %477 = vst [vmem:[%s453 + $0x58] sm:$0xff] %v476
                %v478 = vld [vmem:[%s452 + $0x60] sm:$0xff]
                %479 = vst [vmem:[%s453 + $0x60] sm:$0xff] %v478
                %v480 = vld [vmem:[%s452 + $0x68] sm:$0xff]
                %481 = vst [vmem:[%s453 + $0x68] sm:$0xff] %v480
                %v482 = vld [vmem:[%s452 + $0x70] sm:$0xff]
                %483 = vst [vmem:[%s453 + $0x70] sm:$0xff] %v482
                %v484 = vld [vmem:[%s452 + $0x78] sm:$0xff]
                %485 = vst [vmem:[%s453 + $0x78] sm:$0xff] %v484
                %v486 = vld [vmem:[%s452 + $0x80] sm:$0xff]
                %487 = vst [vmem:[%s453 + $0x80] sm:$0xff] %v486
                %v488 = vld [vmem:[%s452 + $0x88] sm:$0xff]
                %489 = vst [vmem:[%s453 + $0x88] sm:$0xff] %v488
                %v490 = vld [vmem:[%s452 + $0x90] sm:$0xff]
                %491 = vst [vmem:[%s453 + $0x90] sm:$0xff] %v490
                %v492 = vld [vmem:[%s452 + $0x98] sm:$0xff]
                %493 = vst [vmem:[%s453 + $0x98] sm:$0xff] %v492
                %v494 = vld [vmem:[%s452 + $0xa0] sm:$0xff]
                %495 = vst [vmem:[%s453 + $0xa0] sm:$0xff] %v494
                %v496 = vld [vmem:[%s452 + $0xa8] sm:$0xff]
                %497 = vst [vmem:[%s453 + $0xa8] sm:$0xff] %v496
                %v498 = vld [vmem:[%s452 + $0xb0] sm:$0xff]
                %499 = vst [vmem:[%s453 + $0xb0] sm:$0xff] %v498
                %v500 = vld [vmem:[%s452 + $0xb8] sm:$0xff]
                %501 = vst [vmem:[%s453 + $0xb8] sm:$0xff] %v500
                %v502 = vld [vmem:[%s452 + $0xc0] sm:$0xff]
                %503 = vst [vmem:[%s453 + $0xc0] sm:$0xff] %v502
                %v504 = vld [vmem:[%s452 + $0xc8] sm:$0xff]
                %505 = vst [vmem:[%s453 + $0xc8] sm:$0xff] %v504
                %v506 = vld [vmem:[%s452 + $0xd0] sm:$0xff]
                %507 = vst [vmem:[%s453 + $0xd0] sm:$0xff] %v506
                %v508 = vld [vmem:[%s452 + $0xd8] sm:$0xff]
                %509 = vst [vmem:[%s453 + $0xd8] sm:$0xff] %v508
                %v510 = vld [vmem:[%s452 + $0xe0] sm:$0xff]
                %511 = vst [vmem:[%s453 + $0xe0] sm:$0xff] %v510
                %v512 = vld [vmem:[%s452 + $0xe8] sm:$0xff]
                %513 = vst [vmem:[%s453 + $0xe8] sm:$0xff] %v512
                %v514 = vld [vmem:[%s452 + $0xf0] sm:$0xff]
                %515 = vst [vmem:[%s453 + $0xf0] sm:$0xff] %v514
                %v516 = vld [vmem:[%s452 + $0xf8] sm:$0xff]
                %517 = vst [vmem:[%s453 + $0xf8] sm:$0xff] %v516
                %v518 = vld [vmem:[%s452 + $0x200] sm:$0xff]
                %519 = vst [vmem:[%s453 + $0x100] sm:$0xff] %v518
                %v520 = vld [vmem:[%s452 + $0x208] sm:$0xff]
                %521 = vst [vmem:[%s453 + $0x108] sm:$0xff] %v520
                %v522 = vld [vmem:[%s452 + $0x210] sm:$0xff]
                %523 = vst [vmem:[%s453 + $0x110] sm:$0xff] %v522
                %v524 = vld [vmem:[%s452 + $0x218] sm:$0xff]
                %525 = vst [vmem:[%s453 + $0x118] sm:$0xff] %v524
                %v526 = vld [vmem:[%s452 + $0x220] sm:$0xff]
                %527 = vst [vmem:[%s453 + $0x120] sm:$0xff] %v526
                %v528 = vld [vmem:[%s452 + $0x228] sm:$0xff]
                %529 = vst [vmem:[%s453 + $0x128] sm:$0xff] %v528
                %v530 = vld [vmem:[%s452 + $0x230] sm:$0xff]
                %531 = vst [vmem:[%s453 + $0x130] sm:$0xff] %v530
                %v532 = vld [vmem:[%s452 + $0x238] sm:$0xff]
                %533 = vst [vmem:[%s453 + $0x138] sm:$0xff] %v532
                %v534 = vld [vmem:[%s452 + $0x240] sm:$0xff]
                %535 = vst [vmem:[%s453 + $0x140] sm:$0xff] %v534
                %v536 = vld [vmem:[%s452 + $0x248] sm:$0xff]
                %537 = vst [vmem:[%s453 + $0x148] sm:$0xff] %v536
                %v538 = vld [vmem:[%s452 + $0x250] sm:$0xff]
                %539 = vst [vmem:[%s453 + $0x150] sm:$0xff] %v538
                %v540 = vld [vmem:[%s452 + $0x258] sm:$0xff]
                %541 = vst [vmem:[%s453 + $0x158] sm:$0xff] %v540
                %v542 = vld [vmem:[%s452 + $0x260] sm:$0xff]
                %543 = vst [vmem:[%s453 + $0x160] sm:$0xff] %v542
                %v544 = vld [vmem:[%s452 + $0x268] sm:$0xff]
                %545 = vst [vmem:[%s453 + $0x168] sm:$0xff] %v544
                %v546 = vld [vmem:[%s452 + $0x270] sm:$0xff]
                %547 = vst [vmem:[%s453 + $0x170] sm:$0xff] %v546
                %v548 = vld [vmem:[%s452 + $0x278] sm:$0xff]
                %549 = vst [vmem:[%s453 + $0x178] sm:$0xff] %v548
                %v550 = vld [vmem:[%s452 + $0x280] sm:$0xff]
                %551 = vst [vmem:[%s453 + $0x180] sm:$0xff] %v550
                %v552 = vld [vmem:[%s452 + $0x288] sm:$0xff]
                %553 = vst [vmem:[%s453 + $0x188] sm:$0xff] %v552
                %v554 = vld [vmem:[%s452 + $0x290] sm:$0xff]
                %555 = vst [vmem:[%s453 + $0x190] sm:$0xff] %v554
                %v556 = vld [vmem:[%s452 + $0x298] sm:$0xff]
                %557 = vst [vmem:[%s453 + $0x198] sm:$0xff] %v556
                %v558 = vld [vmem:[%s452 + $0x2a0] sm:$0xff]
                %559 = vst [vmem:[%s453 + $0x1a0] sm:$0xff] %v558
                %v560 = vld [vmem:[%s452 + $0x2a8] sm:$0xff]
                %561 = vst [vmem:[%s453 + $0x1a8] sm:$0xff] %v560
                %v562 = vld [vmem:[%s452 + $0x2b0] sm:$0xff]
                %563 = vst [vmem:[%s453 + $0x1b0] sm:$0xff] %v562
                %v564 = vld [vmem:[%s452 + $0x2b8] sm:$0xff]
                %565 = vst [vmem:[%s453 + $0x1b8] sm:$0xff] %v564
                %v566 = vld [vmem:[%s452 + $0x2c0] sm:$0xff]
                %567 = vst [vmem:[%s453 + $0x1c0] sm:$0xff] %v566
                %v568 = vld [vmem:[%s452 + $0x2c8] sm:$0xff]
                %569 = vst [vmem:[%s453 + $0x1c8] sm:$0xff] %v568
                %v570 = vld [vmem:[%s452 + $0x2d0] sm:$0xff]
                %571 = vst [vmem:[%s453 + $0x1d0] sm:$0xff] %v570
                %v572 = vld [vmem:[%s452 + $0x2d8] sm:$0xff]
                %573 = vst [vmem:[%s453 + $0x1d8] sm:$0xff] %v572
                %v574 = vld [vmem:[%s452 + $0x2e0] sm:$0xff]
                %575 = vst [vmem:[%s453 + $0x1e0] sm:$0xff] %v574
                %v576 = vld [vmem:[%s452 + $0x2e8] sm:$0xff]
                %577 = vst [vmem:[%s453 + $0x1e8] sm:$0xff] %v576
                %v578 = vld [vmem:[%s452 + $0x2f0] sm:$0xff]
                %579 = vst [vmem:[%s453 + $0x1f0] sm:$0xff] %v578
                %v580 = vld [vmem:[%s452 + $0x2f8] sm:$0xff]
                %581 = vst [vmem:[%s453 + $0x1f8] sm:$0xff] %v580
                %v582 = vld [vmem:[%s452 + $0x400] sm:$0xff]
                %583 = vst [vmem:[%s453 + $0x200] sm:$0xff] %v582
                %v584 = vld [vmem:[%s452 + $0x408] sm:$0xff]
                %585 = vst [vmem:[%s453 + $0x208] sm:$0xff] %v584
                %v586 = vld [vmem:[%s452 + $0x410] sm:$0xff]
                %587 = vst [vmem:[%s453 + $0x210] sm:$0xff] %v586
                %v588 = vld [vmem:[%s452 + $0x418] sm:$0xff]
                %589 = vst [vmem:[%s453 + $0x218] sm:$0xff] %v588
                %v590 = vld [vmem:[%s452 + $0x420] sm:$0xff]
                %591 = vst [vmem:[%s453 + $0x220] sm:$0xff] %v590
                %v592 = vld [vmem:[%s452 + $0x428] sm:$0xff]
                %593 = vst [vmem:[%s453 + $0x228] sm:$0xff] %v592
                %v594 = vld [vmem:[%s452 + $0x430] sm:$0xff]
                %595 = vst [vmem:[%s453 + $0x230] sm:$0xff] %v594
                %v596 = vld [vmem:[%s452 + $0x438] sm:$0xff]
                %597 = vst [vmem:[%s453 + $0x238] sm:$0xff] %v596
                %v598 = vld [vmem:[%s452 + $0x440] sm:$0xff]
                %599 = vst [vmem:[%s453 + $0x240] sm:$0xff] %v598
                %v600 = vld [vmem:[%s452 + $0x448] sm:$0xff]
                %601 = vst [vmem:[%s453 + $0x248] sm:$0xff] %v600
                %v602 = vld [vmem:[%s452 + $0x450] sm:$0xff]
                %603 = vst [vmem:[%s453 + $0x250] sm:$0xff] %v602
                %v604 = vld [vmem:[%s452 + $0x458] sm:$0xff]
                %605 = vst [vmem:[%s453 + $0x258] sm:$0xff] %v604
                %v606 = vld [vmem:[%s452 + $0x460] sm:$0xff]
                %607 = vst [vmem:[%s453 + $0x260] sm:$0xff] %v606
                %v608 = vld [vmem:[%s452 + $0x468] sm:$0xff]
                %609 = vst [vmem:[%s453 + $0x268] sm:$0xff] %v608
                %v610 = vld [vmem:[%s452 + $0x470] sm:$0xff]
                %611 = vst [vmem:[%s453 + $0x270] sm:$0xff] %v610
                %v612 = vld [vmem:[%s452 + $0x478] sm:$0xff]
                %613 = vst [vmem:[%s453 + $0x278] sm:$0xff] %v612
                %v614 = vld [vmem:[%s452 + $0x480] sm:$0xff]
                %615 = vst [vmem:[%s453 + $0x280] sm:$0xff] %v614
                %v616 = vld [vmem:[%s452 + $0x488] sm:$0xff]
                %617 = vst [vmem:[%s453 + $0x288] sm:$0xff] %v616
                %v618 = vld [vmem:[%s452 + $0x490] sm:$0xff]
                %619 = vst [vmem:[%s453 + $0x290] sm:$0xff] %v618
                %v620 = vld [vmem:[%s452 + $0x498] sm:$0xff]
                %621 = vst [vmem:[%s453 + $0x298] sm:$0xff] %v620
                %v622 = vld [vmem:[%s452 + $0x4a0] sm:$0xff]
                %623 = vst [vmem:[%s453 + $0x2a0] sm:$0xff] %v622
                %v624 = vld [vmem:[%s452 + $0x4a8] sm:$0xff]
                %625 = vst [vmem:[%s453 + $0x2a8] sm:$0xff] %v624
                %v626 = vld [vmem:[%s452 + $0x4b0] sm:$0xff]
                %627 = vst [vmem:[%s453 + $0x2b0] sm:$0xff] %v626
                %v628 = vld [vmem:[%s452 + $0x4b8] sm:$0xff]
                %629 = vst [vmem:[%s453 + $0x2b8] sm:$0xff] %v628
                %v630 = vld [vmem:[%s452 + $0x4c0] sm:$0xff]
                %631 = vst [vmem:[%s453 + $0x2c0] sm:$0xff] %v630
                %v632 = vld [vmem:[%s452 + $0x4c8] sm:$0xff]
                %633 = vst [vmem:[%s453 + $0x2c8] sm:$0xff] %v632
                %v634 = vld [vmem:[%s452 + $0x4d0] sm:$0xff]
                %635 = vst [vmem:[%s453 + $0x2d0] sm:$0xff] %v634
                %v636 = vld [vmem:[%s452 + $0x4d8] sm:$0xff]
                %637 = vst [vmem:[%s453 + $0x2d8] sm:$0xff] %v636
                %v638 = vld [vmem:[%s452 + $0x4e0] sm:$0xff]
                %639 = vst [vmem:[%s453 + $0x2e0] sm:$0xff] %v638
                %v640 = vld [vmem:[%s452 + $0x4e8] sm:$0xff]
                %641 = vst [vmem:[%s453 + $0x2e8] sm:$0xff] %v640
                %v642 = vld [vmem:[%s452 + $0x4f0] sm:$0xff]
                %643 = vst [vmem:[%s453 + $0x2f0] sm:$0xff] %v642
                %v644 = vld [vmem:[%s452 + $0x4f8] sm:$0xff]
                %645 = vst [vmem:[%s453 + $0x2f8] sm:$0xff] %v644
              $region89: #{tpu_custom_call.1} parent=83 // loop_footer
                %s451 = sadd.s32 1, %s447
              $region90: #{tpu_custom_call.1} parent=83 // loop_footer_branch
                %446 = sbr.rel target = $region86
              $region91: #{tpu_custom_call.1} parent=83 // loop_exit
                _
            $region84: #{tpu_custom_call.1} parent=79 // pred_fallthru
              _
            // Predicated region
            $region92: #{tpu_custom_call.1} parent=79 // pred_check
              _
            $region93: #{tpu_custom_call.1} parent=79 // pred_check_branch
              %647 = sbr.rel target = $region95
            $region94: #{tpu_custom_call.1} parent=79 // pred_region
              _
            $region95: #{tpu_custom_call.1} parent=79 // pred_fallthru
              _
          $region80: #{tpu_custom_call.1} parent=75 // pred_fallthru
            _
          %648 = vnop
        $region76: #{tpu_custom_call.1} parent=71 // pred_fallthru
          _
      $region72: #{tpu_custom_call.1} parent=5 // pred_fallthru
        _
      %p649 = scmp.le.s32.totalorder 1, %s24
      %p650 = scmp.lt.s32.totalorder %s24, 3
      %p651 = pnand %p649, %p650
      %p652 = pneg %p651
      // Predicated region
      $region96: #{tpu_custom_call.1} parent=5 // pred_check
        _
      $region97: #{tpu_custom_call.1} parent=5 // pred_check_branch
        %654 = sbr.rel (%p651) target = $region99
      $region98: #{tpu_custom_call.1} parent=5 // pred_region
        %s655 = ssub.s32 %s24, 1
        %s656 = sand.u32 %s37, 1
        %s657 = sand.u32 %s37, 1
        %s658 = smul.addr %s657, 768
        %s659 = scalar_lea.vmem [#allocation2], %s658
        // Predicated region
        $region100: #{tpu_custom_call.1} parent=98 // pred_check
          %p660 = pneg %p50
        $region101: #{tpu_custom_call.1} parent=98 // pred_check_branch
          %662 = sbr.rel (%p660) target = $region103
        $region102: #{tpu_custom_call.1} parent=98 // pred_region
          _
        $region103: #{tpu_custom_call.1} parent=98 // pred_fallthru
          _
        %s663 = sand.u32 %s37, 1
        %s664 = sand.u32 %s37, 1
        %s665 = smul.addr %s664, 768
        %s666 = scalar_lea.vmem [#allocation2], %s665
        %p667 = pneg %p50
        %p668 = pneg %p47
        %p669 = pneg %p71
        %p670 = pneg %p68
        %p671 = pneg %p92
        %p672 = pneg %p89
        %p673 = pneg %p113
        %p674 = pneg %p110
        %p675 = pneg %p134
        %p676 = pneg %p131
        %p677 = pneg %p155
        %p678 = pneg %p152
        %p679 = pneg %p176
        %p680 = pneg %p173
        %p681 = pneg %p197
        %p682 = pneg %p194
        %p683 = pneg %p218
        %p684 = pneg %p215
        %p685 = pneg %p239
        %p686 = pneg %p236
        %p687 = pneg %p260
        %p688 = pneg %p257
        %p689 = pneg %p281
        %p690 = pneg %p278
        %p691 = pneg %p302
        %p692 = pneg %p299
        %p693 = pneg %p323
        %p694 = pneg %p320
        %p695 = pneg %p344
        %p696 = pneg %p341
        %p697 = pneg %p370
        %p698 = pneg %p367
        %s699 = sand.u32 %s357, 1
        %s700 = scalar_lea.sflag [#allocation4], %s699
        %s701 = sand.u32 %s357, 1
        %s702 = smul.addr %s701, 8
        %s703 = scalar_lea.vmem [#allocation3], %s702
        %s704 = smul.u32 16, %s29
        %v705 = vld [vmem:[%s659] sm:$0xff]
        %v706 = vld [vmem:[%s659 + $0x8] sm:$0xff]
        %v707 = vld [vmem:[%s659 + $0x10] sm:$0xff]
        %v708 = vld [vmem:[%s659 + $0x18] sm:$0xff]
        %v709 = vld [vmem:[%s659 + $0x20] sm:$0xff]
        %v710 = vld [vmem:[%s659 + $0x28] sm:$0xff]
        %v711 = vld [vmem:[%s659 + $0x30] sm:$0xff]
        %v712 = vld [vmem:[%s659 + $0x38] sm:$0xff]
        %v713 = vld [vmem:[%s659 + $0x40] sm:$0xff]
        %v714 = vld [vmem:[%s659 + $0x48] sm:$0xff]
        %v715 = vld [vmem:[%s659 + $0x50] sm:$0xff]
        %v716 = vld [vmem:[%s659 + $0x58] sm:$0xff]
        %v717 = vld [vmem:[%s659 + $0x60] sm:$0xff]
        %v718 = vld [vmem:[%s659 + $0x68] sm:$0xff]
        %v719 = vld [vmem:[%s659 + $0x70] sm:$0xff]
        %v720 = vld [vmem:[%s659 + $0x78] sm:$0xff]
        %v721 = vld [vmem:[%s659 + $0x80] sm:$0xff]
        %v722 = vld [vmem:[%s659 + $0x88] sm:$0xff]
        %v723 = vld [vmem:[%s659 + $0x90] sm:$0xff]
        %v724 = vld [vmem:[%s659 + $0x98] sm:$0xff]
        %v725 = vld [vmem:[%s659 + $0xa0] sm:$0xff]
        %v726 = vld [vmem:[%s659 + $0xa8] sm:$0xff]
        %v727 = vld [vmem:[%s659 + $0xb0] sm:$0xff]
        %v728 = vld [vmem:[%s659 + $0xb8] sm:$0xff]
        %v729 = vld [vmem:[%s659 + $0xc0] sm:$0xff]
        %v730 = vld [vmem:[%s659 + $0xc8] sm:$0xff]
        %v731 = vld [vmem:[%s659 + $0xd0] sm:$0xff]
        %v732 = vld [vmem:[%s659 + $0xd8] sm:$0xff]
        %v733 = vld [vmem:[%s659 + $0xe0] sm:$0xff]
        %v734 = vld [vmem:[%s659 + $0xe8] sm:$0xff]
        %v735 = vld [vmem:[%s659 + $0xf0] sm:$0xff]
        %v736 = vld [vmem:[%s659 + $0xf8] sm:$0xff]
        %v737 = vld [vmem:[%s1] sm:$0xff]
        %v738 = vld [vmem:[%s1 + $0x8] sm:$0xff]
        %v739 = vld [vmem:[%s1 + $0x10] sm:$0xff]
        %v740 = vld [vmem:[%s1 + $0x18] sm:$0xff]
        %v741 = vld [vmem:[%s1 + $0x20] sm:$0xff]
        %v742 = vld [vmem:[%s1 + $0x28] sm:$0xff]
        %v743 = vld [vmem:[%s1 + $0x30] sm:$0xff]
        %v744 = vld [vmem:[%s1 + $0x38] sm:$0xff]
        %v745 = vld [vmem:[%s1 + $0x40] sm:$0xff]
        %v746 = vld [vmem:[%s1 + $0x48] sm:$0xff]
        %v747 = vld [vmem:[%s1 + $0x50] sm:$0xff]
        %v748 = vld [vmem:[%s1 + $0x58] sm:$0xff]
        %v749 = vld [vmem:[%s1 + $0x60] sm:$0xff]
        %v750 = vld [vmem:[%s1 + $0x68] sm:$0xff]
        %v751 = vld [vmem:[%s1 + $0x70] sm:$0xff]
        %v752 = vld [vmem:[%s1 + $0x78] sm:$0xff]
        %v753 = vld [vmem:[%s1 + $0x80] sm:$0xff]
        %v754 = vld [vmem:[%s1 + $0x88] sm:$0xff]
        %v755 = vld [vmem:[%s1 + $0x90] sm:$0xff]
        %v756 = vld [vmem:[%s1 + $0x98] sm:$0xff]
        %v757 = vld [vmem:[%s2] sm:$0x1]
        %v759 = vlaneseq
        %v760 = vshrl.u32 %v759, 7
        %v761 = vsub.s32 0, %v760
        %v762 = vrot.slane %v757, %v761
        %vm764 = vcmask 261120
        %v766 = vsel %vm764, %v706, 0
        %v769 = vsel %vm764, %v708, 0
        %v772 = vsel %vm764, %v710, 0
        %v775 = vsel %vm764, %v712, 0
        %v778 = vsel %vm764, %v714, 0
        %v781 = vsel %vm764, %v716, 0
        %v784 = vsel %vm764, %v718, 0
        %v787 = vsel %vm764, %v720, 0
        %v790 = vsel %vm764, %v722, 0
        %v793 = vsel %vm764, %v724, 0
        %v796 = vsel %vm764, %v726, 0
        %v799 = vsel %vm764, %v728, 0
        %v802 = vsel %vm764, %v730, 0
        %v805 = vsel %vm764, %v732, 0
        %v808 = vsel %vm764, %v734, 0
        %v811 = vsel %vm764, %v736, 0
        %813 = vmatprep.subr.mxu0 0.0
        %814 = vmatpush1.msra.mxu0 %v737
        %815 = vmatprep.subr.mxu0 0.0
        %816 = vmatpush1.msra.mxu0 %v738
        %817 = vmatprep.subr.mxu0 0.0
        %818 = vmatpush1.msra.mxu0 %v739
        %819 = vmatprep.subr.mxu0 0.0
        %820 = vmatpush1.msra.mxu0 %v740
        %821 = vmatprep.subr.mxu0 0.0
        %822 = vmatpush1.msra.mxu0 %v741
        %823 = vmatprep.subr.mxu0 0.0
        %824 = vmatpush1.msra.mxu0 %v742
        %825 = vmatprep.subr.mxu0 0.0
        %826 = vmatpush1.msra.mxu0 %v743
        %827 = vmatprep.subr.mxu0 0.0
        %828 = vmatpush1.msra.mxu0 %v744
        %829 = vmatprep.subr.mxu0 0.0
        %830 = vmatpush1.msra.mxu0 %v745
        %831 = vmatprep.subr.mxu0 0.0
        %832 = vmatpush1.msra.mxu0 %v746
        %833 = vmatprep.subr.mxu0 0.0
        %834 = vmatpush1.msra.mxu0 %v747
        %835 = vmatprep.subr.mxu0 0.0
        %836 = vmatpush1.msra.mxu0 %v748
        %837 = vmatprep.subr.mxu0 0.0
        %838 = vmatpush1.msra.mxu0 %v749
        %839 = vmatprep.subr.mxu0 0.0
        %840 = vmatpush1.msra.mxu0 %v750
        %841 = vmatprep.subr.mxu0 0.0
        %842 = vmatpush1.msra.mxu0 %v751
        %843 = vmatprep.subr.mxu0 0.0
        %844 = vmatpush1.msra.mxu0 %v752
        %845 = vmatprep.subr.mxu0 0.0
        %846 = vmatpush1.msra.mxu0 %v753
        %847 = vmatprep.subr.mxu0 0.0
        %848 = vmatpush1.msra.mxu0 %v754
        %849 = vmatprep.subr.mxu0 0.0
        %850 = vmatpush1.msra.mxu0 %v755
        %851 = vmatprep.subr.mxu0 0.0
        %852 = vmatpush1.msra.mxu0 %v756
        %853 = vmatprep.subr.mxu0 0.0
        %854 = vmatpush1.msra.mxu0 0.0
        %855 = vmatprep.subr.mxu0 0.0
        %856 = vmatpush1.msra.mxu0 0.0
        %857 = vmatprep.subr.mxu0 0.0
        %858 = vmatpush1.msra.mxu0 0.0
        %859 = vmatprep.subr.mxu0 0.0
        %860 = vmatpush1.msra.mxu0 0.0
        %861 = vmatprep.subr.mxu0 0.0
        %862 = vmatpush1.msra.mxu0 0.0
        %863 = vmatprep.subr.mxu0 0.0
        %864 = vmatpush1.msra.mxu0 0.0
        %865 = vmatprep.subr.mxu0 0.0
        %866 = vmatpush1.msra.mxu0 0.0
        %867 = vmatprep.subr.mxu0 0.0
        %868 = vmatpush1.msra.mxu0 0.0
        %869 = vmatprep.subr.mxu0 0.0
        %870 = vmatpush1.msra.mxu0 0.0
        %871 = vmatprep.subr.mxu0 0.0
        %872 = vmatpush1.msra.mxu0 0.0
        %873 = vmatprep.subr.mxu0 0.0
        %874 = vmatpush1.msra.mxu0 0.0
        %875 = vmatprep.subr.mxu0 0.0
        %876 = vmatpush1.msra.mxu0 0.0
        %877 = vmatprep.mubr.f32.mxu0 %v766
        %878 = vmatmul.mubr.f32.gmra.mrb[0].mxu0 %v705
        %v879 = vpop.f32.mrb[0].mxu0
        %v880 = vadd.f32 %v762, %v879
        %v881 = vpop.f32.mrb[0].mxu0
        %882 = vmatprep.mubr.f32.mxu0 %v769
        %883 = vmatmul.mubr.f32.gmra.mrb[0].mxu0 %v707
        %v884 = vpop.f32.mrb[0].mxu0
        %v885 = vadd.f32 %v762, %v884
        %v886 = vpop.f32.mrb[0].mxu0
        %887 = vmatprep.mubr.f32.mxu0 %v772
        %888 = vmatmul.mubr.f32.gmra.mrb[0].mxu0 %v709
        %v889 = vpop.f32.mrb[0].mxu0
        %v890 = vadd.f32 %v762, %v889
        %v891 = vpop.f32.mrb[0].mxu0
        %892 = vmatprep.mubr.f32.mxu0 %v775
        %893 = vmatmul.mubr.f32.gmra.mrb[0].mxu0 %v711
        %v894 = vpop.f32.mrb[0].mxu0
        %v895 = vadd.f32 %v762, %v894
        %v896 = vpop.f32.mrb[0].mxu0
        %897 = vmatprep.mubr.f32.mxu0 %v778
        %898 = vmatmul.mubr.f32.gmra.mrb[0].mxu0 %v713
        %v899 = vpop.f32.mrb[0].mxu0
        %v900 = vadd.f32 %v762, %v899
        %v901 = vpop.f32.mrb[0].mxu0
        %902 = vmatprep.mubr.f32.mxu0 %v781
        %903 = vmatmul.mubr.f32.gmra.mrb[0].mxu0 %v715
        %v904 = vpop.f32.mrb[0].mxu0
        %v905 = vadd.f32 %v762, %v904
        %v906 = vpop.f32.mrb[0].mxu0
        %907 = vmatprep.mubr.f32.mxu0 %v784
        %908 = vmatmul.mubr.f32.gmra.mrb[0].mxu0 %v717
        %v909 = vpop.f32.mrb[0].mxu0
        %v910 = vadd.f32 %v762, %v909
        %v911 = vpop.f32.mrb[0].mxu0
        %912 = vmatprep.mubr.f32.mxu0 %v787
        %913 = vmatmul.mubr.f32.gmra.mrb[0].mxu0 %v719
        %v914 = vpop.f32.mrb[0].mxu0
        %v915 = vadd.f32 %v762, %v914
        %v916 = vpop.f32.mrb[0].mxu0
        %917 = vmatprep.mubr.f32.mxu0 %v790
        %918 = vmatmul.mubr.f32.gmra.mrb[0].mxu0 %v721
        %v919 = vpop.f32.mrb[0].mxu0
        %v920 = vadd.f32 %v762, %v919
        %v921 = vpop.f32.mrb[0].mxu0
        %922 = vmatprep.mubr.f32.mxu0 %v793
        %923 = vmatmul.mubr.f32.gmra.mrb[0].mxu0 %v723
        %v924 = vpop.f32.mrb[0].mxu0
        %v925 = vadd.f32 %v762, %v924
        %v926 = vpop.f32.mrb[0].mxu0
        %927 = vmatprep.mubr.f32.mxu0 %v796
        %928 = vmatmul.mubr.f32.gmra.mrb[0].mxu0 %v725
        %v929 = vpop.f32.mrb[0].mxu0
        %v930 = vadd.f32 %v762, %v929
        %v931 = vpop.f32.mrb[0].mxu0
        %932 = vmatprep.mubr.f32.mxu0 %v799
        %933 = vmatmul.mubr.f32.gmra.mrb[0].mxu0 %v727
        %v934 = vpop.f32.mrb[0].mxu0
        %v935 = vadd.f32 %v762, %v934
        %v936 = vpop.f32.mrb[0].mxu0
        %937 = vmatprep.mubr.f32.mxu0 %v802
        %938 = vmatmul.mubr.f32.gmra.mrb[0].mxu0 %v729
        %v939 = vpop.f32.mrb[0].mxu0
        %v940 = vadd.f32 %v762, %v939
        %v941 = vpop.f32.mrb[0].mxu0
        %942 = vmatprep.mubr.f32.mxu0 %v805
        %943 = vmatmul.mubr.f32.gmra.mrb[0].mxu0 %v731
        %v944 = vpop.f32.mrb[0].mxu0
        %v945 = vadd.f32 %v762, %v944
        %v946 = vpop.f32.mrb[0].mxu0
        %947 = vmatprep.mubr.f32.mxu0 %v808
        %948 = vmatmul.mubr.f32.gmra.mrb[0].mxu0 %v733
        %v949 = vpop.f32.mrb[0].mxu0
        %v950 = vadd.f32 %v762, %v949
        %v951 = vpop.f32.mrb[0].mxu0
        %952 = vmatprep.mubr.f32.mxu0 %v811
        %953 = vmatmul.mubr.f32.gmra.mrb[0].mxu0 %v735
        %v954 = vpop.f32.mrb[0].mxu0
        %v955 = vadd.f32 %v762, %v954
        %v956 = vpop.f32.mrb[0].mxu0
        %957 = vdwg.mxu0
        %v958 = vmax.f32 %v880, 0.0
        %v959 = vmax.f32 %v885, 0.0
        %v960 = vmax.f32 %v890, 0.0
        %v961 = vmax.f32 %v895, 0.0
        %v962 = vmax.f32 %v900, 0.0
        %v963 = vmax.f32 %v905, 0.0
        %v964 = vmax.f32 %v910, 0.0
        %v965 = vmax.f32 %v915, 0.0
        %v966 = vmax.f32 %v920, 0.0
        %v967 = vmax.f32 %v925, 0.0
        %v968 = vmax.f32 %v930, 0.0
        %v969 = vmax.f32 %v935, 0.0
        %v970 = vmax.f32 %v940, 0.0
        %v971 = vmax.f32 %v945, 0.0
        %v972 = vmax.f32 %v950, 0.0
        %v973 = vmax.f32 %v955, 0.0
        %vm990 = vcmask 1041408
        %v991 = vrot.slane %v958, 6
        %v992 = vrot.slane %v959, 6
        %v993 = vsel %vm990, %v991, %v992
        %v994 = vrot.slane %v960, 6
        %v995 = vrot.slane %v961, 6
        %v996 = vsel %vm990, %v994, %v995
        %v997 = vrot.slane %v962, 6
        %v998 = vrot.slane %v963, 6
        %v999 = vsel %vm990, %v997, %v998
        %v1000 = vrot.slane %v964, 6
        %v1001 = vrot.slane %v965, 6
        %v1002 = vsel %vm990, %v1000, %v1001
        %v1003 = vrot.slane %v966, 6
        %v1004 = vrot.slane %v967, 6
        %v1005 = vsel %vm990, %v1003, %v1004
        %v1006 = vrot.slane %v968, 6
        %v1007 = vrot.slane %v969, 6
        %v1008 = vsel %vm990, %v1006, %v1007
        %v1009 = vrot.slane %v970, 6
        %v1010 = vrot.slane %v971, 6
        %v1011 = vsel %vm990, %v1009, %v1010
        %v1012 = vrot.slane %v972, 6
        %v1013 = vrot.slane %v973, 6
        %v1014 = vsel %vm990, %v1012, %v1013
        %v1039 = vsel %vm990, 0.0, %v991
        %v1040 = vsel %vm990, 0.0, %v994
        %v1041 = vsel %vm990, 0.0, %v997
        %v1042 = vsel %vm990, 0.0, %v1000
        %v1043 = vsel %vm990, 0.0, %v1003
        %v1044 = vsel %vm990, 0.0, %v1006
        %v1045 = vsel %vm990, 0.0, %v1009
        %v1046 = vsel %vm990, 0.0, %v1012
        %v1047 = vsel %vm990, %v992, 0.0
        %v1048 = vsel %vm990, %v995, 0.0
        %v1049 = vsel %vm990, %v998, 0.0
        %v1050 = vsel %vm990, %v1001, 0.0
        %v1051 = vsel %vm990, %v1004, 0.0
        %v1052 = vsel %vm990, %v1007, 0.0
        %v1053 = vsel %vm990, %v1010, 0.0
        %v1054 = vsel %vm990, %v1013, 0.0
        %vm1071 = vcmask 1046528
        %v1072 = vrot.slane %v1039, 1
        %v1073 = vrot.slane %v993, 1
        %v1074 = vsel %vm1071, %v1072, %v1073
        %v1075 = vrot.slane %v1047, 1
        %v1076 = vsel %vm1071, %v1073, %v1075
        %v1077 = vrot.slane %v1040, 1
        %v1078 = vrot.slane %v996, 1
        %v1079 = vsel %vm1071, %v1077, %v1078
        %v1080 = vrot.slane %v1048, 1
        %v1081 = vsel %vm1071, %v1078, %v1080
        %v1082 = vrot.slane %v1041, 1
        %v1083 = vrot.slane %v999, 1
        %v1084 = vsel %vm1071, %v1082, %v1083
        %v1085 = vrot.slane %v1049, 1
        %v1086 = vsel %vm1071, %v1083, %v1085
        %v1087 = vrot.slane %v1042, 1
        %v1088 = vrot.slane %v1002, 1
        %v1089 = vsel %vm1071, %v1087, %v1088
        %v1090 = vrot.slane %v1050, 1
        %v1091 = vsel %vm1071, %v1088, %v1090
        %v1092 = vrot.slane %v1043, 1
        %v1093 = vrot.slane %v1005, 1
        %v1094 = vsel %vm1071, %v1092, %v1093
        %v1095 = vrot.slane %v1051, 1
        %v1096 = vsel %vm1071, %v1093, %v1095
        %v1097 = vrot.slane %v1044, 1
        %v1098 = vrot.slane %v1008, 1
        %v1099 = vsel %vm1071, %v1097, %v1098
        %v1100 = vrot.slane %v1052, 1
        %v1101 = vsel %vm1071, %v1098, %v1100
        %v1102 = vrot.slane %v1045, 1
        %v1103 = vrot.slane %v1011, 1
        %v1104 = vsel %vm1071, %v1102, %v1103
        %v1105 = vrot.slane %v1053, 1
        %v1106 = vsel %vm1071, %v1103, %v1105
        %v1107 = vrot.slane %v1046, 1
        %v1108 = vrot.slane %v1014, 1
        %v1109 = vsel %vm1071, %v1107, %v1108
        %v1110 = vrot.slane %v1054, 1
        %v1111 = vsel %vm1071, %v1108, %v1110
        %1112 = vrot.lane.b32.xlu0 %v1074, 64
        %v1113 = vpop.permute.xlu0 %1112
        %1114 = vrot.lane.b32.xlu0 %v1076, 64
        %v1115 = vpop.permute.xlu0 %1114
        %1116 = vrot.lane.b32.xlu0 %v1079, 64
        %v1117 = vpop.permute.xlu0 %1116
        %1118 = vrot.lane.b32.xlu0 %v1081, 64
        %v1119 = vpop.permute.xlu0 %1118
        %1120 = vrot.lane.b32.xlu0 %v1084, 64
        %v1121 = vpop.permute.xlu0 %1120
        %1122 = vrot.lane.b32.xlu0 %v1086, 64
        %v1123 = vpop.permute.xlu0 %1122
        %1124 = vrot.lane.b32.xlu0 %v1089, 64
        %v1125 = vpop.permute.xlu0 %1124
        %1126 = vrot.lane.b32.xlu0 %v1091, 64
        %v1127 = vpop.permute.xlu0 %1126
        %1128 = vrot.lane.b32.xlu0 %v1094, 64
        %v1129 = vpop.permute.xlu0 %1128
        %1130 = vrot.lane.b32.xlu0 %v1096, 64
        %v1131 = vpop.permute.xlu0 %1130
        %1132 = vrot.lane.b32.xlu0 %v1099, 64
        %v1133 = vpop.permute.xlu0 %1132
        %1134 = vrot.lane.b32.xlu0 %v1101, 64
        %v1135 = vpop.permute.xlu0 %1134
        %1136 = vrot.lane.b32.xlu0 %v1104, 64
        %v1137 = vpop.permute.xlu0 %1136
        %1138 = vrot.lane.b32.xlu0 %v1106, 64
        %v1139 = vpop.permute.xlu0 %1138
        %1140 = vrot.lane.b32.xlu0 %v1109, 64
        %v1141 = vpop.permute.xlu0 %1140
        %1142 = vrot.lane.b32.xlu0 %v1111, 64
        %v1143 = vpop.permute.xlu0 %1142
        %vm1160 = vcmask 1045504
        %v1161 = vrot.slane %v1039, 2
        %v1162 = vrot.slane %v993, 2
        %v1163 = vsel %vm1160, %v1161, %v1162
        %v1164 = vrot.slane %v1047, 2
        %v1165 = vsel %vm1160, %v1162, %v1164
        %v1166 = vrot.slane %v1040, 2
        %v1167 = vrot.slane %v996, 2
        %v1168 = vsel %vm1160, %v1166, %v1167
        %v1169 = vrot.slane %v1048, 2
        %v1170 = vsel %vm1160, %v1167, %v1169
        %v1171 = vrot.slane %v1041, 2
        %v1172 = vrot.slane %v999, 2
        %v1173 = vsel %vm1160, %v1171, %v1172
        %v1174 = vrot.slane %v1049, 2
        %v1175 = vsel %vm1160, %v1172, %v1174
        %v1176 = vrot.slane %v1042, 2
        %v1177 = vrot.slane %v1002, 2
        %v1178 = vsel %vm1160, %v1176, %v1177
        %v1179 = vrot.slane %v1050, 2
        %v1180 = vsel %vm1160, %v1177, %v1179
        %v1181 = vrot.slane %v1043, 2
        %v1182 = vrot.slane %v1005, 2
        %v1183 = vsel %vm1160, %v1181, %v1182
        %v1184 = vrot.slane %v1051, 2
        %v1185 = vsel %vm1160, %v1182, %v1184
        %v1186 = vrot.slane %v1044, 2
        %v1187 = vrot.slane %v1008, 2
        %v1188 = vsel %vm1160, %v1186, %v1187
        %v1189 = vrot.slane %v1052, 2
        %v1190 = vsel %vm1160, %v1187, %v1189
        %v1191 = vrot.slane %v1045, 2
        %v1192 = vrot.slane %v1011, 2
        %v1193 = vsel %vm1160, %v1191, %v1192
        %v1194 = vrot.slane %v1053, 2
        %v1195 = vsel %vm1160, %v1192, %v1194
        %v1196 = vrot.slane %v1046, 2
        %v1197 = vrot.slane %v1014, 2
        %v1198 = vsel %vm1160, %v1196, %v1197
        %v1199 = vrot.slane %v1054, 2
        %v1200 = vsel %vm1160, %v1197, %v1199
        %vm1217 = vcmask 1044480
        %v1218 = vrot.slane %v1039, 3
        %v1219 = vrot.slane %v993, 3
        %v1220 = vsel %vm1217, %v1218, %v1219
        %v1221 = vrot.slane %v1047, 3
        %v1222 = vsel %vm1217, %v1219, %v1221
        %v1223 = vrot.slane %v1040, 3
        %v1224 = vrot.slane %v996, 3
        %v1225 = vsel %vm1217, %v1223, %v1224
        %v1226 = vrot.slane %v1048, 3
        %v1227 = vsel %vm1217, %v1224, %v1226
        %v1228 = vrot.slane %v1041, 3
        %v1229 = vrot.slane %v999, 3
        %v1230 = vsel %vm1217, %v1228, %v1229
        %v1231 = vrot.slane %v1049, 3
        %v1232 = vsel %vm1217, %v1229, %v1231
        %v1233 = vrot.slane %v1042, 3
        %v1234 = vrot.slane %v1002, 3
        %v1235 = vsel %vm1217, %v1233, %v1234
        %v1236 = vrot.slane %v1050, 3
        %v1237 = vsel %vm1217, %v1234, %v1236
        %v1238 = vrot.slane %v1043, 3
        %v1239 = vrot.slane %v1005, 3
        %v1240 = vsel %vm1217, %v1238, %v1239
        %v1241 = vrot.slane %v1051, 3
        %v1242 = vsel %vm1217, %v1239, %v1241
        %v1243 = vrot.slane %v1044, 3
        %v1244 = vrot.slane %v1008, 3
        %v1245 = vsel %vm1217, %v1243, %v1244
        %v1246 = vrot.slane %v1052, 3
        %v1247 = vsel %vm1217, %v1244, %v1246
        %v1248 = vrot.slane %v1045, 3
        %v1249 = vrot.slane %v1011, 3
        %v1250 = vsel %vm1217, %v1248, %v1249
        %v1251 = vrot.slane %v1053, 3
        %v1252 = vsel %vm1217, %v1249, %v1251
        %v1253 = vrot.slane %v1046, 3
        %v1254 = vrot.slane %v1014, 3
        %v1255 = vsel %vm1217, %v1253, %v1254
        %v1256 = vrot.slane %v1054, 3
        %v1257 = vsel %vm1217, %v1254, %v1256
        %1258 = vrot.lane.b32.xlu0 %v1220, 64
        %v1259 = vpop.permute.xlu0 %1258
        %1260 = vrot.lane.b32.xlu0 %v1222, 64
        %v1261 = vpop.permute.xlu0 %1260
        %1262 = vrot.lane.b32.xlu0 %v1225, 64
        %v1263 = vpop.permute.xlu0 %1262
        %1264 = vrot.lane.b32.xlu0 %v1227, 64
        %v1265 = vpop.permute.xlu0 %1264
        %1266 = vrot.lane.b32.xlu0 %v1230, 64
        %v1267 = vpop.permute.xlu0 %1266
        %1268 = vrot.lane.b32.xlu0 %v1232, 64
        %v1269 = vpop.permute.xlu0 %1268
        %1270 = vrot.lane.b32.xlu0 %v1235, 64
        %v1271 = vpop.permute.xlu0 %1270
        %1272 = vrot.lane.b32.xlu0 %v1237, 64
        %v1273 = vpop.permute.xlu0 %1272
        %1274 = vrot.lane.b32.xlu0 %v1240, 64
        %v1275 = vpop.permute.xlu0 %1274
        %1276 = vrot.lane.b32.xlu0 %v1242, 64
        %v1277 = vpop.permute.xlu0 %1276
        %1278 = vrot.lane.b32.xlu0 %v1245, 64
        %v1279 = vpop.permute.xlu0 %1278
        %1280 = vrot.lane.b32.xlu0 %v1247, 64
        %v1281 = vpop.permute.xlu0 %1280
        %1282 = vrot.lane.b32.xlu0 %v1250, 64
        %v1283 = vpop.permute.xlu0 %1282
        %1284 = vrot.lane.b32.xlu0 %v1252, 64
        %v1285 = vpop.permute.xlu0 %1284
        %1286 = vrot.lane.b32.xlu0 %v1255, 64
        %v1287 = vpop.permute.xlu0 %1286
        %1288 = vrot.lane.b32.xlu0 %v1257, 64
        %v1289 = vpop.permute.xlu0 %1288
        %vm1306 = vcmask 1043456
        %v1307 = vrot.slane %v1039, 4
        %v1308 = vrot.slane %v993, 4
        %v1309 = vsel %vm1306, %v1307, %v1308
        %v1310 = vrot.slane %v1047, 4
        %v1311 = vsel %vm1306, %v1308, %v1310
        %v1312 = vrot.slane %v1040, 4
        %v1313 = vrot.slane %v996, 4
        %v1314 = vsel %vm1306, %v1312, %v1313
        %v1315 = vrot.slane %v1048, 4
        %v1316 = vsel %vm1306, %v1313, %v1315
        %v1317 = vrot.slane %v1041, 4
        %v1318 = vrot.slane %v999, 4
        %v1319 = vsel %vm1306, %v1317, %v1318
        %v1320 = vrot.slane %v1049, 4
        %v1321 = vsel %vm1306, %v1318, %v1320
        %v1322 = vrot.slane %v1042, 4
        %v1323 = vrot.slane %v1002, 4
        %v1324 = vsel %vm1306, %v1322, %v1323
        %v1325 = vrot.slane %v1050, 4
        %v1326 = vsel %vm1306, %v1323, %v1325
        %v1327 = vrot.slane %v1043, 4
        %v1328 = vrot.slane %v1005, 4
        %v1329 = vsel %vm1306, %v1327, %v1328
        %v1330 = vrot.slane %v1051, 4
        %v1331 = vsel %vm1306, %v1328, %v1330
        %v1332 = vrot.slane %v1044, 4
        %v1333 = vrot.slane %v1008, 4
        %v1334 = vsel %vm1306, %v1332, %v1333
        %v1335 = vrot.slane %v1052, 4
        %v1336 = vsel %vm1306, %v1333, %v1335
        %v1337 = vrot.slane %v1045, 4
        %v1338 = vrot.slane %v1011, 4
        %v1339 = vsel %vm1306, %v1337, %v1338
        %v1340 = vrot.slane %v1053, 4
        %v1341 = vsel %vm1306, %v1338, %v1340
        %v1342 = vrot.slane %v1046, 4
        %v1343 = vrot.slane %v1014, 4
        %v1344 = vsel %vm1306, %v1342, %v1343
        %v1345 = vrot.slane %v1054, 4
        %v1346 = vsel %vm1306, %v1343, %v1345
        %vm1347 = vcmask 523264
        %v1348 = vsel %vm1347, %v1039, %v1113
        %v1349 = vsel %vm1347, %v993, %v1115
        %v1350 = vsel %vm1347, %v1040, %v1117
        %v1351 = vsel %vm1347, %v996, %v1119
        %v1352 = vsel %vm1347, %v1041, %v1121
        %v1353 = vsel %vm1347, %v999, %v1123
        %v1354 = vsel %vm1347, %v1042, %v1125
        %v1355 = vsel %vm1347, %v1002, %v1127
        %v1356 = vsel %vm1347, %v1043, %v1129
        %v1357 = vsel %vm1347, %v1005, %v1131
        %v1358 = vsel %vm1347, %v1044, %v1133
        %v1359 = vsel %vm1347, %v1008, %v1135
        %v1360 = vsel %vm1347, %v1045, %v1137
        %v1361 = vsel %vm1347, %v1011, %v1139
        %v1362 = vsel %vm1347, %v1046, %v1141
        %v1363 = vsel %vm1347, %v1014, %v1143
        %v1364 = vsel %vm1347, %v1163, %v1259
        %v1365 = vsel %vm1347, %v1165, %v1261
        %v1366 = vsel %vm1347, %v1168, %v1263
        %v1367 = vsel %vm1347, %v1170, %v1265
        %v1368 = vsel %vm1347, %v1173, %v1267
        %v1369 = vsel %vm1347, %v1175, %v1269
        %v1370 = vsel %vm1347, %v1178, %v1271
        %v1371 = vsel %vm1347, %v1180, %v1273
        %v1372 = vsel %vm1347, %v1183, %v1275
        %v1373 = vsel %vm1347, %v1185, %v1277
        %v1374 = vsel %vm1347, %v1188, %v1279
        %v1375 = vsel %vm1347, %v1190, %v1281
        %v1376 = vsel %vm1347, %v1193, %v1283
        %v1377 = vsel %vm1347, %v1195, %v1285
        %v1378 = vsel %vm1347, %v1198, %v1287
        %v1379 = vsel %vm1347, %v1200, %v1289
        %v1380 = vld [vmem:[%s3] sm:$0xff]
        %v1381 = vld [vmem:[%s3 + $0x8] sm:$0xff]
        %v1382 = vld [vmem:[%s3 + $0x10] sm:$0xff]
        %v1383 = vld [vmem:[%s3 + $0x18] sm:$0xff]
        %v1384 = vld [vmem:[%s3 + $0x20] sm:$0xff]
        %v1385 = vld [vmem:[%s3 + $0x28] sm:$0xff]
        %v1386 = vld [vmem:[%s3 + $0x30] sm:$0xff]
        %v1387 = vld [vmem:[%s3 + $0x38] sm:$0xff]
        %v1388 = vld [vmem:[%s3 + $0x40] sm:$0xff]
        %v1389 = vld [vmem:[%s3 + $0x48] sm:$0xff]
        %v1390 = vld [vmem:[%s3 + $0x50] sm:$0xff]
        %v1391 = vld [vmem:[%s3 + $0x58] sm:$0xff]
        %v1392 = vld [vmem:[%s3 + $0x60] sm:$0xff]
        %v1393 = vld [vmem:[%s3 + $0x68] sm:$0xff]
        %v1394 = vld [vmem:[%s3 + $0x70] sm:$0xff]
        %v1395 = vld [vmem:[%s3 + $0x78] sm:$0xff]
        %v1396 = vld [vmem:[%s3 + $0x80] sm:$0xff]
        %v1397 = vld [vmem:[%s3 + $0x88] sm:$0xff]
        %v1398 = vld [vmem:[%s3 + $0x90] sm:$0xff]
        %v1399 = vld [vmem:[%s3 + $0x98] sm:$0xff]
        %v1400 = vld [vmem:[%s3 + $0xa0] sm:$0xff]
        %v1401 = vld [vmem:[%s3 + $0xa8] sm:$0xff]
        %v1402 = vld [vmem:[%s3 + $0xb0] sm:$0xff]
        %v1403 = vld [vmem:[%s3 + $0xb8] sm:$0xff]
        %v1404 = vld [vmem:[%s3 + $0xc0] sm:$0xff]
        %v1405 = vld [vmem:[%s3 + $0xc8] sm:$0xff]
        %v1406 = vld [vmem:[%s3 + $0xd0] sm:$0xff]
        %v1407 = vld [vmem:[%s3 + $0xd8] sm:$0xff]
        %v1408 = vld [vmem:[%s3 + $0xe0] sm:$0xff]
        %v1409 = vld [vmem:[%s3 + $0xe8] sm:$0xff]
        %v1410 = vld [vmem:[%s3 + $0xf0] sm:$0xff]
        %v1411 = vld [vmem:[%s3 + $0xf8] sm:$0xff]
        %v1412 = vld [vmem:[%s3 + $0x100] sm:$0xff]
        %v1413 = vld [vmem:[%s3 + $0x108] sm:$0xff]
        %v1414 = vld [vmem:[%s3 + $0x110] sm:$0xff]
        %v1415 = vld [vmem:[%s3 + $0x118] sm:$0xff]
        %v1416 = vld [vmem:[%s3 + $0x120] sm:$0xff]
        %v1417 = vld [vmem:[%s3 + $0x128] sm:$0xff]
        %v1418 = vld [vmem:[%s3 + $0x130] sm:$0xff]
        %v1419 = vld [vmem:[%s3 + $0x138] sm:$0xff]
        %v1420 = vld [vmem:[%s4] sm:$0x1]
        %v1422 = vlaneseq
        %v1423 = vshrl.u32 %v1422, 7
        %v1424 = vsub.s32 0, %v1423
        %v1425 = vrot.slane %v1420, %v1424
        %v1427 = vsel %vm1347, %v1309, 0
        %v1429 = vsel %vm1347, %v1311, 0
        %v1431 = vsel %vm1347, %v1314, 0
        %v1433 = vsel %vm1347, %v1316, 0
        %v1435 = vsel %vm1347, %v1319, 0
        %v1437 = vsel %vm1347, %v1321, 0
        %v1439 = vsel %vm1347, %v1324, 0
        %v1441 = vsel %vm1347, %v1326, 0
        %v1443 = vsel %vm1347, %v1329, 0
        %v1445 = vsel %vm1347, %v1331, 0
        %v1447 = vsel %vm1347, %v1334, 0
        %v1449 = vsel %vm1347, %v1336, 0
        %v1451 = vsel %vm1347, %v1339, 0
        %v1453 = vsel %vm1347, %v1341, 0
        %v1455 = vsel %vm1347, %v1344, 0
        %v1457 = vsel %vm1347, %v1346, 0
        %1459 = vmatprep.subr.mxu0 0.0
        %1460 = vmatpush1.msra.mxu0 %v1380
        %1461 = vmatprep.subr.mxu0 0.0
        %1462 = vmatpush1.msra.mxu0 %v1381
        %1463 = vmatprep.subr.mxu0 0.0
        %1464 = vmatpush1.msra.mxu0 %v1382
        %1465 = vmatprep.subr.mxu0 0.0
        %1466 = vmatpush1.msra.mxu0 %v1383
        %1467 = vmatprep.subr.mxu0 0.0
        %1468 = vmatpush1.msra.mxu0 %v1384
        %1469 = vmatprep.subr.mxu0 0.0
        %1470 = vmatpush1.msra.mxu0 %v1385
        %1471 = vmatprep.subr.mxu0 0.0
        %1472 = vmatpush1.msra.mxu0 %v1386
        %1473 = vmatprep.subr.mxu0 0.0
        %1474 = vmatpush1.msra.mxu0 %v1387
        %1475 = vmatprep.subr.mxu0 0.0
        %1476 = vmatpush1.msra.mxu0 %v1388
        %1477 = vmatprep.subr.mxu0 0.0
        %1478 = vmatpush1.msra.mxu0 %v1389
        %1479 = vmatprep.subr.mxu0 0.0
        %1480 = vmatpush1.msra.mxu0 %v1390
        %1481 = vmatprep.subr.mxu0 0.0
        %1482 = vmatpush1.msra.mxu0 %v1391
        %1483 = vmatprep.subr.mxu0 0.0
        %1484 = vmatpush1.msra.mxu0 %v1392
        %1485 = vmatprep.subr.mxu0 0.0
        %1486 = vmatpush1.msra.mxu0 %v1393
        %1487 = vmatprep.subr.mxu0 0.0
        %1488 = vmatpush1.msra.mxu0 %v1394
        %1489 = vmatprep.subr.mxu0 0.0
        %1490 = vmatpush1.msra.mxu0 %v1395
        %1491 = vmatprep.subr.mxu0 0.0
        %1492 = vmatpush1.msra.mxu0 %v1396
        %1493 = vmatprep.subr.mxu0 0.0
        %1494 = vmatpush1.msra.mxu0 %v1397
        %1495 = vmatprep.subr.mxu0 0.0
        %1496 = vmatpush1.msra.mxu0 %v1398
        %1497 = vmatprep.subr.mxu0 0.0
        %1498 = vmatpush1.msra.mxu0 %v1399
        %1499 = vmatprep.subr.mxu0 0.0
        %1500 = vmatpush1.msra.mxu0 %v1400
        %1501 = vmatprep.subr.mxu0 0.0
        %1502 = vmatpush1.msra.mxu0 %v1401
        %1503 = vmatprep.subr.mxu0 0.0
        %1504 = vmatpush1.msra.mxu0 %v1402
        %1505 = vmatprep.subr.mxu0 0.0
        %1506 = vmatpush1.msra.mxu0 %v1403
        %1507 = vmatprep.subr.mxu0 0.0
        %1508 = vmatpush1.msra.mxu0 %v1404
        %1509 = vmatprep.subr.mxu0 0.0
        %1510 = vmatpush1.msra.mxu0 %v1405
        %1511 = vmatprep.subr.mxu0 0.0
        %1512 = vmatpush1.msra.mxu0 %v1406
        %1513 = vmatprep.subr.mxu0 0.0
        %1514 = vmatpush1.msra.mxu0 %v1407
        %1515 = vmatprep.subr.mxu0 0.0
        %1516 = vmatpush1.msra.mxu0 %v1408
        %1517 = vmatprep.subr.mxu0 0.0
        %1518 = vmatpush1.msra.mxu0 %v1409
        %1519 = vmatprep.subr.mxu0 0.0
        %1520 = vmatpush1.msra.mxu0 %v1410
        %1521 = vmatprep.subr.mxu0 0.0
        %1522 = vmatpush1.msra.mxu0 %v1411
        %1523 = vmatprep.mubr.f32.mxu0 %v1364
        %1524 = vmatmul.mubr.f32.gmra.mrb[0].mxu0 %v1348
        %v1525 = vpop.f32.mrb[0].mxu0
        %v1526 = vadd.f32 %v1425, %v1525
        %v1527 = vpop.f32.mrb[0].mxu0
        %1528 = vmatprep.mubr.f32.mxu0 %v1365
        %1529 = vmatmul.mubr.f32.gmra.mrb[0].mxu0 %v1349
        %v1530 = vpop.f32.mrb[0].mxu0
        %v1531 = vadd.f32 %v1425, %v1530
        %v1532 = vpop.f32.mrb[0].mxu0
        %1533 = vmatprep.mubr.f32.mxu0 %v1366
        %1534 = vmatmul.mubr.f32.gmra.mrb[0].mxu0 %v1350
        %v1535 = vpop.f32.mrb[0].mxu0
        %v1536 = vadd.f32 %v1425, %v1535
        %v1537 = vpop.f32.mrb[0].mxu0
        %1538 = vmatprep.mubr.f32.mxu0 %v1367
        %1539 = vmatmul.mubr.f32.gmra.mrb[0].mxu0 %v1351
        %v1540 = vpop.f32.mrb[0].mxu0
        %v1541 = vadd.f32 %v1425, %v1540
        %v1542 = vpop.f32.mrb[0].mxu0
        %1543 = vmatprep.mubr.f32.mxu0 %v1368
        %1544 = vmatmul.mubr.f32.gmra.mrb[0].mxu0 %v1352
        %v1545 = vpop.f32.mrb[0].mxu0
        %v1546 = vadd.f32 %v1425, %v1545
        %v1547 = vpop.f32.mrb[0].mxu0
        %1548 = vmatprep.mubr.f32.mxu0 %v1369
        %1549 = vmatmul.mubr.f32.gmra.mrb[0].mxu0 %v1353
        %v1550 = vpop.f32.mrb[0].mxu0
        %v1551 = vadd.f32 %v1425, %v1550
        %v1552 = vpop.f32.mrb[0].mxu0
        %1553 = vmatprep.mubr.f32.mxu0 %v1370
        %1554 = vmatmul.mubr.f32.gmra.mrb[0].mxu0 %v1354
        %v1555 = vpop.f32.mrb[0].mxu0
        %v1556 = vadd.f32 %v1425, %v1555
        %v1557 = vpop.f32.mrb[0].mxu0
        %1558 = vmatprep.mubr.f32.mxu0 %v1371
        %1559 = vmatmul.mubr.f32.gmra.mrb[0].mxu0 %v1355
        %v1560 = vpop.f32.mrb[0].mxu0
        %v1561 = vadd.f32 %v1425, %v1560
        %v1562 = vpop.f32.mrb[0].mxu0
        %1563 = vmatprep.mubr.f32.mxu0 %v1372
        %1564 = vmatmul.mubr.f32.gmra.mrb[0].mxu0 %v1356
        %v1565 = vpop.f32.mrb[0].mxu0
        %v1566 = vadd.f32 %v1425, %v1565
        %v1567 = vpop.f32.mrb[0].mxu0
        %1568 = vmatprep.mubr.f32.mxu0 %v1373
        %1569 = vmatmul.mubr.f32.gmra.mrb[0].mxu0 %v1357
        %v1570 = vpop.f32.mrb[0].mxu0
        %v1571 = vadd.f32 %v1425, %v1570
        %v1572 = vpop.f32.mrb[0].mxu0
        %1573 = vmatprep.mubr.f32.mxu0 %v1374
        %1574 = vmatmul.mubr.f32.gmra.mrb[0].mxu0 %v1358
        %v1575 = vpop.f32.mrb[0].mxu0
        %v1576 = vadd.f32 %v1425, %v1575
        %v1577 = vpop.f32.mrb[0].mxu0
        %1578 = vmatprep.mubr.f32.mxu0 %v1375
        %1579 = vmatmul.mubr.f32.gmra.mrb[0].mxu0 %v1359
        %v1580 = vpop.f32.mrb[0].mxu0
        %v1581 = vadd.f32 %v1425, %v1580
        %v1582 = vpop.f32.mrb[0].mxu0
        %1583 = vmatprep.mubr.f32.mxu0 %v1376
        %1584 = vmatmul.mubr.f32.gmra.mrb[0].mxu0 %v1360
        %v1585 = vpop.f32.mrb[0].mxu0
        %v1586 = vadd.f32 %v1425, %v1585
        %v1587 = vpop.f32.mrb[0].mxu0
        %1588 = vmatprep.mubr.f32.mxu0 %v1377
        %1589 = vmatmul.mubr.f32.gmra.mrb[0].mxu0 %v1361
        %v1590 = vpop.f32.mrb[0].mxu0
        %v1591 = vadd.f32 %v1425, %v1590
        %v1592 = vpop.f32.mrb[0].mxu0
        %1593 = vmatprep.mubr.f32.mxu0 %v1378
        %1594 = vmatmul.mubr.f32.gmra.mrb[0].mxu0 %v1362
        %v1595 = vpop.f32.mrb[0].mxu0
        %v1596 = vadd.f32 %v1425, %v1595
        %v1597 = vpop.f32.mrb[0].mxu0
        %1598 = vmatprep.mubr.f32.mxu0 %v1379
        %1599 = vmatmul.mubr.f32.gmra.mrb[0].mxu0 %v1363
        %v1600 = vpop.f32.mrb[0].mxu0
        %v1601 = vadd.f32 %v1425, %v1600
        %v1602 = vpop.f32.mrb[0].mxu0
        %1603 = vdwg.mxu0
        %1604 = vmatprep.subr.mxu0 0.0
        %1605 = vmatpush1.msra.mxu0 %v1412
        %1606 = vmatprep.subr.mxu0 0.0
        %1607 = vmatpush1.msra.mxu0 %v1413
        %1608 = vmatprep.subr.mxu0 0.0
        %1609 = vmatpush1.msra.mxu0 %v1414
        %1610 = vmatprep.subr.mxu0 0.0
        %1611 = vmatpush1.msra.mxu0 %v1415
        %1612 = vmatprep.subr.mxu0 0.0
        %1613 = vmatpush1.msra.mxu0 %v1416
        %1614 = vmatprep.subr.mxu0 0.0
        %1615 = vmatpush1.msra.mxu0 %v1417
        %1616 = vmatprep.subr.mxu0 0.0
        %1617 = vmatpush1.msra.mxu0 %v1418
        %1618 = vmatprep.subr.mxu0 0.0
        %1619 = vmatpush1.msra.mxu0 %v1419
        %1620 = vmatprep.subr.mxu0 0.0
        %1621 = vmatpush1.msra.mxu0 0.0
        %1622 = vmatprep.subr.mxu0 0.0
        %1623 = vmatpush1.msra.mxu0 0.0
        %1624 = vmatprep.subr.mxu0 0.0
        %1625 = vmatpush1.msra.mxu0 0.0
        %1626 = vmatprep.subr.mxu0 0.0
        %1627 = vmatpush1.msra.mxu0 0.0
        %1628 = vmatprep.subr.mxu0 0.0
        %1629 = vmatpush1.msra.mxu0 0.0
        %1630 = vmatprep.subr.mxu0 0.0
        %1631 = vmatpush1.msra.mxu0 0.0
        %1632 = vmatprep.subr.mxu0 0.0
        %1633 = vmatpush1.msra.mxu0 0.0
        %1634 = vmatprep.subr.mxu0 0.0
        %1635 = vmatpush1.msra.mxu0 0.0
        %1636 = vmatprep.subr.mxu0 0.0
        %1637 = vmatpush1.msra.mxu0 0.0
        %1638 = vmatprep.subr.mxu0 0.0
        %1639 = vmatpush1.msra.mxu0 0.0
        %1640 = vmatprep.subr.mxu0 0.0
        %1641 = vmatpush1.msra.mxu0 0.0
        %1642 = vmatprep.subr.mxu0 0.0
        %1643 = vmatpush1.msra.mxu0 0.0
        %1644 = vmatprep.subr.mxu0 0.0
        %1645 = vmatpush1.msra.mxu0 0.0
        %1646 = vmatprep.subr.mxu0 0.0
        %1647 = vmatpush1.msra.mxu0 0.0
        %1648 = vmatprep.subr.mxu0 0.0
        %1649 = vmatpush1.msra.mxu0 0.0
        %1650 = vmatprep.subr.mxu0 0.0
        %1651 = vmatpush1.msra.mxu0 0.0
        %1652 = vmatprep.subr.mxu0 0.0
        %1653 = vmatpush1.msra.mxu0 0.0
        %1654 = vmatprep.subr.mxu0 0.0
        %1655 = vmatpush1.msra.mxu0 0.0
        %1656 = vmatprep.subr.mxu0 0.0
        %1657 = vmatpush1.msra.mxu0 0.0
        %1658 = vmatprep.subr.mxu0 0.0
        %1659 = vmatpush1.msra.mxu0 0.0
        %1660 = vmatprep.subr.mxu0 0.0
        %1661 = vmatpush1.msra.mxu0 0.0
        %1662 = vmatprep.subr.mxu0 0.0
        %1663 = vmatpush1.msra.mxu0 0.0
        %1664 = vmatprep.subr.mxu0 0.0
        %1665 = vmatpush1.msra.mxu0 0.0
        %1666 = vmatprep.subr.mxu0 0.0
        %1667 = vmatpush1.msra.mxu0 0.0
        %1668 = vmatprep.mubr.f32.mxu0 0.0
        %1669 = vmatmul.mubr.f32.gmra.mrb[0].mxu0 %v1427
        %v1670 = vpop.f32.mrb[0].mxu0
        %v1671 = vadd.f32 %v1526, %v1670
        %v1672 = vpop.f32.mrb[0].mxu0
        %1673 = vmatprep.mubr.f32.mxu0 0.0
        %1674 = vmatmul.mubr.f32.gmra.mrb[0].mxu0 %v1429
        %v1675 = vpop.f32.mrb[0].mxu0
        %v1676 = vadd.f32 %v1531, %v1675
        %v1677 = vpop.f32.mrb[0].mxu0
        %1678 = vmatprep.mubr.f32.mxu0 0.0
        %1679 = vmatmul.mubr.f32.gmra.mrb[0].mxu0 %v1431
        %v1680 = vpop.f32.mrb[0].mxu0
        %v1681 = vadd.f32 %v1536, %v1680
        %v1682 = vpop.f32.mrb[0].mxu0
        %1683 = vmatprep.mubr.f32.mxu0 0.0
        %1684 = vmatmul.mubr.f32.gmra.mrb[0].mxu0 %v1433
        %v1685 = vpop.f32.mrb[0].mxu0
        %v1686 = vadd.f32 %v1541, %v1685
        %v1687 = vpop.f32.mrb[0].mxu0
        %1688 = vmatprep.mubr.f32.mxu0 0.0
        %1689 = vmatmul.mubr.f32.gmra.mrb[0].mxu0 %v1435
        %v1690 = vpop.f32.mrb[0].mxu0
        %v1691 = vadd.f32 %v1546, %v1690
        %v1692 = vpop.f32.mrb[0].mxu0
        %1693 = vmatprep.mubr.f32.mxu0 0.0
        %1694 = vmatmul.mubr.f32.gmra.mrb[0].mxu0 %v1437
        %v1695 = vpop.f32.mrb[0].mxu0
        %v1696 = vadd.f32 %v1551, %v1695
        %v1697 = vpop.f32.mrb[0].mxu0
        %1698 = vmatprep.mubr.f32.mxu0 0.0
        %1699 = vmatmul.mubr.f32.gmra.mrb[0].mxu0 %v1439
        %v1700 = vpop.f32.mrb[0].mxu0
        %v1701 = vadd.f32 %v1556, %v1700
        %v1702 = vpop.f32.mrb[0].mxu0
        %1703 = vmatprep.mubr.f32.mxu0 0.0
        %1704 = vmatmul.mubr.f32.gmra.mrb[0].mxu0 %v1441
        %v1705 = vpop.f32.mrb[0].mxu0
        %v1706 = vadd.f32 %v1561, %v1705
        %v1707 = vpop.f32.mrb[0].mxu0
        %1708 = vmatprep.mubr.f32.mxu0 0.0
        %1709 = vmatmul.mubr.f32.gmra.mrb[0].mxu0 %v1443
        %v1710 = vpop.f32.mrb[0].mxu0
        %v1711 = vadd.f32 %v1566, %v1710
        %v1712 = vpop.f32.mrb[0].mxu0
        %1713 = vmatprep.mubr.f32.mxu0 0.0
        %1714 = vmatmul.mubr.f32.gmra.mrb[0].mxu0 %v1445
        %v1715 = vpop.f32.mrb[0].mxu0
        %v1716 = vadd.f32 %v1571, %v1715
        %v1717 = vpop.f32.mrb[0].mxu0
        %1718 = vmatprep.mubr.f32.mxu0 0.0
        %1719 = vmatmul.mubr.f32.gmra.mrb[0].mxu0 %v1447
        %v1720 = vpop.f32.mrb[0].mxu0
        %v1721 = vadd.f32 %v1576, %v1720
        %v1722 = vpop.f32.mrb[0].mxu0
        %1723 = vmatprep.mubr.f32.mxu0 0.0
        %1724 = vmatmul.mubr.f32.gmra.mrb[0].mxu0 %v1449
        %v1725 = vpop.f32.mrb[0].mxu0
        %v1726 = vadd.f32 %v1581, %v1725
        %v1727 = vpop.f32.mrb[0].mxu0
        %1728 = vmatprep.mubr.f32.mxu0 0.0
        %1729 = vmatmul.mubr.f32.gmra.mrb[0].mxu0 %v1451
        %v1730 = vpop.f32.mrb[0].mxu0
        %v1731 = vadd.f32 %v1586, %v1730
        %v1732 = vpop.f32.mrb[0].mxu0
        %1733 = vmatprep.mubr.f32.mxu0 0.0
        %1734 = vmatmul.mubr.f32.gmra.mrb[0].mxu0 %v1453
        %v1735 = vpop.f32.mrb[0].mxu0
        %v1736 = vadd.f32 %v1591, %v1735
        %v1737 = vpop.f32.mrb[0].mxu0
        %1738 = vmatprep.mubr.f32.mxu0 0.0
        %1739 = vmatmul.mubr.f32.gmra.mrb[0].mxu0 %v1455
        %v1740 = vpop.f32.mrb[0].mxu0
        %v1741 = vadd.f32 %v1596, %v1740
        %v1742 = vpop.f32.mrb[0].mxu0
        %1743 = vmatprep.mubr.f32.mxu0 0.0
        %1744 = vmatmul.mubr.f32.gmra.mrb[0].mxu0 %v1457
        %v1745 = vpop.f32.mrb[0].mxu0
        %v1746 = vadd.f32 %v1601, %v1745
        %v1747 = vpop.f32.mrb[0].mxu0
        %1748 = vdwg.mxu0
        %v1749 = vmax.f32 %v1671, 0.0
        %v1750 = vmax.f32 %v1676, 0.0
        %v1751 = vmax.f32 %v1681, 0.0
        %v1752 = vmax.f32 %v1686, 0.0
        %v1753 = vmax.f32 %v1691, 0.0
        %v1754 = vmax.f32 %v1696, 0.0
        %v1755 = vmax.f32 %v1701, 0.0
        %v1756 = vmax.f32 %v1706, 0.0
        %v1757 = vmax.f32 %v1711, 0.0
        %v1758 = vmax.f32 %v1716, 0.0
        %v1759 = vmax.f32 %v1721, 0.0
        %v1760 = vmax.f32 %v1726, 0.0
        %v1761 = vmax.f32 %v1731, 0.0
        %v1762 = vmax.f32 %v1736, 0.0
        %v1763 = vmax.f32 %v1741, 0.0
        %v1764 = vmax.f32 %v1746, 0.0
        %v1765 = vld [vmem:[%s5] sm:$0x1]
        %v1767 = vlaneseq
        %v1768 = vshrl.u32 %v1767, 7
        %v1769 = vsub.s32 0, %v1768
        %v1770 = vrot.slane %v1765, %v1769
        %v1772 = vmul.f32 %v1749, %v1770
        %v1773 = vmul.f32 %v1750, %v1770
        %v1774 = vmul.f32 %v1751, %v1770
        %v1775 = vmul.f32 %v1752, %v1770
        %v1776 = vmul.f32 %v1753, %v1770
        %v1777 = vmul.f32 %v1754, %v1770
        %v1778 = vmul.f32 %v1755, %v1770
        %v1779 = vmul.f32 %v1756, %v1770
        %v1780 = vmul.f32 %v1757, %v1770
        %v1781 = vmul.f32 %v1758, %v1770
        %v1782 = vmul.f32 %v1759, %v1770
        %v1783 = vmul.f32 %v1760, %v1770
        %v1784 = vmul.f32 %v1761, %v1770
        %v1785 = vmul.f32 %v1762, %v1770
        %v1786 = vmul.f32 %v1763, %v1770
        %v1787 = vmul.f32 %v1764, %v1770
        %v1788 = vsel %vm1347, %v1772, 0.0
        %1789 = vadd.xlane.f32.xlu0 %v1788
        %v1790 = vpop.xlane.xlu0 %1789
        %v1791 = vsel %vm1347, %v1773, 0.0
        %1792 = vadd.xlane.f32.xlu0 %v1791
        %v1793 = vpop.xlane.xlu0 %1792
        %v1794 = vsel %vm1347, %v1774, 0.0
        %1795 = vadd.xlane.f32.xlu0 %v1794
        %v1796 = vpop.xlane.xlu0 %1795
        %v1797 = vsel %vm1347, %v1775, 0.0
        %1798 = vadd.xlane.f32.xlu0 %v1797
        %v1799 = vpop.xlane.xlu0 %1798
        %v1800 = vsel %vm1347, %v1776, 0.0
        %1801 = vadd.xlane.f32.xlu0 %v1800
        %v1802 = vpop.xlane.xlu0 %1801
        %v1803 = vsel %vm1347, %v1777, 0.0
        %1804 = vadd.xlane.f32.xlu0 %v1803
        %v1805 = vpop.xlane.xlu0 %1804
        %v1806 = vsel %vm1347, %v1778, 0.0
        %1807 = vadd.xlane.f32.xlu0 %v1806
        %v1808 = vpop.xlane.xlu0 %1807
        %v1809 = vsel %vm1347, %v1779, 0.0
        %1810 = vadd.xlane.f32.xlu0 %v1809
        %v1811 = vpop.xlane.xlu0 %1810
        %v1812 = vsel %vm1347, %v1780, 0.0
        %1813 = vadd.xlane.f32.xlu0 %v1812
        %v1814 = vpop.xlane.xlu0 %1813
        %v1815 = vsel %vm1347, %v1781, 0.0
        %1816 = vadd.xlane.f32.xlu0 %v1815
        %v1817 = vpop.xlane.xlu0 %1816
        %v1818 = vsel %vm1347, %v1782, 0.0
        %1819 = vadd.xlane.f32.xlu0 %v1818
        %v1820 = vpop.xlane.xlu0 %1819
        %v1821 = vsel %vm1347, %v1783, 0.0
        %1822 = vadd.xlane.f32.xlu0 %v1821
        %v1823 = vpop.xlane.xlu0 %1822
        %v1824 = vsel %vm1347, %v1784, 0.0
        %1825 = vadd.xlane.f32.xlu0 %v1824
        %v1826 = vpop.xlane.xlu0 %1825
        %v1827 = vsel %vm1347, %v1785, 0.0
        %1828 = vadd.xlane.f32.xlu0 %v1827
        %v1829 = vpop.xlane.xlu0 %1828
        %v1830 = vsel %vm1347, %v1786, 0.0
        %1831 = vadd.xlane.f32.xlu0 %v1830
        %v1832 = vpop.xlane.xlu0 %1831
        %v1833 = vsel %vm1347, %v1787, 0.0
        %1834 = vadd.xlane.f32.xlu0 %v1833
        %v1835 = vpop.xlane.xlu0 %1834
        %v1836 = vmax.f32 %v1790, %v1793
        %v1837 = vrot.slane %v1836, 4
        %v1838 = vmax.f32 %v1836, %v1837
        %v1839 = vrot.slane %v1838, 2
        %v1840 = vmax.f32 %v1838, %v1839
        %v1841 = vrot.slane %v1840, 1
        %v1842 = vmax.f32 %v1840, %v1841
        %v1843 = vmax.f32 %v1796, %v1799
        %v1844 = vrot.slane %v1843, 4
        %v1845 = vmax.f32 %v1843, %v1844
        %v1846 = vrot.slane %v1845, 2
        %v1847 = vmax.f32 %v1845, %v1846
        %v1848 = vrot.slane %v1847, 1
        %v1849 = vmax.f32 %v1847, %v1848
        %v1850 = vmax.f32 %v1802, %v1805
        %v1851 = vrot.slane %v1850, 4
        %v1852 = vmax.f32 %v1850, %v1851
        %v1853 = vrot.slane %v1852, 2
        %v1854 = vmax.f32 %v1852, %v1853
        %v1855 = vrot.slane %v1854, 1
        %v1856 = vmax.f32 %v1854, %v1855
        %v1857 = vmax.f32 %v1808, %v1811
        %v1858 = vrot.slane %v1857, 4
        %v1859 = vmax.f32 %v1857, %v1858
        %v1860 = vrot.slane %v1859, 2
        %v1861 = vmax.f32 %v1859, %v1860
        %v1862 = vrot.slane %v1861, 1
        %v1863 = vmax.f32 %v1861, %v1862
        %v1864 = vmax.f32 %v1814, %v1817
        %v1865 = vrot.slane %v1864, 4
        %v1866 = vmax.f32 %v1864, %v1865
        %v1867 = vrot.slane %v1866, 2
        %v1868 = vmax.f32 %v1866, %v1867
        %v1869 = vrot.slane %v1868, 1
        %v1870 = vmax.f32 %v1868, %v1869
        %v1871 = vmax.f32 %v1820, %v1823
        %v1872 = vrot.slane %v1871, 4
        %v1873 = vmax.f32 %v1871, %v1872
        %v1874 = vrot.slane %v1873, 2
        %v1875 = vmax.f32 %v1873, %v1874
        %v1876 = vrot.slane %v1875, 1
        %v1877 = vmax.f32 %v1875, %v1876
        %v1878 = vmax.f32 %v1826, %v1829
        %v1879 = vrot.slane %v1878, 4
        %v1880 = vmax.f32 %v1878, %v1879
        %v1881 = vrot.slane %v1880, 2
        %v1882 = vmax.f32 %v1880, %v1881
        %v1883 = vrot.slane %v1882, 1
        %v1884 = vmax.f32 %v1882, %v1883
        %v1885 = vmax.f32 %v1832, %v1835
        %v1886 = vrot.slane %v1885, 4
        %v1887 = vmax.f32 %v1885, %v1886
        %v1888 = vrot.slane %v1887, 2
        %v1889 = vmax.f32 %v1887, %v1888
        %v1890 = vrot.slane %v1889, 1
        %v1891 = vmax.f32 %v1889, %v1890
        %v1892 = vsub.f32 %v1790, %v1842
        %v1893 = vsub.f32 %v1793, %v1842
        %v1894 = vsub.f32 %v1796, %v1849
        %v1895 = vsub.f32 %v1799, %v1849
        %v1896 = vsub.f32 %v1802, %v1856
        %v1897 = vsub.f32 %v1805, %v1856
        %v1898 = vsub.f32 %v1808, %v1863
        %v1899 = vsub.f32 %v1811, %v1863
        %v1900 = vsub.f32 %v1814, %v1870
        %v1901 = vsub.f32 %v1817, %v1870
        %v1902 = vsub.f32 %v1820, %v1877
        %v1903 = vsub.f32 %v1823, %v1877
        %v1904 = vsub.f32 %v1826, %v1884
        %v1905 = vsub.f32 %v1829, %v1884
        %v1906 = vsub.f32 %v1832, %v1891
        %v1907 = vsub.f32 %v1835, %v1891
        %v1908 = vmul.f32 %v1892, 1.442695
        %v1909 = vpow.pop %v1908
        %v1910 = vmul.f32 %v1893, 1.442695
        %v1911 = vpow.pop %v1910
        %v1912 = vmul.f32 %v1894, 1.442695
        %v1913 = vpow.pop %v1912
        %v1914 = vmul.f32 %v1895, 1.442695
        %v1915 = vpow.pop %v1914
        %v1916 = vmul.f32 %v1896, 1.442695
        %v1917 = vpow.pop %v1916
        %v1918 = vmul.f32 %v1897, 1.442695
        %v1919 = vpow.pop %v1918
        %v1920 = vmul.f32 %v1898, 1.442695
        %v1921 = vpow.pop %v1920
        %v1922 = vmul.f32 %v1899, 1.442695
        %v1923 = vpow.pop %v1922
        %v1924 = vmul.f32 %v1900, 1.442695
        %v1925 = vpow.pop %v1924
        %v1926 = vmul.f32 %v1901, 1.442695
        %v1927 = vpow.pop %v1926
        %v1928 = vmul.f32 %v1902, 1.442695
        %v1929 = vpow.pop %v1928
        %v1930 = vmul.f32 %v1903, 1.442695
        %v1931 = vpow.pop %v1930
        %v1932 = vmul.f32 %v1904, 1.442695
        %v1933 = vpow.pop %v1932
        %v1934 = vmul.f32 %v1905, 1.442695
        %v1935 = vpow.pop %v1934
        %v1936 = vmul.f32 %v1906, 1.442695
        %v1937 = vpow.pop %v1936
        %v1938 = vmul.f32 %v1907, 1.442695
        %v1939 = vpow.pop %v1938
        %v1940 = vadd.f32 %v1909, %v1911
        %v1941 = vrot.slane %v1940, 4
        %v1942 = vadd.f32 %v1940, %v1941
        %v1943 = vrot.slane %v1942, 2
        %v1944 = vadd.f32 %v1942, %v1943
        %v1945 = vrot.slane %v1944, 1
        %v1946 = vadd.f32 %v1944, %v1945
        %v1947 = vadd.f32 %v1913, %v1915
        %v1948 = vrot.slane %v1947, 4
        %v1949 = vadd.f32 %v1947, %v1948
        %v1950 = vrot.slane %v1949, 2
        %v1951 = vadd.f32 %v1949, %v1950
        %v1952 = vrot.slane %v1951, 1
        %v1953 = vadd.f32 %v1951, %v1952
        %v1954 = vadd.f32 %v1917, %v1919
        %v1955 = vrot.slane %v1954, 4
        %v1956 = vadd.f32 %v1954, %v1955
        %v1957 = vrot.slane %v1956, 2
        %v1958 = vadd.f32 %v1956, %v1957
        %v1959 = vrot.slane %v1958, 1
        %v1960 = vadd.f32 %v1958, %v1959
        %v1961 = vadd.f32 %v1921, %v1923
        %v1962 = vrot.slane %v1961, 4
        %v1963 = vadd.f32 %v1961, %v1962
        %v1964 = vrot.slane %v1963, 2
        %v1965 = vadd.f32 %v1963, %v1964
        %v1966 = vrot.slane %v1965, 1
        %v1967 = vadd.f32 %v1965, %v1966
        %v1968 = vadd.f32 %v1925, %v1927
        %v1969 = vrot.slane %v1968, 4
        %v1970 = vadd.f32 %v1968, %v1969
        %v1971 = vrot.slane %v1970, 2
        %v1972 = vadd.f32 %v1970, %v1971
        %v1973 = vrot.slane %v1972, 1
        %v1974 = vadd.f32 %v1972, %v1973
        %v1975 = vadd.f32 %v1929, %v1931
        %v1976 = vrot.slane %v1975, 4
        %v1977 = vadd.f32 %v1975, %v1976
        %v1978 = vrot.slane %v1977, 2
        %v1979 = vadd.f32 %v1977, %v1978
        %v1980 = vrot.slane %v1979, 1
        %v1981 = vadd.f32 %v1979, %v1980
        %v1982 = vadd.f32 %v1933, %v1935
        %v1983 = vrot.slane %v1982, 4
        %v1984 = vadd.f32 %v1982, %v1983
        %v1985 = vrot.slane %v1984, 2
        %v1986 = vadd.f32 %v1984, %v1985
        %v1987 = vrot.slane %v1986, 1
        %v1988 = vadd.f32 %v1986, %v1987
        %v1989 = vadd.f32 %v1937, %v1939
        %v1990 = vrot.slane %v1989, 4
        %v1991 = vadd.f32 %v1989, %v1990
        %v1992 = vrot.slane %v1991, 2
        %v1993 = vadd.f32 %v1991, %v1992
        %v1994 = vrot.slane %v1993, 1
        %v1995 = vadd.f32 %v1993, %v1994
        %v1996 = vrcp.pop %v1946
        %v1997 = vrcp.pop %v1953
        %v1998 = vrcp.pop %v1960
        %v1999 = vrcp.pop %v1967
        %v2000 = vrcp.pop %v1974
        %v2001 = vrcp.pop %v1981
        %v2002 = vrcp.pop %v1988
        %v2003 = vrcp.pop %v1995
        %v2004 = vmul.f32 %v1909, %v1996
        %v2005 = vmul.f32 %v1911, %v1996
        %v2006 = vmul.f32 %v1913, %v1997
        %v2007 = vmul.f32 %v1915, %v1997
        %v2008 = vmul.f32 %v1917, %v1998
        %v2009 = vmul.f32 %v1919, %v1998
        %v2010 = vmul.f32 %v1921, %v1999
        %v2011 = vmul.f32 %v1923, %v1999
        %v2012 = vmul.f32 %v1925, %v2000
        %v2013 = vmul.f32 %v1927, %v2000
        %v2014 = vmul.f32 %v1929, %v2001
        %v2015 = vmul.f32 %v1931, %v2001
        %v2016 = vmul.f32 %v1933, %v2002
        %v2017 = vmul.f32 %v1935, %v2002
        %v2018 = vmul.f32 %v1937, %v2003
        %v2019 = vmul.f32 %v1939, %v2003
        %v2020 = vmul.f32 %v1749, %v2004
        %v2021 = vmul.f32 %v1750, %v2005
        %v2022 = vmul.f32 %v1751, %v2006
        %v2023 = vmul.f32 %v1752, %v2007
        %v2024 = vmul.f32 %v1753, %v2008
        %v2025 = vmul.f32 %v1754, %v2009
        %v2026 = vmul.f32 %v1755, %v2010
        %v2027 = vmul.f32 %v1756, %v2011
        %v2028 = vmul.f32 %v1757, %v2012
        %v2029 = vmul.f32 %v1758, %v2013
        %v2030 = vmul.f32 %v1759, %v2014
        %v2031 = vmul.f32 %v1760, %v2015
        %v2032 = vmul.f32 %v1761, %v2016
        %v2033 = vmul.f32 %v1762, %v2017
        %v2034 = vmul.f32 %v1763, %v2018
        %v2035 = vmul.f32 %v1764, %v2019
        %v2036 = vsel %vm1347, %v2020, 0.0
        %v2037 = vsel %vm1347, %v2021, 0.0
        %v2038 = vadd.f32 %v2036, %v2037
        %v2039 = vrot.slane %v2038, 4
        %v2040 = vadd.f32 %v2038, %v2039
        %v2041 = vrot.slane %v2040, 2
        %v2042 = vadd.f32 %v2040, %v2041
        %v2043 = vrot.slane %v2042, 1
        %v2044 = vadd.f32 %v2042, %v2043
        %v2045 = vsel %vm1347, %v2022, 0.0
        %v2046 = vsel %vm1347, %v2023, 0.0
        %v2047 = vadd.f32 %v2045, %v2046
        %v2048 = vrot.slane %v2047, 4
        %v2049 = vadd.f32 %v2047, %v2048
        %v2050 = vrot.slane %v2049, 2
        %v2051 = vadd.f32 %v2049, %v2050
        %v2052 = vrot.slane %v2051, 1
        %v2053 = vadd.f32 %v2051, %v2052
        %v2054 = vsel %vm1347, %v2024, 0.0
        %v2055 = vsel %vm1347, %v2025, 0.0
        %v2056 = vadd.f32 %v2054, %v2055
        %v2057 = vrot.slane %v2056, 4
        %v2058 = vadd.f32 %v2056, %v2057
        %v2059 = vrot.slane %v2058, 2
        %v2060 = vadd.f32 %v2058, %v2059
        %v2061 = vrot.slane %v2060, 1
        %v2062 = vadd.f32 %v2060, %v2061
        %v2063 = vsel %vm1347, %v2026, 0.0
        %v2064 = vsel %vm1347, %v2027, 0.0
        %v2065 = vadd.f32 %v2063, %v2064
        %v2066 = vrot.slane %v2065, 4
        %v2067 = vadd.f32 %v2065, %v2066
        %v2068 = vrot.slane %v2067, 2
        %v2069 = vadd.f32 %v2067, %v2068
        %v2070 = vrot.slane %v2069, 1
        %v2071 = vadd.f32 %v2069, %v2070
        %v2072 = vsel %vm1347, %v2028, 0.0
        %v2073 = vsel %vm1347, %v2029, 0.0
        %v2074 = vadd.f32 %v2072, %v2073
        %v2075 = vrot.slane %v2074, 4
        %v2076 = vadd.f32 %v2074, %v2075
        %v2077 = vrot.slane %v2076, 2
        %v2078 = vadd.f32 %v2076, %v2077
        %v2079 = vrot.slane %v2078, 1
        %v2080 = vadd.f32 %v2078, %v2079
        %v2081 = vsel %vm1347, %v2030, 0.0
        %v2082 = vsel %vm1347, %v2031, 0.0
        %v2083 = vadd.f32 %v2081, %v2082
        %v2084 = vrot.slane %v2083, 4
        %v2085 = vadd.f32 %v2083, %v2084
        %v2086 = vrot.slane %v2085, 2
        %v2087 = vadd.f32 %v2085, %v2086
        %v2088 = vrot.slane %v2087, 1
        %v2089 = vadd.f32 %v2087, %v2088
        %v2090 = vsel %vm1347, %v2032, 0.0
        %v2091 = vsel %vm1347, %v2033, 0.0
        %v2092 = vadd.f32 %v2090, %v2091
        %v2093 = vrot.slane %v2092, 4
        %v2094 = vadd.f32 %v2092, %v2093
        %v2095 = vrot.slane %v2094, 2
        %v2096 = vadd.f32 %v2094, %v2095
        %v2097 = vrot.slane %v2096, 1
        %v2098 = vadd.f32 %v2096, %v2097
        %v2099 = vsel %vm1347, %v2034, 0.0
        %v2100 = vsel %vm1347, %v2035, 0.0
        %v2101 = vadd.f32 %v2099, %v2100
        %v2102 = vrot.slane %v2101, 4
        %v2103 = vadd.f32 %v2101, %v2102
        %v2104 = vrot.slane %v2103, 2
        %v2105 = vadd.f32 %v2103, %v2104
        %v2106 = vrot.slane %v2105, 1
        %v2107 = vadd.f32 %v2105, %v2106
        %s2108 = scalar_lea.vmem %s659, 256 [#allocation2]
        %v2109 = vld [vmem:[%s2108] sm:$0xff]
        %v2110 = vld [vmem:[%s2108 + $0x8] sm:$0xff]
        %v2111 = vld [vmem:[%s2108 + $0x10] sm:$0xff]
        %v2112 = vld [vmem:[%s2108 + $0x18] sm:$0xff]
        %v2113 = vld [vmem:[%s2108 + $0x20] sm:$0xff]
        %v2114 = vld [vmem:[%s2108 + $0x28] sm:$0xff]
        %v2115 = vld [vmem:[%s2108 + $0x30] sm:$0xff]
        %v2116 = vld [vmem:[%s2108 + $0x38] sm:$0xff]
        %v2117 = vld [vmem:[%s2108 + $0x40] sm:$0xff]
        %v2118 = vld [vmem:[%s2108 + $0x48] sm:$0xff]
        %v2119 = vld [vmem:[%s2108 + $0x50] sm:$0xff]
        %v2120 = vld [vmem:[%s2108 + $0x58] sm:$0xff]
        %v2121 = vld [vmem:[%s2108 + $0x60] sm:$0xff]
        %v2122 = vld [vmem:[%s2108 + $0x68] sm:$0xff]
        %v2123 = vld [vmem:[%s2108 + $0x70] sm:$0xff]
        %v2124 = vld [vmem:[%s2108 + $0x78] sm:$0xff]
        %v2125 = vld [vmem:[%s2108 + $0x80] sm:$0xff]
        %v2126 = vld [vmem:[%s2108 + $0x88] sm:$0xff]
        %v2127 = vld [vmem:[%s2108 + $0x90] sm:$0xff]
        %v2128 = vld [vmem:[%s2108 + $0x98] sm:$0xff]
        %v2129 = vld [vmem:[%s2108 + $0xa0] sm:$0xff]
        %v2130 = vld [vmem:[%s2108 + $0xa8] sm:$0xff]
        %v2131 = vld [vmem:[%s2108 + $0xb0] sm:$0xff]
        %v2132 = vld [vmem:[%s2108 + $0xb8] sm:$0xff]
        %v2133 = vld [vmem:[%s2108 + $0xc0] sm:$0xff]
        %v2134 = vld [vmem:[%s2108 + $0xc8] sm:$0xff]
        %v2135 = vld [vmem:[%s2108 + $0xd0] sm:$0xff]
        %v2136 = vld [vmem:[%s2108 + $0xd8] sm:$0xff]
        %v2137 = vld [vmem:[%s2108 + $0xe0] sm:$0xff]
        %v2138 = vld [vmem:[%s2108 + $0xe8] sm:$0xff]
        %v2139 = vld [vmem:[%s2108 + $0xf0] sm:$0xff]
        %v2140 = vld [vmem:[%s2108 + $0xf8] sm:$0xff]
        %s2141 = scalar_lea.vmem %s1, 160
        %v2142 = vld [vmem:[%s2141] sm:$0xff]
        %v2143 = vld [vmem:[%s2141 + $0x8] sm:$0xff]
        %v2144 = vld [vmem:[%s2141 + $0x10] sm:$0xff]
        %v2145 = vld [vmem:[%s2141 + $0x18] sm:$0xff]
        %v2146 = vld [vmem:[%s2141 + $0x20] sm:$0xff]
        %v2147 = vld [vmem:[%s2141 + $0x28] sm:$0xff]
        %v2148 = vld [vmem:[%s2141 + $0x30] sm:$0xff]
        %v2149 = vld [vmem:[%s2141 + $0x38] sm:$0xff]
        %v2150 = vld [vmem:[%s2141 + $0x40] sm:$0xff]
        %v2151 = vld [vmem:[%s2141 + $0x48] sm:$0xff]
        %v2152 = vld [vmem:[%s2141 + $0x50] sm:$0xff]
        %v2153 = vld [vmem:[%s2141 + $0x58] sm:$0xff]
        %v2154 = vld [vmem:[%s2141 + $0x60] sm:$0xff]
        %v2155 = vld [vmem:[%s2141 + $0x68] sm:$0xff]
        %v2156 = vld [vmem:[%s2141 + $0x70] sm:$0xff]
        %v2157 = vld [vmem:[%s2141 + $0x78] sm:$0xff]
        %v2158 = vld [vmem:[%s2141 + $0x80] sm:$0xff]
        %v2159 = vld [vmem:[%s2141 + $0x88] sm:$0xff]
        %v2160 = vld [vmem:[%s2141 + $0x90] sm:$0xff]
        %v2161 = vld [vmem:[%s2141 + $0x98] sm:$0xff]
        %s2162 = scalar_lea.vmem %s2, 1
        %v2163 = vld [vmem:[%s2162] sm:$0x1]
        %v2165 = vlaneseq
        %v2166 = vshrl.u32 %v2165, 7
        %v2167 = vsub.s32 0, %v2166
        %v2168 = vrot.slane %v2163, %v2167
        %v2171 = vsel %vm764, %v2110, 0
        %v2174 = vsel %vm764, %v2112, 0
        %v2177 = vsel %vm764, %v2114, 0
        %v2180 = vsel %vm764, %v2116, 0
        %v2183 = vsel %vm764, %v2118, 0
        %v2186 = vsel %vm764, %v2120, 0
        %v2189 = vsel %vm764, %v2122, 0
        %v2192 = vsel %vm764, %v2124, 0
        %v2195 = vsel %vm764, %v2126, 0
        %v2198 = vsel %vm764, %v2128, 0
        %v2201 = vsel %vm764, %v2130, 0
        %v2204 = vsel %vm764, %v2132, 0
        %v2207 = vsel %vm764, %v2134, 0
        %v2210 = vsel %vm764, %v2136, 0
        %v2213 = vsel %vm764, %v2138, 0
        %v2216 = vsel %vm764, %v2140, 0
        %2218 = vmatprep.subr.mxu0 0.0
        %2219 = vmatpush1.msra.mxu0 %v2142
        %2220 = vmatprep.subr.mxu0 0.0
        %2221 = vmatpush1.msra.mxu0 %v2143
        %2222 = vmatprep.subr.mxu0 0.0
        %2223 = vmatpush1.msra.mxu0 %v2144
        %2224 = vmatprep.subr.mxu0 0.0
        %2225 = vmatpush1.msra.mxu0 %v2145
        %2226 = vmatprep.subr.mxu0 0.0
        %2227 = vmatpush1.msra.mxu0 %v2146
        %2228 = vmatprep.subr.mxu0 0.0
        %2229 = vmatpush1.msra.mxu0 %v2147
        %2230 = vmatprep.subr.mxu0 0.0
        %2231 = vmatpush1.msra.mxu0 %v2148
        %2232 = vmatprep.subr.mxu0 0.0
        %2233 = vmatpush1.msra.mxu0 %v2149
        %2234 = vmatprep.subr.mxu0 0.0
        %2235 = vmatpush1.msra.mxu0 %v2150
        %2236 = vmatprep.subr.mxu0 0.0
        %2237 = vmatpush1.msra.mxu0 %v2151
        %2238 = vmatprep.subr.mxu0 0.0
        %2239 = vmatpush1.msra.mxu0 %v2152
        %2240 = vmatprep.subr.mxu0 0.0
        %2241 = vmatpush1.msra.mxu0 %v2153
        %2242 = vmatprep.subr.mxu0 0.0
        %2243 = vmatpush1.msra.mxu0 %v2154
        %2244 = vmatprep.subr.mxu0 0.0
        %2245 = vmatpush1.msra.mxu0 %v2155
        %2246 = vmatprep.subr.mxu0 0.0
        %2247 = vmatpush1.msra.mxu0 %v2156
        %2248 = vmatprep.subr.mxu0 0.0
        %2249 = vmatpush1.msra.mxu0 %v2157
        %2250 = vmatprep.subr.mxu0 0.0
        %2251 = vmatpush1.msra.mxu0 %v2158
        %2252 = vmatprep.subr.mxu0 0.0
        %2253 = vmatpush1.msra.mxu0 %v2159
        %2254 = vmatprep.subr.mxu0 0.0
        %2255 = vmatpush1.msra.mxu0 %v2160
        %2256 = vmatprep.subr.mxu0 0.0
        %2257 = vmatpush1.msra.mxu0 %v2161
        %2258 = vmatprep.subr.mxu0 0.0
        %2259 = vmatpush1.msra.mxu0 0.0
        %2260 = vmatprep.subr.mxu0 0.0
        %2261 = vmatpush1.msra.mxu0 0.0
        %2262 = vmatprep.subr.mxu0 0.0
        %2263 = vmatpush1.msra.mxu0 0.0
        %2264 = vmatprep.subr.mxu0 0.0
        %2265 = vmatpush1.msra.mxu0 0.0
        %2266 = vmatprep.subr.mxu0 0.0
        %2267 = vmatpush1.msra.mxu0 0.0
        %2268 = vmatprep.subr.mxu0 0.0
        %2269 = vmatpush1.msra.mxu0 0.0
        %2270 = vmatprep.subr.mxu0 0.0
        %2271 = vmatpush1.msra.mxu0 0.0
        %2272 = vmatprep.subr.mxu0 0.0
        %2273 = vmatpush1.msra.mxu0 0.0
        %2274 = vmatprep.subr.mxu0 0.0
        %2275 = vmatpush1.msra.mxu0 0.0
        %2276 = vmatprep.subr.mxu0 0.0
        %2277 = vmatpush1.msra.mxu0 0.0
        %2278 = vmatprep.subr.mxu0 0.0
        %2279 = vmatpush1.msra.mxu0 0.0
        %2280 = vmatprep.subr.mxu0 0.0
        %2281 = vmatpush1.msra.mxu0 0.0
        %2282 = vmatprep.mubr.f32.mxu0 %v2171
        %2283 = vmatmul.mubr.f32.gmra.mrb[0].mxu0 %v2109
        %v2284 = vpop.f32.mrb[0].mxu0
        %v2285 = vadd.f32 %v2168, %v2284
        %v2286 = vpop.f32.mrb[0].mxu0
        %2287 = vmatprep.mubr.f32.mxu0 %v2174
        %2288 = vmatmul.mubr.f32.gmra.mrb[0].mxu0 %v2111
        %v2289 = vpop.f32.mrb[0].mxu0
        %v2290 = vadd.f32 %v2168, %v2289
        %v2291 = vpop.f32.mrb[0].mxu0
        %2292 = vmatprep.mubr.f32.mxu0 %v2177
        %2293 = vmatmul.mubr.f32.gmra.mrb[0].mxu0 %v2113
        %v2294 = vpop.f32.mrb[0].mxu0
        %v2295 = vadd.f32 %v2168, %v2294
        %v2296 = vpop.f32.mrb[0].mxu0
        %2297 = vmatprep.mubr.f32.mxu0 %v2180
        %2298 = vmatmul.mubr.f32.gmra.mrb[0].mxu0 %v2115
        %v2299 = vpop.f32.mrb[0].mxu0
        %v2300 = vadd.f32 %v2168, %v2299
        %v2301 = vpop.f32.mrb[0].mxu0
        %2302 = vmatprep.mubr.f32.mxu0 %v2183
        %2303 = vmatmul.mubr.f32.gmra.mrb[0].mxu0 %v2117
        %v2304 = vpop.f32.mrb[0].mxu0
        %v2305 = vadd.f32 %v2168, %v2304
        %v2306 = vpop.f32.mrb[0].mxu0
        %2307 = vmatprep.mubr.f32.mxu0 %v2186
        %2308 = vmatmul.mubr.f32.gmra.mrb[0].mxu0 %v2119
        %v2309 = vpop.f32.mrb[0].mxu0
        %v2310 = vadd.f32 %v2168, %v2309
        %v2311 = vpop.f32.mrb[0].mxu0
        %2312 = vmatprep.mubr.f32.mxu0 %v2189
        %2313 = vmatmul.mubr.f32.gmra.mrb[0].mxu0 %v2121
        %v2314 = vpop.f32.mrb[0].mxu0
        %v2315 = vadd.f32 %v2168, %v2314
        %v2316 = vpop.f32.mrb[0].mxu0
        %2317 = vmatprep.mubr.f32.mxu0 %v2192
        %2318 = vmatmul.mubr.f32.gmra.mrb[0].mxu0 %v2123
        %v2319 = vpop.f32.mrb[0].mxu0
        %v2320 = vadd.f32 %v2168, %v2319
        %v2321 = vpop.f32.mrb[0].mxu0
        %2322 = vmatprep.mubr.f32.mxu0 %v2195
        %2323 = vmatmul.mubr.f32.gmra.mrb[0].mxu0 %v2125
        %v2324 = vpop.f32.mrb[0].mxu0
        %v2325 = vadd.f32 %v2168, %v2324
        %v2326 = vpop.f32.mrb[0].mxu0
        %2327 = vmatprep.mubr.f32.mxu0 %v2198
        %2328 = vmatmul.mubr.f32.gmra.mrb[0].mxu0 %v2127
        %v2329 = vpop.f32.mrb[0].mxu0
        %v2330 = vadd.f32 %v2168, %v2329
        %v2331 = vpop.f32.mrb[0].mxu0
        %2332 = vmatprep.mubr.f32.mxu0 %v2201
        %2333 = vmatmul.mubr.f32.gmra.mrb[0].mxu0 %v2129
        %v2334 = vpop.f32.mrb[0].mxu0
        %v2335 = vadd.f32 %v2168, %v2334
        %v2336 = vpop.f32.mrb[0].mxu0
        %2337 = vmatprep.mubr.f32.mxu0 %v2204
        %2338 = vmatmul.mubr.f32.gmra.mrb[0].mxu0 %v2131
        %v2339 = vpop.f32.mrb[0].mxu0
        %v2340 = vadd.f32 %v2168, %v2339
        %v2341 = vpop.f32.mrb[0].mxu0
        %2342 = vmatprep.mubr.f32.mxu0 %v2207
        %2343 = vmatmul.mubr.f32.gmra.mrb[0].mxu0 %v2133
        %v2344 = vpop.f32.mrb[0].mxu0
        %v2345 = vadd.f32 %v2168, %v2344
        %v2346 = vpop.f32.mrb[0].mxu0
        %2347 = vmatprep.mubr.f32.mxu0 %v2210
        %2348 = vmatmul.mubr.f32.gmra.mrb[0].mxu0 %v2135
        %v2349 = vpop.f32.mrb[0].mxu0
        %v2350 = vadd.f32 %v2168, %v2349
        %v2351 = vpop.f32.mrb[0].mxu0
        %2352 = vmatprep.mubr.f32.mxu0 %v2213
        %2353 = vmatmul.mubr.f32.gmra.mrb[0].mxu0 %v2137
        %v2354 = vpop.f32.mrb[0].mxu0
        %v2355 = vadd.f32 %v2168, %v2354
        %v2356 = vpop.f32.mrb[0].mxu0
        %2357 = vmatprep.mubr.f32.mxu0 %v2216
        %2358 = vmatmul.mubr.f32.gmra.mrb[0].mxu0 %v2139
        %v2359 = vpop.f32.mrb[0].mxu0
        %v2360 = vadd.f32 %v2168, %v2359
        %v2361 = vpop.f32.mrb[0].mxu0
        %2362 = vdwg.mxu0
        %v2363 = vmax.f32 %v2285, 0.0
        %v2364 = vmax.f32 %v2290, 0.0
        %v2365 = vmax.f32 %v2295, 0.0
        %v2366 = vmax.f32 %v2300, 0.0
        %v2367 = vmax.f32 %v2305, 0.0
        %v2368 = vmax.f32 %v2310, 0.0
        %v2369 = vmax.f32 %v2315, 0.0
        %v2370 = vmax.f32 %v2320, 0.0
        %v2371 = vmax.f32 %v2325, 0.0
        %v2372 = vmax.f32 %v2330, 0.0
        %v2373 = vmax.f32 %v2335, 0.0
        %v2374 = vmax.f32 %v2340, 0.0
        %v2375 = vmax.f32 %v2345, 0.0
        %v2376 = vmax.f32 %v2350, 0.0
        %v2377 = vmax.f32 %v2355, 0.0
        %v2378 = vmax.f32 %v2360, 0.0
        %v2395 = vrot.slane %v2363, 6
        %v2396 = vrot.slane %v2364, 6
        %v2397 = vsel %vm990, %v2395, %v2396
        %v2398 = vrot.slane %v2365, 6
        %v2399 = vrot.slane %v2366, 6
        %v2400 = vsel %vm990, %v2398, %v2399
        %v2401 = vrot.slane %v2367, 6
        %v2402 = vrot.slane %v2368, 6
        %v2403 = vsel %vm990, %v2401, %v2402
        %v2404 = vrot.slane %v2369, 6
        %v2405 = vrot.slane %v2370, 6
        %v2406 = vsel %vm990, %v2404, %v2405
        %v2407 = vrot.slane %v2371, 6
        %v2408 = vrot.slane %v2372, 6
        %v2409 = vsel %vm990, %v2407, %v2408
        %v2410 = vrot.slane %v2373, 6
        %v2411 = vrot.slane %v2374, 6
        %v2412 = vsel %vm990, %v2410, %v2411
        %v2413 = vrot.slane %v2375, 6
        %v2414 = vrot.slane %v2376, 6
        %v2415 = vsel %vm990, %v2413, %v2414
        %v2416 = vrot.slane %v2377, 6
        %v2417 = vrot.slane %v2378, 6
        %v2418 = vsel %vm990, %v2416, %v2417
        %v2443 = vsel %vm990, 0.0, %v2395
        %v2444 = vsel %vm990, 0.0, %v2398
        %v2445 = vsel %vm990, 0.0, %v2401
        %v2446 = vsel %vm990, 0.0, %v2404
        %v2447 = vsel %vm990, 0.0, %v2407
        %v2448 = vsel %vm990, 0.0, %v2410
        %v2449 = vsel %vm990, 0.0, %v2413
        %v2450 = vsel %vm990, 0.0, %v2416
        %v2451 = vsel %vm990, %v2396, 0.0
        %v2452 = vsel %vm990, %v2399, 0.0
        %v2453 = vsel %vm990, %v2402, 0.0
        %v2454 = vsel %vm990, %v2405, 0.0
        %v2455 = vsel %vm990, %v2408, 0.0
        %v2456 = vsel %vm990, %v2411, 0.0
        %v2457 = vsel %vm990, %v2414, 0.0
        %v2458 = vsel %vm990, %v2417, 0.0
        %v2475 = vrot.slane %v2443, 1
        %v2476 = vrot.slane %v2397, 1
        %v2477 = vsel %vm1071, %v2475, %v2476
        %v2478 = vrot.slane %v2451, 1
        %v2479 = vsel %vm1071, %v2476, %v2478
        %v2480 = vrot.slane %v2444, 1
        %v2481 = vrot.slane %v2400, 1
        %v2482 = vsel %vm1071, %v2480, %v2481
        %v2483 = vrot.slane %v2452, 1
        %v2484 = vsel %vm1071, %v2481, %v2483
        %v2485 = vrot.slane %v2445, 1
        %v2486 = vrot.slane %v2403, 1
        %v2487 = vsel %vm1071, %v2485, %v2486
        %v2488 = vrot.slane %v2453, 1
        %v2489 = vsel %vm1071, %v2486, %v2488
        %v2490 = vrot.slane %v2446, 1
        %v2491 = vrot.slane %v2406, 1
        %v2492 = vsel %vm1071, %v2490, %v2491
        %v2493 = vrot.slane %v2454, 1
        %v2494 = vsel %vm1071, %v2491, %v2493
        %v2495 = vrot.slane %v2447, 1
        %v2496 = vrot.slane %v2409, 1
        %v2497 = vsel %vm1071, %v2495, %v2496
        %v2498 = vrot.slane %v2455, 1
        %v2499 = vsel %vm1071, %v2496, %v2498
        %v2500 = vrot.slane %v2448, 1
        %v2501 = vrot.slane %v2412, 1
        %v2502 = vsel %vm1071, %v2500, %v2501
        %v2503 = vrot.slane %v2456, 1
        %v2504 = vsel %vm1071, %v2501, %v2503
        %v2505 = vrot.slane %v2449, 1
        %v2506 = vrot.slane %v2415, 1
        %v2507 = vsel %vm1071, %v2505, %v2506
        %v2508 = vrot.slane %v2457, 1
        %v2509 = vsel %vm1071, %v2506, %v2508
        %v2510 = vrot.slane %v2450, 1
        %v2511 = vrot.slane %v2418, 1
        %v2512 = vsel %vm1071, %v2510, %v2511
        %v2513 = vrot.slane %v2458, 1
        %v2514 = vsel %vm1071, %v2511, %v2513
        %2515 = vrot.lane.b32.xlu0 %v2477, 64
        %v2516 = vpop.permute.xlu0 %2515
        %2517 = vrot.lane.b32.xlu0 %v2479, 64
        %v2518 = vpop.permute.xlu0 %2517
        %2519 = vrot.lane.b32.xlu0 %v2482, 64
        %v2520 = vpop.permute.xlu0 %2519
        %2521 = vrot.lane.b32.xlu0 %v2484, 64
        %v2522 = vpop.permute.xlu0 %2521
        %2523 = vrot.lane.b32.xlu0 %v2487, 64
        %v2524 = vpop.permute.xlu0 %2523
        %2525 = vrot.lane.b32.xlu0 %v2489, 64
        %v2526 = vpop.permute.xlu0 %2525
        %2527 = vrot.lane.b32.xlu0 %v2492, 64
        %v2528 = vpop.permute.xlu0 %2527
        %2529 = vrot.lane.b32.xlu0 %v2494, 64
        %v2530 = vpop.permute.xlu0 %2529
        %2531 = vrot.lane.b32.xlu0 %v2497, 64
        %v2532 = vpop.permute.xlu0 %2531
        %2533 = vrot.lane.b32.xlu0 %v2499, 64
        %v2534 = vpop.permute.xlu0 %2533
        %2535 = vrot.lane.b32.xlu0 %v2502, 64
        %v2536 = vpop.permute.xlu0 %2535
        %2537 = vrot.lane.b32.xlu0 %v2504, 64
        %v2538 = vpop.permute.xlu0 %2537
        %2539 = vrot.lane.b32.xlu0 %v2507, 64
        %v2540 = vpop.permute.xlu0 %2539
        %2541 = vrot.lane.b32.xlu0 %v2509, 64
        %v2542 = vpop.permute.xlu0 %2541
        %2543 = vrot.lane.b32.xlu0 %v2512, 64
        %v2544 = vpop.permute.xlu0 %2543
        %2545 = vrot.lane.b32.xlu0 %v2514, 64
        %v2546 = vpop.permute.xlu0 %2545
        %v2563 = vrot.slane %v2443, 2
        %v2564 = vrot.slane %v2397, 2
        %v2565 = vsel %vm1160, %v2563, %v2564
        %v2566 = vrot.slane %v2451, 2
        %v2567 = vsel %vm1160, %v2564, %v2566
        %v2568 = vrot.slane %v2444, 2
        %v2569 = vrot.slane %v2400, 2
        %v2570 = vsel %vm1160, %v2568, %v2569
        %v2571 = vrot.slane %v2452, 2
        %v2572 = vsel %vm1160, %v2569, %v2571
        %v2573 = vrot.slane %v2445, 2
        %v2574 = vrot.slane %v2403, 2
        %v2575 = vsel %vm1160, %v2573, %v2574
        %v2576 = vrot.slane %v2453, 2
        %v2577 = vsel %vm1160, %v2574, %v2576
        %v2578 = vrot.slane %v2446, 2
        %v2579 = vrot.slane %v2406, 2
        %v2580 = vsel %vm1160, %v2578, %v2579
        %v2581 = vrot.slane %v2454, 2
        %v2582 = vsel %vm1160, %v2579, %v2581
        %v2583 = vrot.slane %v2447, 2
        %v2584 = vrot.slane %v2409, 2
        %v2585 = vsel %vm1160, %v2583, %v2584
        %v2586 = vrot.slane %v2455, 2
        %v2587 = vsel %vm1160, %v2584, %v2586
        %v2588 = vrot.slane %v2448, 2
        %v2589 = vrot.slane %v2412, 2
        %v2590 = vsel %vm1160, %v2588, %v2589
        %v2591 = vrot.slane %v2456, 2
        %v2592 = vsel %vm1160, %v2589, %v2591
        %v2593 = vrot.slane %v2449, 2
        %v2594 = vrot.slane %v2415, 2
        %v2595 = vsel %vm1160, %v2593, %v2594
        %v2596 = vrot.slane %v2457, 2
        %v2597 = vsel %vm1160, %v2594, %v2596
        %v2598 = vrot.slane %v2450, 2
        %v2599 = vrot.slane %v2418, 2
        %v2600 = vsel %vm1160, %v2598, %v2599
        %v2601 = vrot.slane %v2458, 2
        %v2602 = vsel %vm1160, %v2599, %v2601
        %v2619 = vrot.slane %v2443, 3
        %v2620 = vrot.slane %v2397, 3
        %v2621 = vsel %vm1217, %v2619, %v2620
        %v2622 = vrot.slane %v2451, 3
        %v2623 = vsel %vm1217, %v2620, %v2622
        %v2624 = vrot.slane %v2444, 3
        %v2625 = vrot.slane %v2400, 3
        %v2626 = vsel %vm1217, %v2624, %v2625
        %v2627 = vrot.slane %v2452, 3
        %v2628 = vsel %vm1217, %v2625, %v2627
        %v2629 = vrot.slane %v2445, 3
        %v2630 = vrot.slane %v2403, 3
        %v2631 = vsel %vm1217, %v2629, %v2630
        %v2632 = vrot.slane %v2453, 3
        %v2633 = vsel %vm1217, %v2630, %v2632
        %v2634 = vrot.slane %v2446, 3
        %v2635 = vrot.slane %v2406, 3
        %v2636 = vsel %vm1217, %v2634, %v2635
        %v2637 = vrot.slane %v2454, 3
        %v2638 = vsel %vm1217, %v2635, %v2637
        %v2639 = vrot.slane %v2447, 3
        %v2640 = vrot.slane %v2409, 3
        %v2641 = vsel %vm1217, %v2639, %v2640
        %v2642 = vrot.slane %v2455, 3
        %v2643 = vsel %vm1217, %v2640, %v2642
        %v2644 = vrot.slane %v2448, 3
        %v2645 = vrot.slane %v2412, 3
        %v2646 = vsel %vm1217, %v2644, %v2645
        %v2647 = vrot.slane %v2456, 3
        %v2648 = vsel %vm1217, %v2645, %v2647
        %v2649 = vrot.slane %v2449, 3
        %v2650 = vrot.slane %v2415, 3
        %v2651 = vsel %vm1217, %v2649, %v2650
        %v2652 = vrot.slane %v2457, 3
        %v2653 = vsel %vm1217, %v2650, %v2652
        %v2654 = vrot.slane %v2450, 3
        %v2655 = vrot.slane %v2418, 3
        %v2656 = vsel %vm1217, %v2654, %v2655
        %v2657 = vrot.slane %v2458, 3
        %v2658 = vsel %vm1217, %v2655, %v2657
        %2659 = vrot.lane.b32.xlu0 %v2621, 64
        %v2660 = vpop.permute.xlu0 %2659
        %2661 = vrot.lane.b32.xlu0 %v2623, 64
        %v2662 = vpop.permute.xlu0 %2661
        %2663 = vrot.lane.b32.xlu0 %v2626, 64
        %v2664 = vpop.permute.xlu0 %2663
        %2665 = vrot.lane.b32.xlu0 %v2628, 64
        %v2666 = vpop.permute.xlu0 %2665
        %2667 = vrot.lane.b32.xlu0 %v2631, 64
        %v2668 = vpop.permute.xlu0 %2667
        %2669 = vrot.lane.b32.xlu0 %v2633, 64
        %v2670 = vpop.permute.xlu0 %2669
        %2671 = vrot.lane.b32.xlu0 %v2636, 64
        %v2672 = vpop.permute.xlu0 %2671
        %2673 = vrot.lane.b32.xlu0 %v2638, 64
        %v2674 = vpop.permute.xlu0 %2673
        %2675 = vrot.lane.b32.xlu0 %v2641, 64
        %v2676 = vpop.permute.xlu0 %2675
        %2677 = vrot.lane.b32.xlu0 %v2643, 64
        %v2678 = vpop.permute.xlu0 %2677
        %2679 = vrot.lane.b32.xlu0 %v2646, 64
        %v2680 = vpop.permute.xlu0 %2679
        %2681 = vrot.lane.b32.xlu0 %v2648, 64
        %v2682 = vpop.permute.xlu0 %2681
        %2683 = vrot.lane.b32.xlu0 %v2651, 64
        %v2684 = vpop.permute.xlu0 %2683
        %2685 = vrot.lane.b32.xlu0 %v2653, 64
        %v2686 = vpop.permute.xlu0 %2685
        %2687 = vrot.lane.b32.xlu0 %v2656, 64
        %v2688 = vpop.permute.xlu0 %2687
        %2689 = vrot.lane.b32.xlu0 %v2658, 64
        %v2690 = vpop.permute.xlu0 %2689
        %v2707 = vrot.slane %v2443, 4
        %v2708 = vrot.slane %v2397, 4
        %v2709 = vsel %vm1306, %v2707, %v2708
        %v2710 = vrot.slane %v2451, 4
        %v2711 = vsel %vm1306, %v2708, %v2710
        %v2712 = vrot.slane %v2444, 4
        %v2713 = vrot.slane %v2400, 4
        %v2714 = vsel %vm1306, %v2712, %v2713
        %v2715 = vrot.slane %v2452, 4
        %v2716 = vsel %vm1306, %v2713, %v2715
        %v2717 = vrot.slane %v2445, 4
        %v2718 = vrot.slane %v2403, 4
        %v2719 = vsel %vm1306, %v2717, %v2718
        %v2720 = vrot.slane %v2453, 4
        %v2721 = vsel %vm1306, %v2718, %v2720
        %v2722 = vrot.slane %v2446, 4
        %v2723 = vrot.slane %v2406, 4
        %v2724 = vsel %vm1306, %v2722, %v2723
        %v2725 = vrot.slane %v2454, 4
        %v2726 = vsel %vm1306, %v2723, %v2725
        %v2727 = vrot.slane %v2447, 4
        %v2728 = vrot.slane %v2409, 4
        %v2729 = vsel %vm1306, %v2727, %v2728
        %v2730 = vrot.slane %v2455, 4
        %v2731 = vsel %vm1306, %v2728, %v2730
        %v2732 = vrot.slane %v2448, 4
        %v2733 = vrot.slane %v2412, 4
        %v2734 = vsel %vm1306, %v2732, %v2733
        %v2735 = vrot.slane %v2456, 4
        %v2736 = vsel %vm1306, %v2733, %v2735
        %v2737 = vrot.slane %v2449, 4
        %v2738 = vrot.slane %v2415, 4
        %v2739 = vsel %vm1306, %v2737, %v2738
        %v2740 = vrot.slane %v2457, 4
        %v2741 = vsel %vm1306, %v2738, %v2740
        %v2742 = vrot.slane %v2450, 4
        %v2743 = vrot.slane %v2418, 4
        %v2744 = vsel %vm1306, %v2742, %v2743
        %v2745 = vrot.slane %v2458, 4
        %v2746 = vsel %vm1306, %v2743, %v2745
        %v2747 = vsel %vm1347, %v2443, %v2516
        %v2748 = vsel %vm1347, %v2397, %v2518
        %v2749 = vsel %vm1347, %v2444, %v2520
        %v2750 = vsel %vm1347, %v2400, %v2522
        %v2751 = vsel %vm1347, %v2445, %v2524
        %v2752 = vsel %vm1347, %v2403, %v2526
        %v2753 = vsel %vm1347, %v2446, %v2528
        %v2754 = vsel %vm1347, %v2406, %v2530
        %v2755 = vsel %vm1347, %v2447, %v2532
        %v2756 = vsel %vm1347, %v2409, %v2534
        %v2757 = vsel %vm1347, %v2448, %v2536
        %v2758 = vsel %vm1347, %v2412, %v2538
        %v2759 = vsel %vm1347, %v2449, %v2540
        %v2760 = vsel %vm1347, %v2415, %v2542
        %v2761 = vsel %vm1347, %v2450, %v2544
        %v2762 = vsel %vm1347, %v2418, %v2546
        %v2763 = vsel %vm1347, %v2565, %v2660
        %v2764 = vsel %vm1347, %v2567, %v2662
        %v2765 = vsel %vm1347, %v2570, %v2664
        %v2766 = vsel %vm1347, %v2572, %v2666
        %v2767 = vsel %vm1347, %v2575, %v2668
        %v2768 = vsel %vm1347, %v2577, %v2670
        %v2769 = vsel %vm1347, %v2580, %v2672
        %v2770 = vsel %vm1347, %v2582, %v2674
        %v2771 = vsel %vm1347, %v2585, %v2676
        %v2772 = vsel %vm1347, %v2587, %v2678
        %v2773 = vsel %vm1347, %v2590, %v2680
        %v2774 = vsel %vm1347, %v2592, %v2682
        %v2775 = vsel %vm1347, %v2595, %v2684
        %v2776 = vsel %vm1347, %v2597, %v2686
        %v2777 = vsel %vm1347, %v2600, %v2688
        %v2778 = vsel %vm1347, %v2602, %v2690
        %s2779 = scalar_lea.vmem %s3, 320
        %v2780 = vld [vmem:[%s2779] sm:$0xff]
        %v2781 = vld [vmem:[%s2779 + $0x8] sm:$0xff]
        %v2782 = vld [vmem:[%s2779 + $0x10] sm:$0xff]
        %v2783 = vld [vmem:[%s2779 + $0x18] sm:$0xff]
        %v2784 = vld [vmem:[%s2779 + $0x20] sm:$0xff]
        %v2785 = vld [vmem:[%s2779 + $0x28] sm:$0xff]
        %v2786 = vld [vmem:[%s2779 + $0x30] sm:$0xff]
        %v2787 = vld [vmem:[%s2779 + $0x38] sm:$0xff]
        %v2788 = vld [vmem:[%s2779 + $0x40] sm:$0xff]
        %v2789 = vld [vmem:[%s2779 + $0x48] sm:$0xff]
        %v2790 = vld [vmem:[%s2779 + $0x50] sm:$0xff]
        %v2791 = vld [vmem:[%s2779 + $0x58] sm:$0xff]
        %v2792 = vld [vmem:[%s2779 + $0x60] sm:$0xff]
        %v2793 = vld [vmem:[%s2779 + $0x68] sm:$0xff]
        %v2794 = vld [vmem:[%s2779 + $0x70] sm:$0xff]
        %v2795 = vld [vmem:[%s2779 + $0x78] sm:$0xff]
        %v2796 = vld [vmem:[%s2779 + $0x80] sm:$0xff]
        %v2797 = vld [vmem:[%s2779 + $0x88] sm:$0xff]
        %v2798 = vld [vmem:[%s2779 + $0x90] sm:$0xff]
        %v2799 = vld [vmem:[%s2779 + $0x98] sm:$0xff]
        %v2800 = vld [vmem:[%s2779 + $0xa0] sm:$0xff]
        %v2801 = vld [vmem:[%s2779 + $0xa8] sm:$0xff]
        %v2802 = vld [vmem:[%s2779 + $0xb0] sm:$0xff]
        %v2803 = vld [vmem:[%s2779 + $0xb8] sm:$0xff]
        %v2804 = vld [vmem:[%s2779 + $0xc0] sm:$0xff]
        %v2805 = vld [vmem:[%s2779 + $0xc8] sm:$0xff]
        %v2806 = vld [vmem:[%s2779 + $0xd0] sm:$0xff]
        %v2807 = vld [vmem:[%s2779 + $0xd8] sm:$0xff]
        %v2808 = vld [vmem:[%s2779 + $0xe0] sm:$0xff]
        %v2809 = vld [vmem:[%s2779 + $0xe8] sm:$0xff]
        %v2810 = vld [vmem:[%s2779 + $0xf0] sm:$0xff]
        %v2811 = vld [vmem:[%s2779 + $0xf8] sm:$0xff]
        %v2812 = vld [vmem:[%s2779 + $0x100] sm:$0xff]
        %v2813 = vld [vmem:[%s2779 + $0x108] sm:$0xff]
        %v2814 = vld [vmem:[%s2779 + $0x110] sm:$0xff]
        %v2815 = vld [vmem:[%s2779 + $0x118] sm:$0xff]
        %v2816 = vld [vmem:[%s2779 + $0x120] sm:$0xff]
        %v2817 = vld [vmem:[%s2779 + $0x128] sm:$0xff]
        %v2818 = vld [vmem:[%s2779 + $0x130] sm:$0xff]
        %v2819 = vld [vmem:[%s2779 + $0x138] sm:$0xff]
        %s2820 = scalar_lea.vmem %s4, 1
        %v2821 = vld [vmem:[%s2820] sm:$0x1]
        %v2823 = vlaneseq
        %v2824 = vshrl.u32 %v2823, 7
        %v2825 = vsub.s32 0, %v2824
        %v2826 = vrot.slane %v2821, %v2825
        %v2828 = vsel %vm1347, %v2709, 0
        %v2830 = vsel %vm1347, %v2711, 0
        %v2832 = vsel %vm1347, %v2714, 0
        %v2834 = vsel %vm1347, %v2716, 0
        %v2836 = vsel %vm1347, %v2719, 0
        %v2838 = vsel %vm1347, %v2721, 0
        %v2840 = vsel %vm1347, %v2724, 0
        %v2842 = vsel %vm1347, %v2726, 0
        %v2844 = vsel %vm1347, %v2729, 0
        %v2846 = vsel %vm1347, %v2731, 0
        %v2848 = vsel %vm1347, %v2734, 0
        %v2850 = vsel %vm1347, %v2736, 0
        %v2852 = vsel %vm1347, %v2739, 0
        %v2854 = vsel %vm1347, %v2741, 0
        %v2856 = vsel %vm1347, %v2744, 0
        %v2858 = vsel %vm1347, %v2746, 0
        %2860 = vmatprep.subr.mxu0 0.0
        %2861 = vmatpush1.msra.mxu0 %v2780
        %2862 = vmatprep.subr.mxu0 0.0
        %2863 = vmatpush1.msra.mxu0 %v2781
        %2864 = vmatprep.subr.mxu0 0.0
        %2865 = vmatpush1.msra.mxu0 %v2782
        %2866 = vmatprep.subr.mxu0 0.0
        %2867 = vmatpush1.msra.mxu0 %v2783
        %2868 = vmatprep.subr.mxu0 0.0
        %2869 = vmatpush1.msra.mxu0 %v2784
        %2870 = vmatprep.subr.mxu0 0.0
        %2871 = vmatpush1.msra.mxu0 %v2785
        %2872 = vmatprep.subr.mxu0 0.0
        %2873 = vmatpush1.msra.mxu0 %v2786
        %2874 = vmatprep.subr.mxu0 0.0
        %2875 = vmatpush1.msra.mxu0 %v2787
        %2876 = vmatprep.subr.mxu0 0.0
        %2877 = vmatpush1.msra.mxu0 %v2788
        %2878 = vmatprep.subr.mxu0 0.0
        %2879 = vmatpush1.msra.mxu0 %v2789
        %2880 = vmatprep.subr.mxu0 0.0
        %2881 = vmatpush1.msra.mxu0 %v2790
        %2882 = vmatprep.subr.mxu0 0.0
        %2883 = vmatpush1.msra.mxu0 %v2791
        %2884 = vmatprep.subr.mxu0 0.0
        %2885 = vmatpush1.msra.mxu0 %v2792
        %2886 = vmatprep.subr.mxu0 0.0
        %2887 = vmatpush1.msra.mxu0 %v2793
        %2888 = vmatprep.subr.mxu0 0.0
        %2889 = vmatpush1.msra.mxu0 %v2794
        %2890 = vmatprep.subr.mxu0 0.0
        %2891 = vmatpush1.msra.mxu0 %v2795
        %2892 = vmatprep.subr.mxu0 0.0
        %2893 = vmatpush1.msra.mxu0 %v2796
        %2894 = vmatprep.subr.mxu0 0.0
        %2895 = vmatpush1.msra.mxu0 %v2797
        %2896 = vmatprep.subr.mxu0 0.0
        %2897 = vmatpush1.msra.mxu0 %v2798
        %2898 = vmatprep.subr.mxu0 0.0
        %2899 = vmatpush1.msra.mxu0 %v2799
        %2900 = vmatprep.subr.mxu0 0.0
        %2901 = vmatpush1.msra.mxu0 %v2800
        %2902 = vmatprep.subr.mxu0 0.0
        %2903 = vmatpush1.msra.mxu0 %v2801
        %2904 = vmatprep.subr.mxu0 0.0
        %2905 = vmatpush1.msra.mxu0 %v2802
        %2906 = vmatprep.subr.mxu0 0.0
        %2907 = vmatpush1.msra.mxu0 %v2803
        %2908 = vmatprep.subr.mxu0 0.0
        %2909 = vmatpush1.msra.mxu0 %v2804
        %2910 = vmatprep.subr.mxu0 0.0
        %2911 = vmatpush1.msra.mxu0 %v2805
        %2912 = vmatprep.subr.mxu0 0.0
        %2913 = vmatpush1.msra.mxu0 %v2806
        %2914 = vmatprep.subr.mxu0 0.0
        %2915 = vmatpush1.msra.mxu0 %v2807
        %2916 = vmatprep.subr.mxu0 0.0
        %2917 = vmatpush1.msra.mxu0 %v2808
        %2918 = vmatprep.subr.mxu0 0.0
        %2919 = vmatpush1.msra.mxu0 %v2809
        %2920 = vmatprep.subr.mxu0 0.0
        %2921 = vmatpush1.msra.mxu0 %v2810
        %2922 = vmatprep.subr.mxu0 0.0
        %2923 = vmatpush1.msra.mxu0 %v2811
        %2924 = vmatprep.mubr.f32.mxu0 %v2763
        %2925 = vmatmul.mubr.f32.gmra.mrb[0].mxu0 %v2747
        %v2926 = vpop.f32.mrb[0].mxu0
        %v2927 = vadd.f32 %v2826, %v2926
        %v2928 = vpop.f32.mrb[0].mxu0
        %2929 = vmatprep.mubr.f32.mxu0 %v2764
        %2930 = vmatmul.mubr.f32.gmra.mrb[0].mxu0 %v2748
        %v2931 = vpop.f32.mrb[0].mxu0
        %v2932 = vadd.f32 %v2826, %v2931
        %v2933 = vpop.f32.mrb[0].mxu0
        %2934 = vmatprep.mubr.f32.mxu0 %v2765
        %2935 = vmatmul.mubr.f32.gmra.mrb[0].mxu0 %v2749
        %v2936 = vpop.f32.mrb[0].mxu0
        %v2937 = vadd.f32 %v2826, %v2936
        %v2938 = vpop.f32.mrb[0].mxu0
        %2939 = vmatprep.mubr.f32.mxu0 %v2766
        %2940 = vmatmul.mubr.f32.gmra.mrb[0].mxu0 %v2750
        %v2941 = vpop.f32.mrb[0].mxu0
        %v2942 = vadd.f32 %v2826, %v2941
        %v2943 = vpop.f32.mrb[0].mxu0
        %2944 = vmatprep.mubr.f32.mxu0 %v2767
        %2945 = vmatmul.mubr.f32.gmra.mrb[0].mxu0 %v2751
        %v2946 = vpop.f32.mrb[0].mxu0
        %v2947 = vadd.f32 %v2826, %v2946
        %v2948 = vpop.f32.mrb[0].mxu0
        %2949 = vmatprep.mubr.f32.mxu0 %v2768
        %2950 = vmatmul.mubr.f32.gmra.mrb[0].mxu0 %v2752
        %v2951 = vpop.f32.mrb[0].mxu0
        %v2952 = vadd.f32 %v2826, %v2951
        %v2953 = vpop.f32.mrb[0].mxu0
        %2954 = vmatprep.mubr.f32.mxu0 %v2769
        %2955 = vmatmul.mubr.f32.gmra.mrb[0].mxu0 %v2753
        %v2956 = vpop.f32.mrb[0].mxu0
        %v2957 = vadd.f32 %v2826, %v2956
        %v2958 = vpop.f32.mrb[0].mxu0
        %2959 = vmatprep.mubr.f32.mxu0 %v2770
        %2960 = vmatmul.mubr.f32.gmra.mrb[0].mxu0 %v2754
        %v2961 = vpop.f32.mrb[0].mxu0
        %v2962 = vadd.f32 %v2826, %v2961
        %v2963 = vpop.f32.mrb[0].mxu0
        %2964 = vmatprep.mubr.f32.mxu0 %v2771
        %2965 = vmatmul.mubr.f32.gmra.mrb[0].mxu0 %v2755
        %v2966 = vpop.f32.mrb[0].mxu0
        %v2967 = vadd.f32 %v2826, %v2966
        %v2968 = vpop.f32.mrb[0].mxu0
        %2969 = vmatprep.mubr.f32.mxu0 %v2772
        %2970 = vmatmul.mubr.f32.gmra.mrb[0].mxu0 %v2756
        %v2971 = vpop.f32.mrb[0].mxu0
        %v2972 = vadd.f32 %v2826, %v2971
        %v2973 = vpop.f32.mrb[0].mxu0
        %2974 = vmatprep.mubr.f32.mxu0 %v2773
        %2975 = vmatmul.mubr.f32.gmra.mrb[0].mxu0 %v2757
        %v2976 = vpop.f32.mrb[0].mxu0
        %v2977 = vadd.f32 %v2826, %v2976
        %v2978 = vpop.f32.mrb[0].mxu0
        %2979 = vmatprep.mubr.f32.mxu0 %v2774
        %2980 = vmatmul.mubr.f32.gmra.mrb[0].mxu0 %v2758
        %v2981 = vpop.f32.mrb[0].mxu0
        %v2982 = vadd.f32 %v2826, %v2981
        %v2983 = vpop.f32.mrb[0].mxu0
        %2984 = vmatprep.mubr.f32.mxu0 %v2775
        %2985 = vmatmul.mubr.f32.gmra.mrb[0].mxu0 %v2759
        %v2986 = vpop.f32.mrb[0].mxu0
        %v2987 = vadd.f32 %v2826, %v2986
        %v2988 = vpop.f32.mrb[0].mxu0
        %2989 = vmatprep.mubr.f32.mxu0 %v2776
        %2990 = vmatmul.mubr.f32.gmra.mrb[0].mxu0 %v2760
        %v2991 = vpop.f32.mrb[0].mxu0
        %v2992 = vadd.f32 %v2826, %v2991
        %v2993 = vpop.f32.mrb[0].mxu0
        %2994 = vmatprep.mubr.f32.mxu0 %v2777
        %2995 = vmatmul.mubr.f32.gmra.mrb[0].mxu0 %v2761
        %v2996 = vpop.f32.mrb[0].mxu0
        %v2997 = vadd.f32 %v2826, %v2996
        %v2998 = vpop.f32.mrb[0].mxu0
        %2999 = vmatprep.mubr.f32.mxu0 %v2778
        %3000 = vmatmul.mubr.f32.gmra.mrb[0].mxu0 %v2762
        %v3001 = vpop.f32.mrb[0].mxu0
        %v3002 = vadd.f32 %v2826, %v3001
        %v3003 = vpop.f32.mrb[0].mxu0
        %3004 = vdwg.mxu0
        %3005 = vmatprep.subr.mxu0 0.0
        %3006 = vmatpush1.msra.mxu0 %v2812
        %3007 = vmatprep.subr.mxu0 0.0
        %3008 = vmatpush1.msra.mxu0 %v2813
        %3009 = vmatprep.subr.mxu0 0.0
        %3010 = vmatpush1.msra.mxu0 %v2814
        %3011 = vmatprep.subr.mxu0 0.0
        %3012 = vmatpush1.msra.mxu0 %v2815
        %3013 = vmatprep.subr.mxu0 0.0
        %3014 = vmatpush1.msra.mxu0 %v2816
        %3015 = vmatprep.subr.mxu0 0.0
        %3016 = vmatpush1.msra.mxu0 %v2817
        %3017 = vmatprep.subr.mxu0 0.0
        %3018 = vmatpush1.msra.mxu0 %v2818
        %3019 = vmatprep.subr.mxu0 0.0
        %3020 = vmatpush1.msra.mxu0 %v2819
        %3021 = vmatprep.subr.mxu0 0.0
        %3022 = vmatpush1.msra.mxu0 0.0
        %3023 = vmatprep.subr.mxu0 0.0
        %3024 = vmatpush1.msra.mxu0 0.0
        %3025 = vmatprep.subr.mxu0 0.0
        %3026 = vmatpush1.msra.mxu0 0.0
        %3027 = vmatprep.subr.mxu0 0.0
        %3028 = vmatpush1.msra.mxu0 0.0
        %3029 = vmatprep.subr.mxu0 0.0
        %3030 = vmatpush1.msra.mxu0 0.0
        %3031 = vmatprep.subr.mxu0 0.0
        %3032 = vmatpush1.msra.mxu0 0.0
        %3033 = vmatprep.subr.mxu0 0.0
        %3034 = vmatpush1.msra.mxu0 0.0
        %3035 = vmatprep.subr.mxu0 0.0
        %3036 = vmatpush1.msra.mxu0 0.0
        %3037 = vmatprep.subr.mxu0 0.0
        %3038 = vmatpush1.msra.mxu0 0.0
        %3039 = vmatprep.subr.mxu0 0.0
        %3040 = vmatpush1.msra.mxu0 0.0
        %3041 = vmatprep.subr.mxu0 0.0
        %3042 = vmatpush1.msra.mxu0 0.0
        %3043 = vmatprep.subr.mxu0 0.0
        %3044 = vmatpush1.msra.mxu0 0.0
        %3045 = vmatprep.subr.mxu0 0.0
        %3046 = vmatpush1.msra.mxu0 0.0
        %3047 = vmatprep.subr.mxu0 0.0
        %3048 = vmatpush1.msra.mxu0 0.0
        %3049 = vmatprep.subr.mxu0 0.0
        %3050 = vmatpush1.msra.mxu0 0.0
        %3051 = vmatprep.subr.mxu0 0.0
        %3052 = vmatpush1.msra.mxu0 0.0
        %3053 = vmatprep.subr.mxu0 0.0
        %3054 = vmatpush1.msra.mxu0 0.0
        %3055 = vmatprep.subr.mxu0 0.0
        %3056 = vmatpush1.msra.mxu0 0.0
        %3057 = vmatprep.subr.mxu0 0.0
        %3058 = vmatpush1.msra.mxu0 0.0
        %3059 = vmatprep.subr.mxu0 0.0
        %3060 = vmatpush1.msra.mxu0 0.0
        %3061 = vmatprep.subr.mxu0 0.0
        %3062 = vmatpush1.msra.mxu0 0.0
        %3063 = vmatprep.subr.mxu0 0.0
        %3064 = vmatpush1.msra.mxu0 0.0
        %3065 = vmatprep.subr.mxu0 0.0
        %3066 = vmatpush1.msra.mxu0 0.0
        %3067 = vmatprep.subr.mxu0 0.0
        %3068 = vmatpush1.msra.mxu0 0.0
        %3069 = vmatprep.mubr.f32.mxu0 0.0
        %3070 = vmatmul.mubr.f32.gmra.mrb[0].mxu0 %v2828
        %v3071 = vpop.f32.mrb[0].mxu0
        %v3072 = vadd.f32 %v2927, %v3071
        %v3073 = vpop.f32.mrb[0].mxu0
        %3074 = vmatprep.mubr.f32.mxu0 0.0
        %3075 = vmatmul.mubr.f32.gmra.mrb[0].mxu0 %v2830
        %v3076 = vpop.f32.mrb[0].mxu0
        %v3077 = vadd.f32 %v2932, %v3076
        %v3078 = vpop.f32.mrb[0].mxu0
        %3079 = vmatprep.mubr.f32.mxu0 0.0
        %3080 = vmatmul.mubr.f32.gmra.mrb[0].mxu0 %v2832
        %v3081 = vpop.f32.mrb[0].mxu0
        %v3082 = vadd.f32 %v2937, %v3081
        %v3083 = vpop.f32.mrb[0].mxu0
        %3084 = vmatprep.mubr.f32.mxu0 0.0
        %3085 = vmatmul.mubr.f32.gmra.mrb[0].mxu0 %v2834
        %v3086 = vpop.f32.mrb[0].mxu0
        %v3087 = vadd.f32 %v2942, %v3086
        %v3088 = vpop.f32.mrb[0].mxu0
        %3089 = vmatprep.mubr.f32.mxu0 0.0
        %3090 = vmatmul.mubr.f32.gmra.mrb[0].mxu0 %v2836
        %v3091 = vpop.f32.mrb[0].mxu0
        %v3092 = vadd.f32 %v2947, %v3091
        %v3093 = vpop.f32.mrb[0].mxu0
        %3094 = vmatprep.mubr.f32.mxu0 0.0
        %3095 = vmatmul.mubr.f32.gmra.mrb[0].mxu0 %v2838
        %v3096 = vpop.f32.mrb[0].mxu0
        %v3097 = vadd.f32 %v2952, %v3096
        %v3098 = vpop.f32.mrb[0].mxu0
        %3099 = vmatprep.mubr.f32.mxu0 0.0
        %3100 = vmatmul.mubr.f32.gmra.mrb[0].mxu0 %v2840
        %v3101 = vpop.f32.mrb[0].mxu0
        %v3102 = vadd.f32 %v2957, %v3101
        %v3103 = vpop.f32.mrb[0].mxu0
        %3104 = vmatprep.mubr.f32.mxu0 0.0
        %3105 = vmatmul.mubr.f32.gmra.mrb[0].mxu0 %v2842
        %v3106 = vpop.f32.mrb[0].mxu0
        %v3107 = vadd.f32 %v2962, %v3106
        %v3108 = vpop.f32.mrb[0].mxu0
        %3109 = vmatprep.mubr.f32.mxu0 0.0
        %3110 = vmatmul.mubr.f32.gmra.mrb[0].mxu0 %v2844
        %v3111 = vpop.f32.mrb[0].mxu0
        %v3112 = vadd.f32 %v2967, %v3111
        %v3113 = vpop.f32.mrb[0].mxu0
        %3114 = vmatprep.mubr.f32.mxu0 0.0
        %3115 = vmatmul.mubr.f32.gmra.mrb[0].mxu0 %v2846
        %v3116 = vpop.f32.mrb[0].mxu0
        %v3117 = vadd.f32 %v2972, %v3116
        %v3118 = vpop.f32.mrb[0].mxu0
        %3119 = vmatprep.mubr.f32.mxu0 0.0
        %3120 = vmatmul.mubr.f32.gmra.mrb[0].mxu0 %v2848
        %v3121 = vpop.f32.mrb[0].mxu0
        %v3122 = vadd.f32 %v2977, %v3121
        %v3123 = vpop.f32.mrb[0].mxu0
        %3124 = vmatprep.mubr.f32.mxu0 0.0
        %3125 = vmatmul.mubr.f32.gmra.mrb[0].mxu0 %v2850
        %v3126 = vpop.f32.mrb[0].mxu0
        %v3127 = vadd.f32 %v2982, %v3126
        %v3128 = vpop.f32.mrb[0].mxu0
        %3129 = vmatprep.mubr.f32.mxu0 0.0
        %3130 = vmatmul.mubr.f32.gmra.mrb[0].mxu0 %v2852
        %v3131 = vpop.f32.mrb[0].mxu0
        %v3132 = vadd.f32 %v2987, %v3131
        %v3133 = vpop.f32.mrb[0].mxu0
        %3134 = vmatprep.mubr.f32.mxu0 0.0
        %3135 = vmatmul.mubr.f32.gmra.mrb[0].mxu0 %v2854
        %v3136 = vpop.f32.mrb[0].mxu0
        %v3137 = vadd.f32 %v2992, %v3136
        %v3138 = vpop.f32.mrb[0].mxu0
        %3139 = vmatprep.mubr.f32.mxu0 0.0
        %3140 = vmatmul.mubr.f32.gmra.mrb[0].mxu0 %v2856
        %v3141 = vpop.f32.mrb[0].mxu0
        %v3142 = vadd.f32 %v2997, %v3141
        %v3143 = vpop.f32.mrb[0].mxu0
        %3144 = vmatprep.mubr.f32.mxu0 0.0
        %3145 = vmatmul.mubr.f32.gmra.mrb[0].mxu0 %v2858
        %v3146 = vpop.f32.mrb[0].mxu0
        %v3147 = vadd.f32 %v3002, %v3146
        %v3148 = vpop.f32.mrb[0].mxu0
        %3149 = vdwg.mxu0
        %v3150 = vmax.f32 %v3072, 0.0
        %v3151 = vmax.f32 %v3077, 0.0
        %v3152 = vmax.f32 %v3082, 0.0
        %v3153 = vmax.f32 %v3087, 0.0
        %v3154 = vmax.f32 %v3092, 0.0
        %v3155 = vmax.f32 %v3097, 0.0
        %v3156 = vmax.f32 %v3102, 0.0
        %v3157 = vmax.f32 %v3107, 0.0
        %v3158 = vmax.f32 %v3112, 0.0
        %v3159 = vmax.f32 %v3117, 0.0
        %v3160 = vmax.f32 %v3122, 0.0
        %v3161 = vmax.f32 %v3127, 0.0
        %v3162 = vmax.f32 %v3132, 0.0
        %v3163 = vmax.f32 %v3137, 0.0
        %v3164 = vmax.f32 %v3142, 0.0
        %v3165 = vmax.f32 %v3147, 0.0
        %s3166 = scalar_lea.vmem %s5, 1
        %v3167 = vld [vmem:[%s3166] sm:$0x1]
        %v3169 = vlaneseq
        %v3170 = vshrl.u32 %v3169, 7
        %v3171 = vsub.s32 0, %v3170
        %v3172 = vrot.slane %v3167, %v3171
        %v3174 = vmul.f32 %v3150, %v3172
        %v3175 = vmul.f32 %v3151, %v3172
        %v3176 = vmul.f32 %v3152, %v3172
        %v3177 = vmul.f32 %v3153, %v3172
        %v3178 = vmul.f32 %v3154, %v3172
        %v3179 = vmul.f32 %v3155, %v3172
        %v3180 = vmul.f32 %v3156, %v3172
        %v3181 = vmul.f32 %v3157, %v3172
        %v3182 = vmul.f32 %v3158, %v3172
        %v3183 = vmul.f32 %v3159, %v3172
        %v3184 = vmul.f32 %v3160, %v3172
        %v3185 = vmul.f32 %v3161, %v3172
        %v3186 = vmul.f32 %v3162, %v3172
        %v3187 = vmul.f32 %v3163, %v3172
        %v3188 = vmul.f32 %v3164, %v3172
        %v3189 = vmul.f32 %v3165, %v3172
        %v3190 = vsel %vm1347, %v3174, 0.0
        %3191 = vadd.xlane.f32.xlu0 %v3190
        %v3192 = vpop.xlane.xlu0 %3191
        %v3193 = vsel %vm1347, %v3175, 0.0
        %3194 = vadd.xlane.f32.xlu0 %v3193
        %v3195 = vpop.xlane.xlu0 %3194
        %v3196 = vsel %vm1347, %v3176, 0.0
        %3197 = vadd.xlane.f32.xlu0 %v3196
        %v3198 = vpop.xlane.xlu0 %3197
        %v3199 = vsel %vm1347, %v3177, 0.0
        %3200 = vadd.xlane.f32.xlu0 %v3199
        %v3201 = vpop.xlane.xlu0 %3200
        %v3202 = vsel %vm1347, %v3178, 0.0
        %3203 = vadd.xlane.f32.xlu0 %v3202
        %v3204 = vpop.xlane.xlu0 %3203
        %v3205 = vsel %vm1347, %v3179, 0.0
        %3206 = vadd.xlane.f32.xlu0 %v3205
        %v3207 = vpop.xlane.xlu0 %3206
        %v3208 = vsel %vm1347, %v3180, 0.0
        %3209 = vadd.xlane.f32.xlu0 %v3208
        %v3210 = vpop.xlane.xlu0 %3209
        %v3211 = vsel %vm1347, %v3181, 0.0
        %3212 = vadd.xlane.f32.xlu0 %v3211
        %v3213 = vpop.xlane.xlu0 %3212
        %v3214 = vsel %vm1347, %v3182, 0.0
        %3215 = vadd.xlane.f32.xlu0 %v3214
        %v3216 = vpop.xlane.xlu0 %3215
        %v3217 = vsel %vm1347, %v3183, 0.0
        %3218 = vadd.xlane.f32.xlu0 %v3217
        %v3219 = vpop.xlane.xlu0 %3218
        %v3220 = vsel %vm1347, %v3184, 0.0
        %3221 = vadd.xlane.f32.xlu0 %v3220
        %v3222 = vpop.xlane.xlu0 %3221
        %v3223 = vsel %vm1347, %v3185, 0.0
        %3224 = vadd.xlane.f32.xlu0 %v3223
        %v3225 = vpop.xlane.xlu0 %3224
        %v3226 = vsel %vm1347, %v3186, 0.0
        %3227 = vadd.xlane.f32.xlu0 %v3226
        %v3228 = vpop.xlane.xlu0 %3227
        %v3229 = vsel %vm1347, %v3187, 0.0
        %3230 = vadd.xlane.f32.xlu0 %v3229
        %v3231 = vpop.xlane.xlu0 %3230
        %v3232 = vsel %vm1347, %v3188, 0.0
        %3233 = vadd.xlane.f32.xlu0 %v3232
        %v3234 = vpop.xlane.xlu0 %3233
        %v3235 = vsel %vm1347, %v3189, 0.0
        %3236 = vadd.xlane.f32.xlu0 %v3235
        %v3237 = vpop.xlane.xlu0 %3236
        %v3238 = vmax.f32 %v3192, %v3195
        %v3239 = vrot.slane %v3238, 4
        %v3240 = vmax.f32 %v3238, %v3239
        %v3241 = vrot.slane %v3240, 2
        %v3242 = vmax.f32 %v3240, %v3241
        %v3243 = vrot.slane %v3242, 1
        %v3244 = vmax.f32 %v3242, %v3243
        %v3245 = vmax.f32 %v3198, %v3201
        %v3246 = vrot.slane %v3245, 4
        %v3247 = vmax.f32 %v3245, %v3246
        %v3248 = vrot.slane %v3247, 2
        %v3249 = vmax.f32 %v3247, %v3248
        %v3250 = vrot.slane %v3249, 1
        %v3251 = vmax.f32 %v3249, %v3250
        %v3252 = vmax.f32 %v3204, %v3207
        %v3253 = vrot.slane %v3252, 4
        %v3254 = vmax.f32 %v3252, %v3253
        %v3255 = vrot.slane %v3254, 2
        %v3256 = vmax.f32 %v3254, %v3255
        %v3257 = vrot.slane %v3256, 1
        %v3258 = vmax.f32 %v3256, %v3257
        %v3259 = vmax.f32 %v3210, %v3213
        %v3260 = vrot.slane %v3259, 4
        %v3261 = vmax.f32 %v3259, %v3260
        %v3262 = vrot.slane %v3261, 2
        %v3263 = vmax.f32 %v3261, %v3262
        %v3264 = vrot.slane %v3263, 1
        %v3265 = vmax.f32 %v3263, %v3264
        %v3266 = vmax.f32 %v3216, %v3219
        %v3267 = vrot.slane %v3266, 4
        %v3268 = vmax.f32 %v3266, %v3267
        %v3269 = vrot.slane %v3268, 2
        %v3270 = vmax.f32 %v3268, %v3269
        %v3271 = vrot.slane %v3270, 1
        %v3272 = vmax.f32 %v3270, %v3271
        %v3273 = vmax.f32 %v3222, %v3225
        %v3274 = vrot.slane %v3273, 4
        %v3275 = vmax.f32 %v3273, %v3274
        %v3276 = vrot.slane %v3275, 2
        %v3277 = vmax.f32 %v3275, %v3276
        %v3278 = vrot.slane %v3277, 1
        %v3279 = vmax.f32 %v3277, %v3278
        %v3280 = vmax.f32 %v3228, %v3231
        %v3281 = vrot.slane %v3280, 4
        %v3282 = vmax.f32 %v3280, %v3281
        %v3283 = vrot.slane %v3282, 2
        %v3284 = vmax.f32 %v3282, %v3283
        %v3285 = vrot.slane %v3284, 1
        %v3286 = vmax.f32 %v3284, %v3285
        %v3287 = vmax.f32 %v3234, %v3237
        %v3288 = vrot.slane %v3287, 4
        %v3289 = vmax.f32 %v3287, %v3288
        %v3290 = vrot.slane %v3289, 2
        %v3291 = vmax.f32 %v3289, %v3290
        %v3292 = vrot.slane %v3291, 1
        %v3293 = vmax.f32 %v3291, %v3292
        %v3294 = vsub.f32 %v3192, %v3244
        %v3295 = vsub.f32 %v3195, %v3244
        %v3296 = vsub.f32 %v3198, %v3251
        %v3297 = vsub.f32 %v3201, %v3251
        %v3298 = vsub.f32 %v3204, %v3258
        %v3299 = vsub.f32 %v3207, %v3258
        %v3300 = vsub.f32 %v3210, %v3265
        %v3301 = vsub.f32 %v3213, %v3265
        %v3302 = vsub.f32 %v3216, %v3272
        %v3303 = vsub.f32 %v3219, %v3272
        %v3304 = vsub.f32 %v3222, %v3279
        %v3305 = vsub.f32 %v3225, %v3279
        %v3306 = vsub.f32 %v3228, %v3286
        %v3307 = vsub.f32 %v3231, %v3286
        %v3308 = vsub.f32 %v3234, %v3293
        %v3309 = vsub.f32 %v3237, %v3293
        %v3310 = vmul.f32 %v3294, 1.442695
        %v3311 = vpow.pop %v3310
        %v3312 = vmul.f32 %v3295, 1.442695
        %v3313 = vpow.pop %v3312
        %v3314 = vmul.f32 %v3296, 1.442695
        %v3315 = vpow.pop %v3314
        %v3316 = vmul.f32 %v3297, 1.442695
        %v3317 = vpow.pop %v3316
        %v3318 = vmul.f32 %v3298, 1.442695
        %v3319 = vpow.pop %v3318
        %v3320 = vmul.f32 %v3299, 1.442695
        %v3321 = vpow.pop %v3320
        %v3322 = vmul.f32 %v3300, 1.442695
        %v3323 = vpow.pop %v3322
        %v3324 = vmul.f32 %v3301, 1.442695
        %v3325 = vpow.pop %v3324
        %v3326 = vmul.f32 %v3302, 1.442695
        %v3327 = vpow.pop %v3326
        %v3328 = vmul.f32 %v3303, 1.442695
        %v3329 = vpow.pop %v3328
        %v3330 = vmul.f32 %v3304, 1.442695
        %v3331 = vpow.pop %v3330
        %v3332 = vmul.f32 %v3305, 1.442695
        %v3333 = vpow.pop %v3332
        %v3334 = vmul.f32 %v3306, 1.442695
        %v3335 = vpow.pop %v3334
        %v3336 = vmul.f32 %v3307, 1.442695
        %v3337 = vpow.pop %v3336
        %v3338 = vmul.f32 %v3308, 1.442695
        %v3339 = vpow.pop %v3338
        %v3340 = vmul.f32 %v3309, 1.442695
        %v3341 = vpow.pop %v3340
        %v3342 = vadd.f32 %v3311, %v3313
        %v3343 = vrot.slane %v3342, 4
        %v3344 = vadd.f32 %v3342, %v3343
        %v3345 = vrot.slane %v3344, 2
        %v3346 = vadd.f32 %v3344, %v3345
        %v3347 = vrot.slane %v3346, 1
        %v3348 = vadd.f32 %v3346, %v3347
        %v3349 = vadd.f32 %v3315, %v3317
        %v3350 = vrot.slane %v3349, 4
        %v3351 = vadd.f32 %v3349, %v3350
        %v3352 = vrot.slane %v3351, 2
        %v3353 = vadd.f32 %v3351, %v3352
        %v3354 = vrot.slane %v3353, 1
        %v3355 = vadd.f32 %v3353, %v3354
        %v3356 = vadd.f32 %v3319, %v3321
        %v3357 = vrot.slane %v3356, 4
        %v3358 = vadd.f32 %v3356, %v3357
        %v3359 = vrot.slane %v3358, 2
        %v3360 = vadd.f32 %v3358, %v3359
        %v3361 = vrot.slane %v3360, 1
        %v3362 = vadd.f32 %v3360, %v3361
        %v3363 = vadd.f32 %v3323, %v3325
        %v3364 = vrot.slane %v3363, 4
        %v3365 = vadd.f32 %v3363, %v3364
        %v3366 = vrot.slane %v3365, 2
        %v3367 = vadd.f32 %v3365, %v3366
        %v3368 = vrot.slane %v3367, 1
        %v3369 = vadd.f32 %v3367, %v3368
        %v3370 = vadd.f32 %v3327, %v3329
        %v3371 = vrot.slane %v3370, 4
        %v3372 = vadd.f32 %v3370, %v3371
        %v3373 = vrot.slane %v3372, 2
        %v3374 = vadd.f32 %v3372, %v3373
        %v3375 = vrot.slane %v3374, 1
        %v3376 = vadd.f32 %v3374, %v3375
        %v3377 = vadd.f32 %v3331, %v3333
        %v3378 = vrot.slane %v3377, 4
        %v3379 = vadd.f32 %v3377, %v3378
        %v3380 = vrot.slane %v3379, 2
        %v3381 = vadd.f32 %v3379, %v3380
        %v3382 = vrot.slane %v3381, 1
        %v3383 = vadd.f32 %v3381, %v3382
        %v3384 = vadd.f32 %v3335, %v3337
        %v3385 = vrot.slane %v3384, 4
        %v3386 = vadd.f32 %v3384, %v3385
        %v3387 = vrot.slane %v3386, 2
        %v3388 = vadd.f32 %v3386, %v3387
        %v3389 = vrot.slane %v3388, 1
        %v3390 = vadd.f32 %v3388, %v3389
        %v3391 = vadd.f32 %v3339, %v3341
        %v3392 = vrot.slane %v3391, 4
        %v3393 = vadd.f32 %v3391, %v3392
        %v3394 = vrot.slane %v3393, 2
        %v3395 = vadd.f32 %v3393, %v3394
        %v3396 = vrot.slane %v3395, 1
        %v3397 = vadd.f32 %v3395, %v3396
        %v3398 = vrcp.pop %v3348
        %v3399 = vrcp.pop %v3355
        %v3400 = vrcp.pop %v3362
        %v3401 = vrcp.pop %v3369
        %v3402 = vrcp.pop %v3376
        %v3403 = vrcp.pop %v3383
        %v3404 = vrcp.pop %v3390
        %v3405 = vrcp.pop %v3397
        %v3406 = vmul.f32 %v3311, %v3398
        %v3407 = vmul.f32 %v3313, %v3398
        %v3408 = vmul.f32 %v3315, %v3399
        %v3409 = vmul.f32 %v3317, %v3399
        %v3410 = vmul.f32 %v3319, %v3400
        %v3411 = vmul.f32 %v3321, %v3400
        %v3412 = vmul.f32 %v3323, %v3401
        %v3413 = vmul.f32 %v3325, %v3401
        %v3414 = vmul.f32 %v3327, %v3402
        %v3415 = vmul.f32 %v3329, %v3402
        %v3416 = vmul.f32 %v3331, %v3403
        %v3417 = vmul.f32 %v3333, %v3403
        %v3418 = vmul.f32 %v3335, %v3404
        %v3419 = vmul.f32 %v3337, %v3404
        %v3420 = vmul.f32 %v3339, %v3405
        %v3421 = vmul.f32 %v3341, %v3405
        %v3422 = vmul.f32 %v3150, %v3406
        %v3423 = vmul.f32 %v3151, %v3407
        %v3424 = vmul.f32 %v3152, %v3408
        %v3425 = vmul.f32 %v3153, %v3409
        %v3426 = vmul.f32 %v3154, %v3410
        %v3427 = vmul.f32 %v3155, %v3411
        %v3428 = vmul.f32 %v3156, %v3412
        %v3429 = vmul.f32 %v3157, %v3413
        %v3430 = vmul.f32 %v3158, %v3414
        %v3431 = vmul.f32 %v3159, %v3415
        %v3432 = vmul.f32 %v3160, %v3416
        %v3433 = vmul.f32 %v3161, %v3417
        %v3434 = vmul.f32 %v3162, %v3418
        %v3435 = vmul.f32 %v3163, %v3419
        %v3436 = vmul.f32 %v3164, %v3420
        %v3437 = vmul.f32 %v3165, %v3421
        %v3438 = vsel %vm1347, %v3422, 0.0
        %v3439 = vsel %vm1347, %v3423, 0.0
        %v3440 = vadd.f32 %v3438, %v3439
        %v3441 = vrot.slane %v3440, 4
        %v3442 = vadd.f32 %v3440, %v3441
        %v3443 = vrot.slane %v3442, 2
        %v3444 = vadd.f32 %v3442, %v3443
        %v3445 = vrot.slane %v3444, 1
        %v3446 = vadd.f32 %v3444, %v3445
        %v3447 = vsel %vm1347, %v3424, 0.0
        %v3448 = vsel %vm1347, %v3425, 0.0
        %v3449 = vadd.f32 %v3447, %v3448
        %v3450 = vrot.slane %v3449, 4
        %v3451 = vadd.f32 %v3449, %v3450
        %v3452 = vrot.slane %v3451, 2
        %v3453 = vadd.f32 %v3451, %v3452
        %v3454 = vrot.slane %v3453, 1
        %v3455 = vadd.f32 %v3453, %v3454
        %v3456 = vsel %vm1347, %v3426, 0.0
        %v3457 = vsel %vm1347, %v3427, 0.0
        %v3458 = vadd.f32 %v3456, %v3457
        %v3459 = vrot.slane %v3458, 4
        %v3460 = vadd.f32 %v3458, %v3459
        %v3461 = vrot.slane %v3460, 2
        %v3462 = vadd.f32 %v3460, %v3461
        %v3463 = vrot.slane %v3462, 1
        %v3464 = vadd.f32 %v3462, %v3463
        %v3465 = vsel %vm1347, %v3428, 0.0
        %v3466 = vsel %vm1347, %v3429, 0.0
        %v3467 = vadd.f32 %v3465, %v3466
        %v3468 = vrot.slane %v3467, 4
        %v3469 = vadd.f32 %v3467, %v3468
        %v3470 = vrot.slane %v3469, 2
        %v3471 = vadd.f32 %v3469, %v3470
        %v3472 = vrot.slane %v3471, 1
        %v3473 = vadd.f32 %v3471, %v3472
        %v3474 = vsel %vm1347, %v3430, 0.0
        %v3475 = vsel %vm1347, %v3431, 0.0
        %v3476 = vadd.f32 %v3474, %v3475
        %v3477 = vrot.slane %v3476, 4
        %v3478 = vadd.f32 %v3476, %v3477
        %v3479 = vrot.slane %v3478, 2
        %v3480 = vadd.f32 %v3478, %v3479
        %v3481 = vrot.slane %v3480, 1
        %v3482 = vadd.f32 %v3480, %v3481
        %v3483 = vsel %vm1347, %v3432, 0.0
        %v3484 = vsel %vm1347, %v3433, 0.0
        %v3485 = vadd.f32 %v3483, %v3484
        %v3486 = vrot.slane %v3485, 4
        %v3487 = vadd.f32 %v3485, %v3486
        %v3488 = vrot.slane %v3487, 2
        %v3489 = vadd.f32 %v3487, %v3488
        %v3490 = vrot.slane %v3489, 1
        %v3491 = vadd.f32 %v3489, %v3490
        %v3492 = vsel %vm1347, %v3434, 0.0
        %v3493 = vsel %vm1347, %v3435, 0.0
        %v3494 = vadd.f32 %v3492, %v3493
        %v3495 = vrot.slane %v3494, 4
        %v3496 = vadd.f32 %v3494, %v3495
        %v3497 = vrot.slane %v3496, 2
        %v3498 = vadd.f32 %v3496, %v3497
        %v3499 = vrot.slane %v3498, 1
        %v3500 = vadd.f32 %v3498, %v3499
        %v3501 = vsel %vm1347, %v3436, 0.0
        %v3502 = vsel %vm1347, %v3437, 0.0
        %v3503 = vadd.f32 %v3501, %v3502
        %v3504 = vrot.slane %v3503, 4
        %v3505 = vadd.f32 %v3503, %v3504
        %v3506 = vrot.slane %v3505, 2
        %v3507 = vadd.f32 %v3505, %v3506
        %v3508 = vrot.slane %v3507, 1
        %v3509 = vadd.f32 %v3507, %v3508
        %s3510 = scalar_lea.vmem %s659, 512 [#allocation2]
        %v3511 = vld [vmem:[%s3510] sm:$0xff]
        %v3512 = vld [vmem:[%s3510 + $0x8] sm:$0xff]
        %v3513 = vld [vmem:[%s3510 + $0x10] sm:$0xff]
        %v3514 = vld [vmem:[%s3510 + $0x18] sm:$0xff]
        %v3515 = vld [vmem:[%s3510 + $0x20] sm:$0xff]
        %v3516 = vld [vmem:[%s3510 + $0x28] sm:$0xff]
        %v3517 = vld [vmem:[%s3510 + $0x30] sm:$0xff]
        %v3518 = vld [vmem:[%s3510 + $0x38] sm:$0xff]
        %v3519 = vld [vmem:[%s3510 + $0x40] sm:$0xff]
        %v3520 = vld [vmem:[%s3510 + $0x48] sm:$0xff]
        %v3521 = vld [vmem:[%s3510 + $0x50] sm:$0xff]
        %v3522 = vld [vmem:[%s3510 + $0x58] sm:$0xff]
        %v3523 = vld [vmem:[%s3510 + $0x60] sm:$0xff]
        %v3524 = vld [vmem:[%s3510 + $0x68] sm:$0xff]
        %v3525 = vld [vmem:[%s3510 + $0x70] sm:$0xff]
        %v3526 = vld [vmem:[%s3510 + $0x78] sm:$0xff]
        %v3527 = vld [vmem:[%s3510 + $0x80] sm:$0xff]
        %v3528 = vld [vmem:[%s3510 + $0x88] sm:$0xff]
        %v3529 = vld [vmem:[%s3510 + $0x90] sm:$0xff]
        %v3530 = vld [vmem:[%s3510 + $0x98] sm:$0xff]
        %v3531 = vld [vmem:[%s3510 + $0xa0] sm:$0xff]
        %v3532 = vld [vmem:[%s3510 + $0xa8] sm:$0xff]
        %v3533 = vld [vmem:[%s3510 + $0xb0] sm:$0xff]
        %v3534 = vld [vmem:[%s3510 + $0xb8] sm:$0xff]
        %v3535 = vld [vmem:[%s3510 + $0xc0] sm:$0xff]
        %v3536 = vld [vmem:[%s3510 + $0xc8] sm:$0xff]
        %v3537 = vld [vmem:[%s3510 + $0xd0] sm:$0xff]
        %v3538 = vld [vmem:[%s3510 + $0xd8] sm:$0xff]
        %v3539 = vld [vmem:[%s3510 + $0xe0] sm:$0xff]
        %v3540 = vld [vmem:[%s3510 + $0xe8] sm:$0xff]
        %v3541 = vld [vmem:[%s3510 + $0xf0] sm:$0xff]
        %v3542 = vld [vmem:[%s3510 + $0xf8] sm:$0xff]
        %s3543 = scalar_lea.vmem %s1, 320
        %v3544 = vld [vmem:[%s3543] sm:$0xff]
        %v3545 = vld [vmem:[%s3543 + $0x8] sm:$0xff]
        %v3546 = vld [vmem:[%s3543 + $0x10] sm:$0xff]
        %v3547 = vld [vmem:[%s3543 + $0x18] sm:$0xff]
        %v3548 = vld [vmem:[%s3543 + $0x20] sm:$0xff]
        %v3549 = vld [vmem:[%s3543 + $0x28] sm:$0xff]
        %v3550 = vld [vmem:[%s3543 + $0x30] sm:$0xff]
        %v3551 = vld [vmem:[%s3543 + $0x38] sm:$0xff]
        %v3552 = vld [vmem:[%s3543 + $0x40] sm:$0xff]
        %v3553 = vld [vmem:[%s3543 + $0x48] sm:$0xff]
        %v3554 = vld [vmem:[%s3543 + $0x50] sm:$0xff]
        %v3555 = vld [vmem:[%s3543 + $0x58] sm:$0xff]
        %v3556 = vld [vmem:[%s3543 + $0x60] sm:$0xff]
        %v3557 = vld [vmem:[%s3543 + $0x68] sm:$0xff]
        %v3558 = vld [vmem:[%s3543 + $0x70] sm:$0xff]
        %v3559 = vld [vmem:[%s3543 + $0x78] sm:$0xff]
        %v3560 = vld [vmem:[%s3543 + $0x80] sm:$0xff]
        %v3561 = vld [vmem:[%s3543 + $0x88] sm:$0xff]
        %v3562 = vld [vmem:[%s3543 + $0x90] sm:$0xff]
        %v3563 = vld [vmem:[%s3543 + $0x98] sm:$0xff]
        %s3564 = scalar_lea.vmem %s2, 2
        %v3565 = vld [vmem:[%s3564] sm:$0x1]
        %v3567 = vlaneseq
        %v3568 = vshrl.u32 %v3567, 7
        %v3569 = vsub.s32 0, %v3568
        %v3570 = vrot.slane %v3565, %v3569
        %v3573 = vsel %vm764, %v3512, 0
        %v3576 = vsel %vm764, %v3514, 0
        %v3579 = vsel %vm764, %v3516, 0
        %v3582 = vsel %vm764, %v3518, 0
        %v3585 = vsel %vm764, %v3520, 0
        %v3588 = vsel %vm764, %v3522, 0
        %v3591 = vsel %vm764, %v3524, 0
        %v3594 = vsel %vm764, %v3526, 0
        %v3597 = vsel %vm764, %v3528, 0
        %v3600 = vsel %vm764, %v3530, 0
        %v3603 = vsel %vm764, %v3532, 0
        %v3606 = vsel %vm764, %v3534, 0
        %v3609 = vsel %vm764, %v3536, 0
        %v3612 = vsel %vm764, %v3538, 0
        %v3615 = vsel %vm764, %v3540, 0
        %v3618 = vsel %vm764, %v3542, 0
        %3620 = vmatprep.subr.mxu0 0.0
        %3621 = vmatpush1.msra.mxu0 %v3544
        %3622 = vmatprep.subr.mxu0 0.0
        %3623 = vmatpush1.msra.mxu0 %v3545
        %3624 = vmatprep.subr.mxu0 0.0
        %3625 = vmatpush1.msra.mxu0 %v3546
        %3626 = vmatprep.subr.mxu0 0.0
        %3627 = vmatpush1.msra.mxu0 %v3547
        %3628 = vmatprep.subr.mxu0 0.0
        %3629 = vmatpush1.msra.mxu0 %v3548
        %3630 = vmatprep.subr.mxu0 0.0
        %3631 = vmatpush1.msra.mxu0 %v3549
        %3632 = vmatprep.subr.mxu0 0.0
        %3633 = vmatpush1.msra.mxu0 %v3550
        %3634 = vmatprep.subr.mxu0 0.0
        %3635 = vmatpush1.msra.mxu0 %v3551
        %3636 = vmatprep.subr.mxu0 0.0
        %3637 = vmatpush1.msra.mxu0 %v3552
        %3638 = vmatprep.subr.mxu0 0.0
        %3639 = vmatpush1.msra.mxu0 %v3553
        %3640 = vmatprep.subr.mxu0 0.0
        %3641 = vmatpush1.msra.mxu0 %v3554
        %3642 = vmatprep.subr.mxu0 0.0
        %3643 = vmatpush1.msra.mxu0 %v3555
        %3644 = vmatprep.subr.mxu0 0.0
        %3645 = vmatpush1.msra.mxu0 %v3556
        %3646 = vmatprep.subr.mxu0 0.0
        %3647 = vmatpush1.msra.mxu0 %v3557
        %3648 = vmatprep.subr.mxu0 0.0
        %3649 = vmatpush1.msra.mxu0 %v3558
        %3650 = vmatprep.subr.mxu0 0.0
        %3651 = vmatpush1.msra.mxu0 %v3559
        %3652 = vmatprep.subr.mxu0 0.0
        %3653 = vmatpush1.msra.mxu0 %v3560
        %3654 = vmatprep.subr.mxu0 0.0
        %3655 = vmatpush1.msra.mxu0 %v3561
        %3656 = vmatprep.subr.mxu0 0.0
        %3657 = vmatpush1.msra.mxu0 %v3562
        %3658 = vmatprep.subr.mxu0 0.0
        %3659 = vmatpush1.msra.mxu0 %v3563
        %3660 = vmatprep.subr.mxu0 0.0
        %3661 = vmatpush1.msra.mxu0 0.0
        %3662 = vmatprep.subr.mxu0 0.0
        %3663 = vmatpush1.msra.mxu0 0.0
        %3664 = vmatprep.subr.mxu0 0.0
        %3665 = vmatpush1.msra.mxu0 0.0
        %3666 = vmatprep.subr.mxu0 0.0
        %3667 = vmatpush1.msra.mxu0 0.0
        %3668 = vmatprep.subr.mxu0 0.0
        %3669 = vmatpush1.msra.mxu0 0.0
        %3670 = vmatprep.subr.mxu0 0.0
        %3671 = vmatpush1.msra.mxu0 0.0
        %3672 = vmatprep.subr.mxu0 0.0
        %3673 = vmatpush1.msra.mxu0 0.0
        %3674 = vmatprep.subr.mxu0 0.0
        %3675 = vmatpush1.msra.mxu0 0.0
        %3676 = vmatprep.subr.mxu0 0.0
        %3677 = vmatpush1.msra.mxu0 0.0
        %3678 = vmatprep.subr.mxu0 0.0
        %3679 = vmatpush1.msra.mxu0 0.0
        %3680 = vmatprep.subr.mxu0 0.0
        %3681 = vmatpush1.msra.mxu0 0.0
        %3682 = vmatprep.subr.mxu0 0.0
        %3683 = vmatpush1.msra.mxu0 0.0
        %3684 = vmatprep.mubr.f32.mxu0 %v3573
        %3685 = vmatmul.mubr.f32.gmra.mrb[0].mxu0 %v3511
        %v3686 = vpop.f32.mrb[0].mxu0
        %v3687 = vadd.f32 %v3570, %v3686
        %v3688 = vpop.f32.mrb[0].mxu0
        %3689 = vmatprep.mubr.f32.mxu0 %v3576
        %3690 = vmatmul.mubr.f32.gmra.mrb[0].mxu0 %v3513
        %v3691 = vpop.f32.mrb[0].mxu0
        %v3692 = vadd.f32 %v3570, %v3691
        %v3693 = vpop.f32.mrb[0].mxu0
        %3694 = vmatprep.mubr.f32.mxu0 %v3579
        %3695 = vmatmul.mubr.f32.gmra.mrb[0].mxu0 %v3515
        %v3696 = vpop.f32.mrb[0].mxu0
        %v3697 = vadd.f32 %v3570, %v3696
        %v3698 = vpop.f32.mrb[0].mxu0
        %3699 = vmatprep.mubr.f32.mxu0 %v3582
        %3700 = vmatmul.mubr.f32.gmra.mrb[0].mxu0 %v3517
        %v3701 = vpop.f32.mrb[0].mxu0
        %v3702 = vadd.f32 %v3570, %v3701
        %v3703 = vpop.f32.mrb[0].mxu0
        %3704 = vmatprep.mubr.f32.mxu0 %v3585
        %3705 = vmatmul.mubr.f32.gmra.mrb[0].mxu0 %v3519
        %v3706 = vpop.f32.mrb[0].mxu0
        %v3707 = vadd.f32 %v3570, %v3706
        %v3708 = vpop.f32.mrb[0].mxu0
        %3709 = vmatprep.mubr.f32.mxu0 %v3588
        %3710 = vmatmul.mubr.f32.gmra.mrb[0].mxu0 %v3521
        %v3711 = vpop.f32.mrb[0].mxu0
        %v3712 = vadd.f32 %v3570, %v3711
        %v3713 = vpop.f32.mrb[0].mxu0
        %3714 = vmatprep.mubr.f32.mxu0 %v3591
        %3715 = vmatmul.mubr.f32.gmra.mrb[0].mxu0 %v3523
        %v3716 = vpop.f32.mrb[0].mxu0
        %v3717 = vadd.f32 %v3570, %v3716
        %v3718 = vpop.f32.mrb[0].mxu0
        %3719 = vmatprep.mubr.f32.mxu0 %v3594
        %3720 = vmatmul.mubr.f32.gmra.mrb[0].mxu0 %v3525
        %v3721 = vpop.f32.mrb[0].mxu0
        %v3722 = vadd.f32 %v3570, %v3721
        %v3723 = vpop.f32.mrb[0].mxu0
        %3724 = vmatprep.mubr.f32.mxu0 %v3597
        %3725 = vmatmul.mubr.f32.gmra.mrb[0].mxu0 %v3527
        %v3726 = vpop.f32.mrb[0].mxu0
        %v3727 = vadd.f32 %v3570, %v3726
        %v3728 = vpop.f32.mrb[0].mxu0
        %3729 = vmatprep.mubr.f32.mxu0 %v3600
        %3730 = vmatmul.mubr.f32.gmra.mrb[0].mxu0 %v3529
        %v3731 = vpop.f32.mrb[0].mxu0
        %v3732 = vadd.f32 %v3570, %v3731
        %v3733 = vpop.f32.mrb[0].mxu0
        %3734 = vmatprep.mubr.f32.mxu0 %v3603
        %3735 = vmatmul.mubr.f32.gmra.mrb[0].mxu0 %v3531
        %v3736 = vpop.f32.mrb[0].mxu0
        %v3737 = vadd.f32 %v3570, %v3736
        %v3738 = vpop.f32.mrb[0].mxu0
        %3739 = vmatprep.mubr.f32.mxu0 %v3606
        %3740 = vmatmul.mubr.f32.gmra.mrb[0].mxu0 %v3533
        %v3741 = vpop.f32.mrb[0].mxu0
        %v3742 = vadd.f32 %v3570, %v3741
        %v3743 = vpop.f32.mrb[0].mxu0
        %3744 = vmatprep.mubr.f32.mxu0 %v3609
        %3745 = vmatmul.mubr.f32.gmra.mrb[0].mxu0 %v3535
        %v3746 = vpop.f32.mrb[0].mxu0
        %v3747 = vadd.f32 %v3570, %v3746
        %v3748 = vpop.f32.mrb[0].mxu0
        %3749 = vmatprep.mubr.f32.mxu0 %v3612
        %3750 = vmatmul.mubr.f32.gmra.mrb[0].mxu0 %v3537
        %v3751 = vpop.f32.mrb[0].mxu0
        %v3752 = vadd.f32 %v3570, %v3751
        %v3753 = vpop.f32.mrb[0].mxu0
        %3754 = vmatprep.mubr.f32.mxu0 %v3615
        %3755 = vmatmul.mubr.f32.gmra.mrb[0].mxu0 %v3539
        %v3756 = vpop.f32.mrb[0].mxu0
        %v3757 = vadd.f32 %v3570, %v3756
        %v3758 = vpop.f32.mrb[0].mxu0
        %3759 = vmatprep.mubr.f32.mxu0 %v3618
        %3760 = vmatmul.mubr.f32.gmra.mrb[0].mxu0 %v3541
        %v3761 = vpop.f32.mrb[0].mxu0
        %v3762 = vadd.f32 %v3570, %v3761
        %v3763 = vpop.f32.mrb[0].mxu0
        %3764 = vdwg.mxu0
        %v3765 = vmax.f32 %v3687, 0.0
        %v3766 = vmax.f32 %v3692, 0.0
        %v3767 = vmax.f32 %v3697, 0.0
        %v3768 = vmax.f32 %v3702, 0.0
        %v3769 = vmax.f32 %v3707, 0.0
        %v3770 = vmax.f32 %v3712, 0.0
        %v3771 = vmax.f32 %v3717, 0.0
        %v3772 = vmax.f32 %v3722, 0.0
        %v3773 = vmax.f32 %v3727, 0.0
        %v3774 = vmax.f32 %v3732, 0.0
        %v3775 = vmax.f32 %v3737, 0.0
        %v3776 = vmax.f32 %v3742, 0.0
        %v3777 = vmax.f32 %v3747, 0.0
        %v3778 = vmax.f32 %v3752, 0.0
        %v3779 = vmax.f32 %v3757, 0.0
        %v3780 = vmax.f32 %v3762, 0.0
        %v3797 = vrot.slane %v3765, 6
        %v3798 = vrot.slane %v3766, 6
        %v3799 = vsel %vm990, %v3797, %v3798
        %v3800 = vrot.slane %v3767, 6
        %v3801 = vrot.slane %v3768, 6
        %v3802 = vsel %vm990, %v3800, %v3801
        %v3803 = vrot.slane %v3769, 6
        %v3804 = vrot.slane %v3770, 6
        %v3805 = vsel %vm990, %v3803, %v3804
        %v3806 = vrot.slane %v3771, 6
        %v3807 = vrot.slane %v3772, 6
        %v3808 = vsel %vm990, %v3806, %v3807
        %v3809 = vrot.slane %v3773, 6
        %v3810 = vrot.slane %v3774, 6
        %v3811 = vsel %vm990, %v3809, %v3810
        %v3812 = vrot.slane %v3775, 6
        %v3813 = vrot.slane %v3776, 6
        %v3814 = vsel %vm990, %v3812, %v3813
        %v3815 = vrot.slane %v3777, 6
        %v3816 = vrot.slane %v3778, 6
        %v3817 = vsel %vm990, %v3815, %v3816
        %v3818 = vrot.slane %v3779, 6
        %v3819 = vrot.slane %v3780, 6
        %v3820 = vsel %vm990, %v3818, %v3819
        %v3845 = vsel %vm990, 0.0, %v3797
        %v3846 = vsel %vm990, 0.0, %v3800
        %v3847 = vsel %vm990, 0.0, %v3803
        %v3848 = vsel %vm990, 0.0, %v3806
        %v3849 = vsel %vm990, 0.0, %v3809
        %v3850 = vsel %vm990, 0.0, %v3812
        %v3851 = vsel %vm990, 0.0, %v3815
        %v3852 = vsel %vm990, 0.0, %v3818
        %v3853 = vsel %vm990, %v3798, 0.0
        %v3854 = vsel %vm990, %v3801, 0.0
        %v3855 = vsel %vm990, %v3804, 0.0
        %v3856 = vsel %vm990, %v3807, 0.0
        %v3857 = vsel %vm990, %v3810, 0.0
        %v3858 = vsel %vm990, %v3813, 0.0
        %v3859 = vsel %vm990, %v3816, 0.0
        %v3860 = vsel %vm990, %v3819, 0.0
        %v3877 = vrot.slane %v3845, 1
        %v3878 = vrot.slane %v3799, 1
        %v3879 = vsel %vm1071, %v3877, %v3878
        %v3880 = vrot.slane %v3853, 1
        %v3881 = vsel %vm1071, %v3878, %v3880
        %v3882 = vrot.slane %v3846, 1
        %v3883 = vrot.slane %v3802, 1
        %v3884 = vsel %vm1071, %v3882, %v3883
        %v3885 = vrot.slane %v3854, 1
        %v3886 = vsel %vm1071, %v3883, %v3885
        %v3887 = vrot.slane %v3847, 1
        %v3888 = vrot.slane %v3805, 1
        %v3889 = vsel %vm1071, %v3887, %v3888
        %v3890 = vrot.slane %v3855, 1
        %v3891 = vsel %vm1071, %v3888, %v3890
        %v3892 = vrot.slane %v3848, 1
        %v3893 = vrot.slane %v3808, 1
        %v3894 = vsel %vm1071, %v3892, %v3893
        %v3895 = vrot.slane %v3856, 1
        %v3896 = vsel %vm1071, %v3893, %v3895
        %v3897 = vrot.slane %v3849, 1
        %v3898 = vrot.slane %v3811, 1
        %v3899 = vsel %vm1071, %v3897, %v3898
        %v3900 = vrot.slane %v3857, 1
        %v3901 = vsel %vm1071, %v3898, %v3900
        %v3902 = vrot.slane %v3850, 1
        %v3903 = vrot.slane %v3814, 1
        %v3904 = vsel %vm1071, %v3902, %v3903
        %v3905 = vrot.slane %v3858, 1
        %v3906 = vsel %vm1071, %v3903, %v3905
        %v3907 = vrot.slane %v3851, 1
        %v3908 = vrot.slane %v3817, 1
        %v3909 = vsel %vm1071, %v3907, %v3908
        %v3910 = vrot.slane %v3859, 1
        %v3911 = vsel %vm1071, %v3908, %v3910
        %v3912 = vrot.slane %v3852, 1
        %v3913 = vrot.slane %v3820, 1
        %v3914 = vsel %vm1071, %v3912, %v3913
        %v3915 = vrot.slane %v3860, 1
        %v3916 = vsel %vm1071, %v3913, %v3915
        %3917 = vrot.lane.b32.xlu0 %v3879, 64
        %v3918 = vpop.permute.xlu0 %3917
        %3919 = vrot.lane.b32.xlu0 %v3881, 64
        %v3920 = vpop.permute.xlu0 %3919
        %3921 = vrot.lane.b32.xlu0 %v3884, 64
        %v3922 = vpop.permute.xlu0 %3921
        %3923 = vrot.lane.b32.xlu0 %v3886, 64
        %v3924 = vpop.permute.xlu0 %3923
        %3925 = vrot.lane.b32.xlu0 %v3889, 64
        %v3926 = vpop.permute.xlu0 %3925
        %3927 = vrot.lane.b32.xlu0 %v3891, 64
        %v3928 = vpop.permute.xlu0 %3927
        %3929 = vrot.lane.b32.xlu0 %v3894, 64
        %v3930 = vpop.permute.xlu0 %3929
        %3931 = vrot.lane.b32.xlu0 %v3896, 64
        %v3932 = vpop.permute.xlu0 %3931
        %3933 = vrot.lane.b32.xlu0 %v3899, 64
        %v3934 = vpop.permute.xlu0 %3933
        %3935 = vrot.lane.b32.xlu0 %v3901, 64
        %v3936 = vpop.permute.xlu0 %3935
        %3937 = vrot.lane.b32.xlu0 %v3904, 64
        %v3938 = vpop.permute.xlu0 %3937
        %3939 = vrot.lane.b32.xlu0 %v3906, 64
        %v3940 = vpop.permute.xlu0 %3939
        %3941 = vrot.lane.b32.xlu0 %v3909, 64
        %v3942 = vpop.permute.xlu0 %3941
        %3943 = vrot.lane.b32.xlu0 %v3911, 64
        %v3944 = vpop.permute.xlu0 %3943
        %3945 = vrot.lane.b32.xlu0 %v3914, 64
        %v3946 = vpop.permute.xlu0 %3945
        %3947 = vrot.lane.b32.xlu0 %v3916, 64
        %v3948 = vpop.permute.xlu0 %3947
        %v3965 = vrot.slane %v3845, 2
        %v3966 = vrot.slane %v3799, 2
        %v3967 = vsel %vm1160, %v3965, %v3966
        %v3968 = vrot.slane %v3853, 2
        %v3969 = vsel %vm1160, %v3966, %v3968
        %v3970 = vrot.slane %v3846, 2
        %v3971 = vrot.slane %v3802, 2
        %v3972 = vsel %vm1160, %v3970, %v3971
        %v3973 = vrot.slane %v3854, 2
        %v3974 = vsel %vm1160, %v3971, %v3973
        %v3975 = vrot.slane %v3847, 2
        %v3976 = vrot.slane %v3805, 2
        %v3977 = vsel %vm1160, %v3975, %v3976
        %v3978 = vrot.slane %v3855, 2
        %v3979 = vsel %vm1160, %v3976, %v3978
        %v3980 = vrot.slane %v3848, 2
        %v3981 = vrot.slane %v3808, 2
        %v3982 = vsel %vm1160, %v3980, %v3981
        %v3983 = vrot.slane %v3856, 2
        %v3984 = vsel %vm1160, %v3981, %v3983
        %v3985 = vrot.slane %v3849, 2
        %v3986 = vrot.slane %v3811, 2
        %v3987 = vsel %vm1160, %v3985, %v3986
        %v3988 = vrot.slane %v3857, 2
        %v3989 = vsel %vm1160, %v3986, %v3988
        %v3990 = vrot.slane %v3850, 2
        %v3991 = vrot.slane %v3814, 2
        %v3992 = vsel %vm1160, %v3990, %v3991
        %v3993 = vrot.slane %v3858, 2
        %v3994 = vsel %vm1160, %v3991, %v3993
        %v3995 = vrot.slane %v3851, 2
        %v3996 = vrot.slane %v3817, 2
        %v3997 = vsel %vm1160, %v3995, %v3996
        %v3998 = vrot.slane %v3859, 2
        %v3999 = vsel %vm1160, %v3996, %v3998
        %v4000 = vrot.slane %v3852, 2
        %v4001 = vrot.slane %v3820, 2
        %v4002 = vsel %vm1160, %v4000, %v4001
        %v4003 = vrot.slane %v3860, 2
        %v4004 = vsel %vm1160, %v4001, %v4003
        %v4021 = vrot.slane %v3845, 3
        %v4022 = vrot.slane %v3799, 3
        %v4023 = vsel %vm1217, %v4021, %v4022
        %v4024 = vrot.slane %v3853, 3
        %v4025 = vsel %vm1217, %v4022, %v4024
        %v4026 = vrot.slane %v3846, 3
        %v4027 = vrot.slane %v3802, 3
        %v4028 = vsel %vm1217, %v4026, %v4027
        %v4029 = vrot.slane %v3854, 3
        %v4030 = vsel %vm1217, %v4027, %v4029
        %v4031 = vrot.slane %v3847, 3
        %v4032 = vrot.slane %v3805, 3
        %v4033 = vsel %vm1217, %v4031, %v4032
        %v4034 = vrot.slane %v3855, 3
        %v4035 = vsel %vm1217, %v4032, %v4034
        %v4036 = vrot.slane %v3848, 3
        %v4037 = vrot.slane %v3808, 3
        %v4038 = vsel %vm1217, %v4036, %v4037
        %v4039 = vrot.slane %v3856, 3
        %v4040 = vsel %vm1217, %v4037, %v4039
        %v4041 = vrot.slane %v3849, 3
        %v4042 = vrot.slane %v3811, 3
        %v4043 = vsel %vm1217, %v4041, %v4042
        %v4044 = vrot.slane %v3857, 3
        %v4045 = vsel %vm1217, %v4042, %v4044
        %v4046 = vrot.slane %v3850, 3
        %v4047 = vrot.slane %v3814, 3
        %v4048 = vsel %vm1217, %v4046, %v4047
        %v4049 = vrot.slane %v3858, 3
        %v4050 = vsel %vm1217, %v4047, %v4049
        %v4051 = vrot.slane %v3851, 3
        %v4052 = vrot.slane %v3817, 3
        %v4053 = vsel %vm1217, %v4051, %v4052
        %v4054 = vrot.slane %v3859, 3
        %v4055 = vsel %vm1217, %v4052, %v4054
        %v4056 = vrot.slane %v3852, 3
        %v4057 = vrot.slane %v3820, 3
        %v4058 = vsel %vm1217, %v4056, %v4057
        %v4059 = vrot.slane %v3860, 3
        %v4060 = vsel %vm1217, %v4057, %v4059
        %4061 = vrot.lane.b32.xlu0 %v4023, 64
        %v4062 = vpop.permute.xlu0 %4061
        %4063 = vrot.lane.b32.xlu0 %v4025, 64
        %v4064 = vpop.permute.xlu0 %4063
        %4065 = vrot.lane.b32.xlu0 %v4028, 64
        %v4066 = vpop.permute.xlu0 %4065
        %4067 = vrot.lane.b32.xlu0 %v4030, 64
        %v4068 = vpop.permute.xlu0 %4067
        %4069 = vrot.lane.b32.xlu0 %v4033, 64
        %v4070 = vpop.permute.xlu0 %4069
        %4071 = vrot.lane.b32.xlu0 %v4035, 64
        %v4072 = vpop.permute.xlu0 %4071
        %4073 = vrot.lane.b32.xlu0 %v4038, 64
        %v4074 = vpop.permute.xlu0 %4073
        %4075 = vrot.lane.b32.xlu0 %v4040, 64
        %v4076 = vpop.permute.xlu0 %4075
        %4077 = vrot.lane.b32.xlu0 %v4043, 64
        %v4078 = vpop.permute.xlu0 %4077
        %4079 = vrot.lane.b32.xlu0 %v4045, 64
        %v4080 = vpop.permute.xlu0 %4079
        %4081 = vrot.lane.b32.xlu0 %v4048, 64
        %v4082 = vpop.permute.xlu0 %4081
        %4083 = vrot.lane.b32.xlu0 %v4050, 64
        %v4084 = vpop.permute.xlu0 %4083
        %4085 = vrot.lane.b32.xlu0 %v4053, 64
        %v4086 = vpop.permute.xlu0 %4085
        %4087 = vrot.lane.b32.xlu0 %v4055, 64
        %v4088 = vpop.permute.xlu0 %4087
        %4089 = vrot.lane.b32.xlu0 %v4058, 64
        %v4090 = vpop.permute.xlu0 %4089
        %4091 = vrot.lane.b32.xlu0 %v4060, 64
        %v4092 = vpop.permute.xlu0 %4091
        %v4109 = vrot.slane %v3845, 4
        %v4110 = vrot.slane %v3799, 4
        %v4111 = vsel %vm1306, %v4109, %v4110
        %v4112 = vrot.slane %v3853, 4
        %v4113 = vsel %vm1306, %v4110, %v4112
        %v4114 = vrot.slane %v3846, 4
        %v4115 = vrot.slane %v3802, 4
        %v4116 = vsel %vm1306, %v4114, %v4115
        %v4117 = vrot.slane %v3854, 4
        %v4118 = vsel %vm1306, %v4115, %v4117
        %v4119 = vrot.slane %v3847, 4
        %v4120 = vrot.slane %v3805, 4
        %v4121 = vsel %vm1306, %v4119, %v4120
        %v4122 = vrot.slane %v3855, 4
        %v4123 = vsel %vm1306, %v4120, %v4122
        %v4124 = vrot.slane %v3848, 4
        %v4125 = vrot.slane %v3808, 4
        %v4126 = vsel %vm1306, %v4124, %v4125
        %v4127 = vrot.slane %v3856, 4
        %v4128 = vsel %vm1306, %v4125, %v4127
        %v4129 = vrot.slane %v3849, 4
        %v4130 = vrot.slane %v3811, 4
        %v4131 = vsel %vm1306, %v4129, %v4130
        %v4132 = vrot.slane %v3857, 4
        %v4133 = vsel %vm1306, %v4130, %v4132
        %v4134 = vrot.slane %v3850, 4
        %v4135 = vrot.slane %v3814, 4
        %v4136 = vsel %vm1306, %v4134, %v4135
        %v4137 = vrot.slane %v3858, 4
        %v4138 = vsel %vm1306, %v4135, %v4137
        %v4139 = vrot.slane %v3851, 4
        %v4140 = vrot.slane %v3817, 4
        %v4141 = vsel %vm1306, %v4139, %v4140
        %v4142 = vrot.slane %v3859, 4
        %v4143 = vsel %vm1306, %v4140, %v4142
        %v4144 = vrot.slane %v3852, 4
        %v4145 = vrot.slane %v3820, 4
        %v4146 = vsel %vm1306, %v4144, %v4145
        %v4147 = vrot.slane %v3860, 4
        %v4148 = vsel %vm1306, %v4145, %v4147
        %v4149 = vsel %vm1347, %v3845, %v3918
        %v4150 = vsel %vm1347, %v3799, %v3920
        %v4151 = vsel %vm1347, %v3846, %v3922
        %v4152 = vsel %vm1347, %v3802, %v3924
        %v4153 = vsel %vm1347, %v3847, %v3926
        %v4154 = vsel %vm1347, %v3805, %v3928
        %v4155 = vsel %vm1347, %v3848, %v3930
        %v4156 = vsel %vm1347, %v3808, %v3932
        %v4157 = vsel %vm1347, %v3849, %v3934
        %v4158 = vsel %vm1347, %v3811, %v3936
        %v4159 = vsel %vm1347, %v3850, %v3938
        %v4160 = vsel %vm1347, %v3814, %v3940
        %v4161 = vsel %vm1347, %v3851, %v3942
        %v4162 = vsel %vm1347, %v3817, %v3944
        %v4163 = vsel %vm1347, %v3852, %v3946
        %v4164 = vsel %vm1347, %v3820, %v3948
        %v4165 = vsel %vm1347, %v3967, %v4062
        %v4166 = vsel %vm1347, %v3969, %v4064
        %v4167 = vsel %vm1347, %v3972, %v4066
        %v4168 = vsel %vm1347, %v3974, %v4068
        %v4169 = vsel %vm1347, %v3977, %v4070
        %v4170 = vsel %vm1347, %v3979, %v4072
        %v4171 = vsel %vm1347, %v3982, %v4074
        %v4172 = vsel %vm1347, %v3984, %v4076
        %v4173 = vsel %vm1347, %v3987, %v4078
        %v4174 = vsel %vm1347, %v3989, %v4080
        %v4175 = vsel %vm1347, %v3992, %v4082
        %v4176 = vsel %vm1347, %v3994, %v4084
        %v4177 = vsel %vm1347, %v3997, %v4086
        %v4178 = vsel %vm1347, %v3999, %v4088
        %v4179 = vsel %vm1347, %v4002, %v4090
        %v4180 = vsel %vm1347, %v4004, %v4092
        %s4181 = scalar_lea.vmem %s3, 640
        %v4182 = vld [vmem:[%s4181] sm:$0xff]
        %v4183 = vld [vmem:[%s4181 + $0x8] sm:$0xff]
        %v4184 = vld [vmem:[%s4181 + $0x10] sm:$0xff]
        %v4185 = vld [vmem:[%s4181 + $0x18] sm:$0xff]
        %v4186 = vld [vmem:[%s4181 + $0x20] sm:$0xff]
        %v4187 = vld [vmem:[%s4181 + $0x28] sm:$0xff]
        %v4188 = vld [vmem:[%s4181 + $0x30] sm:$0xff]
        %v4189 = vld [vmem:[%s4181 + $0x38] sm:$0xff]
        %v4190 = vld [vmem:[%s4181 + $0x40] sm:$0xff]
        %v4191 = vld [vmem:[%s4181 + $0x48] sm:$0xff]
        %v4192 = vld [vmem:[%s4181 + $0x50] sm:$0xff]
        %v4193 = vld [vmem:[%s4181 + $0x58] sm:$0xff]
        %v4194 = vld [vmem:[%s4181 + $0x60] sm:$0xff]
        %v4195 = vld [vmem:[%s4181 + $0x68] sm:$0xff]
        %v4196 = vld [vmem:[%s4181 + $0x70] sm:$0xff]
        %v4197 = vld [vmem:[%s4181 + $0x78] sm:$0xff]
        %v4198 = vld [vmem:[%s4181 + $0x80] sm:$0xff]
        %v4199 = vld [vmem:[%s4181 + $0x88] sm:$0xff]
        %v4200 = vld [vmem:[%s4181 + $0x90] sm:$0xff]
        %v4201 = vld [vmem:[%s4181 + $0x98] sm:$0xff]
        %v4202 = vld [vmem:[%s4181 + $0xa0] sm:$0xff]
        %v4203 = vld [vmem:[%s4181 + $0xa8] sm:$0xff]
        %v4204 = vld [vmem:[%s4181 + $0xb0] sm:$0xff]
        %v4205 = vld [vmem:[%s4181 + $0xb8] sm:$0xff]
        %v4206 = vld [vmem:[%s4181 + $0xc0] sm:$0xff]
        %v4207 = vld [vmem:[%s4181 + $0xc8] sm:$0xff]
        %v4208 = vld [vmem:[%s4181 + $0xd0] sm:$0xff]
        %v4209 = vld [vmem:[%s4181 + $0xd8] sm:$0xff]
        %v4210 = vld [vmem:[%s4181 + $0xe0] sm:$0xff]
        %v4211 = vld [vmem:[%s4181 + $0xe8] sm:$0xff]
        %v4212 = vld [vmem:[%s4181 + $0xf0] sm:$0xff]
        %v4213 = vld [vmem:[%s4181 + $0xf8] sm:$0xff]
        %v4214 = vld [vmem:[%s4181 + $0x100] sm:$0xff]
        %v4215 = vld [vmem:[%s4181 + $0x108] sm:$0xff]
        %v4216 = vld [vmem:[%s4181 + $0x110] sm:$0xff]
        %v4217 = vld [vmem:[%s4181 + $0x118] sm:$0xff]
        %v4218 = vld [vmem:[%s4181 + $0x120] sm:$0xff]
        %v4219 = vld [vmem:[%s4181 + $0x128] sm:$0xff]
        %v4220 = vld [vmem:[%s4181 + $0x130] sm:$0xff]
        %v4221 = vld [vmem:[%s4181 + $0x138] sm:$0xff]
        %s4222 = scalar_lea.vmem %s4, 2
        %v4223 = vld [vmem:[%s4222] sm:$0x1]
        %v4225 = vlaneseq
        %v4226 = vshrl.u32 %v4225, 7
        %v4227 = vsub.s32 0, %v4226
        %v4228 = vrot.slane %v4223, %v4227
        %v4230 = vsel %vm1347, %v4111, 0
        %v4232 = vsel %vm1347, %v4113, 0
        %v4234 = vsel %vm1347, %v4116, 0
        %v4236 = vsel %vm1347, %v4118, 0
        %v4238 = vsel %vm1347, %v4121, 0
        %v4240 = vsel %vm1347, %v4123, 0
        %v4242 = vsel %vm1347, %v4126, 0
        %v4244 = vsel %vm1347, %v4128, 0
        %v4246 = vsel %vm1347, %v4131, 0
        %v4248 = vsel %vm1347, %v4133, 0
        %v4250 = vsel %vm1347, %v4136, 0
        %v4252 = vsel %vm1347, %v4138, 0
        %v4254 = vsel %vm1347, %v4141, 0
        %v4256 = vsel %vm1347, %v4143, 0
        %v4258 = vsel %vm1347, %v4146, 0
        %v4260 = vsel %vm1347, %v4148, 0
        %4262 = vmatprep.subr.mxu0 0.0
        %4263 = vmatpush1.msra.mxu0 %v4182
        %4264 = vmatprep.subr.mxu0 0.0
        %4265 = vmatpush1.msra.mxu0 %v4183
        %4266 = vmatprep.subr.mxu0 0.0
        %4267 = vmatpush1.msra.mxu0 %v4184
        %4268 = vmatprep.subr.mxu0 0.0
        %4269 = vmatpush1.msra.mxu0 %v4185
        %4270 = vmatprep.subr.mxu0 0.0
        %4271 = vmatpush1.msra.mxu0 %v4186
        %4272 = vmatprep.subr.mxu0 0.0
        %4273 = vmatpush1.msra.mxu0 %v4187
        %4274 = vmatprep.subr.mxu0 0.0
        %4275 = vmatpush1.msra.mxu0 %v4188
        %4276 = vmatprep.subr.mxu0 0.0
        %4277 = vmatpush1.msra.mxu0 %v4189
        %4278 = vmatprep.subr.mxu0 0.0
        %4279 = vmatpush1.msra.mxu0 %v4190
        %4280 = vmatprep.subr.mxu0 0.0
        %4281 = vmatpush1.msra.mxu0 %v4191
        %4282 = vmatprep.subr.mxu0 0.0
        %4283 = vmatpush1.msra.mxu0 %v4192
        %4284 = vmatprep.subr.mxu0 0.0
        %4285 = vmatpush1.msra.mxu0 %v4193
        %4286 = vmatprep.subr.mxu0 0.0
        %4287 = vmatpush1.msra.mxu0 %v4194
        %4288 = vmatprep.subr.mxu0 0.0
        %4289 = vmatpush1.msra.mxu0 %v4195
        %4290 = vmatprep.subr.mxu0 0.0
        %4291 = vmatpush1.msra.mxu0 %v4196
        %4292 = vmatprep.subr.mxu0 0.0
        %4293 = vmatpush1.msra.mxu0 %v4197
        %4294 = vmatprep.subr.mxu0 0.0
        %4295 = vmatpush1.msra.mxu0 %v4198
        %4296 = vmatprep.subr.mxu0 0.0
        %4297 = vmatpush1.msra.mxu0 %v4199
        %4298 = vmatprep.subr.mxu0 0.0
        %4299 = vmatpush1.msra.mxu0 %v4200
        %4300 = vmatprep.subr.mxu0 0.0
        %4301 = vmatpush1.msra.mxu0 %v4201
        %4302 = vmatprep.subr.mxu0 0.0
        %4303 = vmatpush1.msra.mxu0 %v4202
        %4304 = vmatprep.subr.mxu0 0.0
        %4305 = vmatpush1.msra.mxu0 %v4203
        %4306 = vmatprep.subr.mxu0 0.0
        %4307 = vmatpush1.msra.mxu0 %v4204
        %4308 = vmatprep.subr.mxu0 0.0
        %4309 = vmatpush1.msra.mxu0 %v4205
        %4310 = vmatprep.subr.mxu0 0.0
        %4311 = vmatpush1.msra.mxu0 %v4206
        %4312 = vmatprep.subr.mxu0 0.0
        %4313 = vmatpush1.msra.mxu0 %v4207
        %4314 = vmatprep.subr.mxu0 0.0
        %4315 = vmatpush1.msra.mxu0 %v4208
        %4316 = vmatprep.subr.mxu0 0.0
        %4317 = vmatpush1.msra.mxu0 %v4209
        %4318 = vmatprep.subr.mxu0 0.0
        %4319 = vmatpush1.msra.mxu0 %v4210
        %4320 = vmatprep.subr.mxu0 0.0
        %4321 = vmatpush1.msra.mxu0 %v4211
        %4322 = vmatprep.subr.mxu0 0.0
        %4323 = vmatpush1.msra.mxu0 %v4212
        %4324 = vmatprep.subr.mxu0 0.0
        %4325 = vmatpush1.msra.mxu0 %v4213
        %4326 = vmatprep.mubr.f32.mxu0 %v4165
        %4327 = vmatmul.mubr.f32.gmra.mrb[0].mxu0 %v4149
        %v4328 = vpop.f32.mrb[0].mxu0
        %v4329 = vadd.f32 %v4228, %v4328
        %v4330 = vpop.f32.mrb[0].mxu0
        %4331 = vmatprep.mubr.f32.mxu0 %v4166
        %4332 = vmatmul.mubr.f32.gmra.mrb[0].mxu0 %v4150
        %v4333 = vpop.f32.mrb[0].mxu0
        %v4334 = vadd.f32 %v4228, %v4333
        %v4335 = vpop.f32.mrb[0].mxu0
        %4336 = vmatprep.mubr.f32.mxu0 %v4167
        %4337 = vmatmul.mubr.f32.gmra.mrb[0].mxu0 %v4151
        %v4338 = vpop.f32.mrb[0].mxu0
        %v4339 = vadd.f32 %v4228, %v4338
        %v4340 = vpop.f32.mrb[0].mxu0
        %4341 = vmatprep.mubr.f32.mxu0 %v4168
        %4342 = vmatmul.mubr.f32.gmra.mrb[0].mxu0 %v4152
        %v4343 = vpop.f32.mrb[0].mxu0
        %v4344 = vadd.f32 %v4228, %v4343
        %v4345 = vpop.f32.mrb[0].mxu0
        %4346 = vmatprep.mubr.f32.mxu0 %v4169
        %4347 = vmatmul.mubr.f32.gmra.mrb[0].mxu0 %v4153
        %v4348 = vpop.f32.mrb[0].mxu0
        %v4349 = vadd.f32 %v4228, %v4348
        %v4350 = vpop.f32.mrb[0].mxu0
        %4351 = vmatprep.mubr.f32.mxu0 %v4170
        %4352 = vmatmul.mubr.f32.gmra.mrb[0].mxu0 %v4154
        %v4353 = vpop.f32.mrb[0].mxu0
        %v4354 = vadd.f32 %v4228, %v4353
        %v4355 = vpop.f32.mrb[0].mxu0
        %4356 = vmatprep.mubr.f32.mxu0 %v4171
        %4357 = vmatmul.mubr.f32.gmra.mrb[0].mxu0 %v4155
        %v4358 = vpop.f32.mrb[0].mxu0
        %v4359 = vadd.f32 %v4228, %v4358
        %v4360 = vpop.f32.mrb[0].mxu0
        %4361 = vmatprep.mubr.f32.mxu0 %v4172
        %4362 = vmatmul.mubr.f32.gmra.mrb[0].mxu0 %v4156
        %v4363 = vpop.f32.mrb[0].mxu0
        %v4364 = vadd.f32 %v4228, %v4363
        %v4365 = vpop.f32.mrb[0].mxu0
        %4366 = vmatprep.mubr.f32.mxu0 %v4173
        %4367 = vmatmul.mubr.f32.gmra.mrb[0].mxu0 %v4157
        %v4368 = vpop.f32.mrb[0].mxu0
        %v4369 = vadd.f32 %v4228, %v4368
        %v4370 = vpop.f32.mrb[0].mxu0
        %4371 = vmatprep.mubr.f32.mxu0 %v4174
        %4372 = vmatmul.mubr.f32.gmra.mrb[0].mxu0 %v4158
        %v4373 = vpop.f32.mrb[0].mxu0
        %v4374 = vadd.f32 %v4228, %v4373
        %v4375 = vpop.f32.mrb[0].mxu0
        %4376 = vmatprep.mubr.f32.mxu0 %v4175
        %4377 = vmatmul.mubr.f32.gmra.mrb[0].mxu0 %v4159
        %v4378 = vpop.f32.mrb[0].mxu0
        %v4379 = vadd.f32 %v4228, %v4378
        %v4380 = vpop.f32.mrb[0].mxu0
        %4381 = vmatprep.mubr.f32.mxu0 %v4176
        %4382 = vmatmul.mubr.f32.gmra.mrb[0].mxu0 %v4160
        %v4383 = vpop.f32.mrb[0].mxu0
        %v4384 = vadd.f32 %v4228, %v4383
        %v4385 = vpop.f32.mrb[0].mxu0
        %4386 = vmatprep.mubr.f32.mxu0 %v4177
        %4387 = vmatmul.mubr.f32.gmra.mrb[0].mxu0 %v4161
        %v4388 = vpop.f32.mrb[0].mxu0
        %v4389 = vadd.f32 %v4228, %v4388
        %v4390 = vpop.f32.mrb[0].mxu0
        %4391 = vmatprep.mubr.f32.mxu0 %v4178
        %4392 = vmatmul.mubr.f32.gmra.mrb[0].mxu0 %v4162
        %v4393 = vpop.f32.mrb[0].mxu0
        %v4394 = vadd.f32 %v4228, %v4393
        %v4395 = vpop.f32.mrb[0].mxu0
        %4396 = vmatprep.mubr.f32.mxu0 %v4179
        %4397 = vmatmul.mubr.f32.gmra.mrb[0].mxu0 %v4163
        %v4398 = vpop.f32.mrb[0].mxu0
        %v4399 = vadd.f32 %v4228, %v4398
        %v4400 = vpop.f32.mrb[0].mxu0
        %4401 = vmatprep.mubr.f32.mxu0 %v4180
        %4402 = vmatmul.mubr.f32.gmra.mrb[0].mxu0 %v4164
        %v4403 = vpop.f32.mrb[0].mxu0
        %v4404 = vadd.f32 %v4228, %v4403
        %v4405 = vpop.f32.mrb[0].mxu0
        %4406 = vdwg.mxu0
        %4407 = vmatprep.subr.mxu0 0.0
        %4408 = vmatpush1.msra.mxu0 %v4214
        %4409 = vmatprep.subr.mxu0 0.0
        %4410 = vmatpush1.msra.mxu0 %v4215
        %4411 = vmatprep.subr.mxu0 0.0
        %4412 = vmatpush1.msra.mxu0 %v4216
        %4413 = vmatprep.subr.mxu0 0.0
        %4414 = vmatpush1.msra.mxu0 %v4217
        %4415 = vmatprep.subr.mxu0 0.0
        %4416 = vmatpush1.msra.mxu0 %v4218
        %4417 = vmatprep.subr.mxu0 0.0
        %4418 = vmatpush1.msra.mxu0 %v4219
        %4419 = vmatprep.subr.mxu0 0.0
        %4420 = vmatpush1.msra.mxu0 %v4220
        %4421 = vmatprep.subr.mxu0 0.0
        %4422 = vmatpush1.msra.mxu0 %v4221
        %4423 = vmatprep.subr.mxu0 0.0
        %4424 = vmatpush1.msra.mxu0 0.0
        %4425 = vmatprep.subr.mxu0 0.0
        %4426 = vmatpush1.msra.mxu0 0.0
        %4427 = vmatprep.subr.mxu0 0.0
        %4428 = vmatpush1.msra.mxu0 0.0
        %4429 = vmatprep.subr.mxu0 0.0
        %4430 = vmatpush1.msra.mxu0 0.0
        %4431 = vmatprep.subr.mxu0 0.0
        %4432 = vmatpush1.msra.mxu0 0.0
        %4433 = vmatprep.subr.mxu0 0.0
        %4434 = vmatpush1.msra.mxu0 0.0
        %4435 = vmatprep.subr.mxu0 0.0
        %4436 = vmatpush1.msra.mxu0 0.0
        %4437 = vmatprep.subr.mxu0 0.0
        %4438 = vmatpush1.msra.mxu0 0.0
        %4439 = vmatprep.subr.mxu0 0.0
        %4440 = vmatpush1.msra.mxu0 0.0
        %4441 = vmatprep.subr.mxu0 0.0
        %4442 = vmatpush1.msra.mxu0 0.0
        %4443 = vmatprep.subr.mxu0 0.0
        %4444 = vmatpush1.msra.mxu0 0.0
        %4445 = vmatprep.subr.mxu0 0.0
        %4446 = vmatpush1.msra.mxu0 0.0
        %4447 = vmatprep.subr.mxu0 0.0
        %4448 = vmatpush1.msra.mxu0 0.0
        %4449 = vmatprep.subr.mxu0 0.0
        %4450 = vmatpush1.msra.mxu0 0.0
        %4451 = vmatprep.subr.mxu0 0.0
        %4452 = vmatpush1.msra.mxu0 0.0
        %4453 = vmatprep.subr.mxu0 0.0
        %4454 = vmatpush1.msra.mxu0 0.0
        %4455 = vmatprep.subr.mxu0 0.0
        %4456 = vmatpush1.msra.mxu0 0.0
        %4457 = vmatprep.subr.mxu0 0.0
        %4458 = vmatpush1.msra.mxu0 0.0
        %4459 = vmatprep.subr.mxu0 0.0
        %4460 = vmatpush1.msra.mxu0 0.0
        %4461 = vmatprep.subr.mxu0 0.0
        %4462 = vmatpush1.msra.mxu0 0.0
        %4463 = vmatprep.subr.mxu0 0.0
        %4464 = vmatpush1.msra.mxu0 0.0
        %4465 = vmatprep.subr.mxu0 0.0
        %4466 = vmatpush1.msra.mxu0 0.0
        %4467 = vmatprep.subr.mxu0 0.0
        %4468 = vmatpush1.msra.mxu0 0.0
        %4469 = vmatprep.subr.mxu0 0.0
        %4470 = vmatpush1.msra.mxu0 0.0
        %4471 = vmatprep.mubr.f32.mxu0 0.0
        %4472 = vmatmul.mubr.f32.gmra.mrb[0].mxu0 %v4230
        %v4473 = vpop.f32.mrb[0].mxu0
        %v4474 = vadd.f32 %v4329, %v4473
        %v4475 = vpop.f32.mrb[0].mxu0
        %4476 = vmatprep.mubr.f32.mxu0 0.0
        %4477 = vmatmul.mubr.f32.gmra.mrb[0].mxu0 %v4232
        %v4478 = vpop.f32.mrb[0].mxu0
        %v4479 = vadd.f32 %v4334, %v4478
        %v4480 = vpop.f32.mrb[0].mxu0
        %4481 = vmatprep.mubr.f32.mxu0 0.0
        %4482 = vmatmul.mubr.f32.gmra.mrb[0].mxu0 %v4234
        %v4483 = vpop.f32.mrb[0].mxu0
        %v4484 = vadd.f32 %v4339, %v4483
        %v4485 = vpop.f32.mrb[0].mxu0
        %4486 = vmatprep.mubr.f32.mxu0 0.0
        %4487 = vmatmul.mubr.f32.gmra.mrb[0].mxu0 %v4236
        %v4488 = vpop.f32.mrb[0].mxu0
        %v4489 = vadd.f32 %v4344, %v4488
        %v4490 = vpop.f32.mrb[0].mxu0
        %4491 = vmatprep.mubr.f32.mxu0 0.0
        %4492 = vmatmul.mubr.f32.gmra.mrb[0].mxu0 %v4238
        %v4493 = vpop.f32.mrb[0].mxu0
        %v4494 = vadd.f32 %v4349, %v4493
        %v4495 = vpop.f32.mrb[0].mxu0
        %4496 = vmatprep.mubr.f32.mxu0 0.0
        %4497 = vmatmul.mubr.f32.gmra.mrb[0].mxu0 %v4240
        %v4498 = vpop.f32.mrb[0].mxu0
        %v4499 = vadd.f32 %v4354, %v4498
        %v4500 = vpop.f32.mrb[0].mxu0
        %4501 = vmatprep.mubr.f32.mxu0 0.0
        %4502 = vmatmul.mubr.f32.gmra.mrb[0].mxu0 %v4242
        %v4503 = vpop.f32.mrb[0].mxu0
        %v4504 = vadd.f32 %v4359, %v4503
        %v4505 = vpop.f32.mrb[0].mxu0
        %4506 = vmatprep.mubr.f32.mxu0 0.0
        %4507 = vmatmul.mubr.f32.gmra.mrb[0].mxu0 %v4244
        %v4508 = vpop.f32.mrb[0].mxu0
        %v4509 = vadd.f32 %v4364, %v4508
        %v4510 = vpop.f32.mrb[0].mxu0
        %4511 = vmatprep.mubr.f32.mxu0 0.0
        %4512 = vmatmul.mubr.f32.gmra.mrb[0].mxu0 %v4246
        %v4513 = vpop.f32.mrb[0].mxu0
        %v4514 = vadd.f32 %v4369, %v4513
        %v4515 = vpop.f32.mrb[0].mxu0
        %4516 = vmatprep.mubr.f32.mxu0 0.0
        %4517 = vmatmul.mubr.f32.gmra.mrb[0].mxu0 %v4248
        %v4518 = vpop.f32.mrb[0].mxu0
        %v4519 = vadd.f32 %v4374, %v4518
        %v4520 = vpop.f32.mrb[0].mxu0
        %4521 = vmatprep.mubr.f32.mxu0 0.0
        %4522 = vmatmul.mubr.f32.gmra.mrb[0].mxu0 %v4250
        %v4523 = vpop.f32.mrb[0].mxu0
        %v4524 = vadd.f32 %v4379, %v4523
        %v4525 = vpop.f32.mrb[0].mxu0
        %4526 = vmatprep.mubr.f32.mxu0 0.0
        %4527 = vmatmul.mubr.f32.gmra.mrb[0].mxu0 %v4252
        %v4528 = vpop.f32.mrb[0].mxu0
        %v4529 = vadd.f32 %v4384, %v4528
        %v4530 = vpop.f32.mrb[0].mxu0
        %4531 = vmatprep.mubr.f32.mxu0 0.0
        %4532 = vmatmul.mubr.f32.gmra.mrb[0].mxu0 %v4254
        %v4533 = vpop.f32.mrb[0].mxu0
        %v4534 = vadd.f32 %v4389, %v4533
        %v4535 = vpop.f32.mrb[0].mxu0
        %4536 = vmatprep.mubr.f32.mxu0 0.0
        %4537 = vmatmul.mubr.f32.gmra.mrb[0].mxu0 %v4256
        %v4538 = vpop.f32.mrb[0].mxu0
        %v4539 = vadd.f32 %v4394, %v4538
        %v4540 = vpop.f32.mrb[0].mxu0
        %4541 = vmatprep.mubr.f32.mxu0 0.0
        %4542 = vmatmul.mubr.f32.gmra.mrb[0].mxu0 %v4258
        %v4543 = vpop.f32.mrb[0].mxu0
        %v4544 = vadd.f32 %v4399, %v4543
        %v4545 = vpop.f32.mrb[0].mxu0
        %4546 = vmatprep.mubr.f32.mxu0 0.0
        %4547 = vmatmul.mubr.f32.gmra.mrb[0].mxu0 %v4260
        %v4548 = vpop.f32.mrb[0].mxu0
        %v4549 = vadd.f32 %v4404, %v4548
        %v4550 = vpop.f32.mrb[0].mxu0
        %4551 = vdwg.mxu0
        %v4552 = vmax.f32 %v4474, 0.0
        %v4553 = vmax.f32 %v4479, 0.0
        %v4554 = vmax.f32 %v4484, 0.0
        %v4555 = vmax.f32 %v4489, 0.0
        %v4556 = vmax.f32 %v4494, 0.0
        %v4557 = vmax.f32 %v4499, 0.0
        %v4558 = vmax.f32 %v4504, 0.0
        %v4559 = vmax.f32 %v4509, 0.0
        %v4560 = vmax.f32 %v4514, 0.0
        %v4561 = vmax.f32 %v4519, 0.0
        %v4562 = vmax.f32 %v4524, 0.0
        %v4563 = vmax.f32 %v4529, 0.0
        %v4564 = vmax.f32 %v4534, 0.0
        %v4565 = vmax.f32 %v4539, 0.0
        %v4566 = vmax.f32 %v4544, 0.0
        %v4567 = vmax.f32 %v4549, 0.0
        %s4568 = scalar_lea.vmem %s5, 2
        %v4569 = vld [vmem:[%s4568] sm:$0x1]
        %v4571 = vlaneseq
        %v4572 = vshrl.u32 %v4571, 7
        %v4573 = vsub.s32 0, %v4572
        %v4574 = vrot.slane %v4569, %v4573
        %v4576 = vmul.f32 %v4552, %v4574
        %v4577 = vmul.f32 %v4553, %v4574
        %v4578 = vmul.f32 %v4554, %v4574
        %v4579 = vmul.f32 %v4555, %v4574
        %v4580 = vmul.f32 %v4556, %v4574
        %v4581 = vmul.f32 %v4557, %v4574
        %v4582 = vmul.f32 %v4558, %v4574
        %v4583 = vmul.f32 %v4559, %v4574
        %v4584 = vmul.f32 %v4560, %v4574
        %v4585 = vmul.f32 %v4561, %v4574
        %v4586 = vmul.f32 %v4562, %v4574
        %v4587 = vmul.f32 %v4563, %v4574
        %v4588 = vmul.f32 %v4564, %v4574
        %v4589 = vmul.f32 %v4565, %v4574
        %v4590 = vmul.f32 %v4566, %v4574
        %v4591 = vmul.f32 %v4567, %v4574
        %v4592 = vsel %vm1347, %v4576, 0.0
        %4593 = vadd.xlane.f32.xlu0 %v4592
        %v4594 = vpop.xlane.xlu0 %4593
        %v4595 = vsel %vm1347, %v4577, 0.0
        %4596 = vadd.xlane.f32.xlu0 %v4595
        %v4597 = vpop.xlane.xlu0 %4596
        %v4598 = vsel %vm1347, %v4578, 0.0
        %4599 = vadd.xlane.f32.xlu0 %v4598
        %v4600 = vpop.xlane.xlu0 %4599
        %v4601 = vsel %vm1347, %v4579, 0.0
        %4602 = vadd.xlane.f32.xlu0 %v4601
        %v4603 = vpop.xlane.xlu0 %4602
        %v4604 = vsel %vm1347, %v4580, 0.0
        %4605 = vadd.xlane.f32.xlu0 %v4604
        %v4606 = vpop.xlane.xlu0 %4605
        %v4607 = vsel %vm1347, %v4581, 0.0
        %4608 = vadd.xlane.f32.xlu0 %v4607
        %v4609 = vpop.xlane.xlu0 %4608
        %v4610 = vsel %vm1347, %v4582, 0.0
        %4611 = vadd.xlane.f32.xlu0 %v4610
        %v4612 = vpop.xlane.xlu0 %4611
        %v4613 = vsel %vm1347, %v4583, 0.0
        %4614 = vadd.xlane.f32.xlu0 %v4613
        %v4615 = vpop.xlane.xlu0 %4614
        %v4616 = vsel %vm1347, %v4584, 0.0
        %4617 = vadd.xlane.f32.xlu0 %v4616
        %v4618 = vpop.xlane.xlu0 %4617
        %v4619 = vsel %vm1347, %v4585, 0.0
        %4620 = vadd.xlane.f32.xlu0 %v4619
        %v4621 = vpop.xlane.xlu0 %4620
        %v4622 = vsel %vm1347, %v4586, 0.0
        %4623 = vadd.xlane.f32.xlu0 %v4622
        %v4624 = vpop.xlane.xlu0 %4623
        %v4625 = vsel %vm1347, %v4587, 0.0
        %4626 = vadd.xlane.f32.xlu0 %v4625
        %v4627 = vpop.xlane.xlu0 %4626
        %v4628 = vsel %vm1347, %v4588, 0.0
        %4629 = vadd.xlane.f32.xlu0 %v4628
        %v4630 = vpop.xlane.xlu0 %4629
        %v4631 = vsel %vm1347, %v4589, 0.0
        %4632 = vadd.xlane.f32.xlu0 %v4631
        %v4633 = vpop.xlane.xlu0 %4632
        %v4634 = vsel %vm1347, %v4590, 0.0
        %4635 = vadd.xlane.f32.xlu0 %v4634
        %v4636 = vpop.xlane.xlu0 %4635
        %v4637 = vsel %vm1347, %v4591, 0.0
        %4638 = vadd.xlane.f32.xlu0 %v4637
        %v4639 = vpop.xlane.xlu0 %4638
        %v4640 = vmax.f32 %v4594, %v4597
        %v4641 = vrot.slane %v4640, 4
        %v4642 = vmax.f32 %v4640, %v4641
        %v4643 = vrot.slane %v4642, 2
        %v4644 = vmax.f32 %v4642, %v4643
        %v4645 = vrot.slane %v4644, 1
        %v4646 = vmax.f32 %v4644, %v4645
        %v4647 = vmax.f32 %v4600, %v4603
        %v4648 = vrot.slane %v4647, 4
        %v4649 = vmax.f32 %v4647, %v4648
        %v4650 = vrot.slane %v4649, 2
        %v4651 = vmax.f32 %v4649, %v4650
        %v4652 = vrot.slane %v4651, 1
        %v4653 = vmax.f32 %v4651, %v4652
        %v4654 = vmax.f32 %v4606, %v4609
        %v4655 = vrot.slane %v4654, 4
        %v4656 = vmax.f32 %v4654, %v4655
        %v4657 = vrot.slane %v4656, 2
        %v4658 = vmax.f32 %v4656, %v4657
        %v4659 = vrot.slane %v4658, 1
        %v4660 = vmax.f32 %v4658, %v4659
        %v4661 = vmax.f32 %v4612, %v4615
        %v4662 = vrot.slane %v4661, 4
        %v4663 = vmax.f32 %v4661, %v4662
        %v4664 = vrot.slane %v4663, 2
        %v4665 = vmax.f32 %v4663, %v4664
        %v4666 = vrot.slane %v4665, 1
        %v4667 = vmax.f32 %v4665, %v4666
        %v4668 = vmax.f32 %v4618, %v4621
        %v4669 = vrot.slane %v4668, 4
        %v4670 = vmax.f32 %v4668, %v4669
        %v4671 = vrot.slane %v4670, 2
        %v4672 = vmax.f32 %v4670, %v4671
        %v4673 = vrot.slane %v4672, 1
        %v4674 = vmax.f32 %v4672, %v4673
        %v4675 = vmax.f32 %v4624, %v4627
        %v4676 = vrot.slane %v4675, 4
        %v4677 = vmax.f32 %v4675, %v4676
        %v4678 = vrot.slane %v4677, 2
        %v4679 = vmax.f32 %v4677, %v4678
        %v4680 = vrot.slane %v4679, 1
        %v4681 = vmax.f32 %v4679, %v4680
        %v4682 = vmax.f32 %v4630, %v4633
        %v4683 = vrot.slane %v4682, 4
        %v4684 = vmax.f32 %v4682, %v4683
        %v4685 = vrot.slane %v4684, 2
        %v4686 = vmax.f32 %v4684, %v4685
        %v4687 = vrot.slane %v4686, 1
        %v4688 = vmax.f32 %v4686, %v4687
        %v4689 = vmax.f32 %v4636, %v4639
        %v4690 = vrot.slane %v4689, 4
        %v4691 = vmax.f32 %v4689, %v4690
        %v4692 = vrot.slane %v4691, 2
        %v4693 = vmax.f32 %v4691, %v4692
        %v4694 = vrot.slane %v4693, 1
        %v4695 = vmax.f32 %v4693, %v4694
        %v4696 = vsub.f32 %v4594, %v4646
        %v4697 = vsub.f32 %v4597, %v4646
        %v4698 = vsub.f32 %v4600, %v4653
        %v4699 = vsub.f32 %v4603, %v4653
        %v4700 = vsub.f32 %v4606, %v4660
        %v4701 = vsub.f32 %v4609, %v4660
        %v4702 = vsub.f32 %v4612, %v4667
        %v4703 = vsub.f32 %v4615, %v4667
        %v4704 = vsub.f32 %v4618, %v4674
        %v4705 = vsub.f32 %v4621, %v4674
        %v4706 = vsub.f32 %v4624, %v4681
        %v4707 = vsub.f32 %v4627, %v4681
        %v4708 = vsub.f32 %v4630, %v4688
        %v4709 = vsub.f32 %v4633, %v4688
        %v4710 = vsub.f32 %v4636, %v4695
        %v4711 = vsub.f32 %v4639, %v4695
        %v4712 = vmul.f32 %v4696, 1.442695
        %v4713 = vpow.pop %v4712
        %v4714 = vmul.f32 %v4697, 1.442695
        %v4715 = vpow.pop %v4714
        %v4716 = vmul.f32 %v4698, 1.442695
        %v4717 = vpow.pop %v4716
        %v4718 = vmul.f32 %v4699, 1.442695
        %v4719 = vpow.pop %v4718
        %v4720 = vmul.f32 %v4700, 1.442695
        %v4721 = vpow.pop %v4720
        %v4722 = vmul.f32 %v4701, 1.442695
        %v4723 = vpow.pop %v4722
        %v4724 = vmul.f32 %v4702, 1.442695
        %v4725 = vpow.pop %v4724
        %v4726 = vmul.f32 %v4703, 1.442695
        %v4727 = vpow.pop %v4726
        %v4728 = vmul.f32 %v4704, 1.442695
        %v4729 = vpow.pop %v4728
        %v4730 = vmul.f32 %v4705, 1.442695
        %v4731 = vpow.pop %v4730
        %v4732 = vmul.f32 %v4706, 1.442695
        %v4733 = vpow.pop %v4732
        %v4734 = vmul.f32 %v4707, 1.442695
        %v4735 = vpow.pop %v4734
        %v4736 = vmul.f32 %v4708, 1.442695
        %v4737 = vpow.pop %v4736
        %v4738 = vmul.f32 %v4709, 1.442695
        %v4739 = vpow.pop %v4738
        %v4740 = vmul.f32 %v4710, 1.442695
        %v4741 = vpow.pop %v4740
        %v4742 = vmul.f32 %v4711, 1.442695
        %v4743 = vpow.pop %v4742
        %v4744 = vadd.f32 %v4713, %v4715
        %v4745 = vrot.slane %v4744, 4
        %v4746 = vadd.f32 %v4744, %v4745
        %v4747 = vrot.slane %v4746, 2
        %v4748 = vadd.f32 %v4746, %v4747
        %v4749 = vrot.slane %v4748, 1
        %v4750 = vadd.f32 %v4748, %v4749
        %v4751 = vadd.f32 %v4717, %v4719
        %v4752 = vrot.slane %v4751, 4
        %v4753 = vadd.f32 %v4751, %v4752
        %v4754 = vrot.slane %v4753, 2
        %v4755 = vadd.f32 %v4753, %v4754
        %v4756 = vrot.slane %v4755, 1
        %v4757 = vadd.f32 %v4755, %v4756
        %v4758 = vadd.f32 %v4721, %v4723
        %v4759 = vrot.slane %v4758, 4
        %v4760 = vadd.f32 %v4758, %v4759
        %v4761 = vrot.slane %v4760, 2
        %v4762 = vadd.f32 %v4760, %v4761
        %v4763 = vrot.slane %v4762, 1
        %v4764 = vadd.f32 %v4762, %v4763
        %v4765 = vadd.f32 %v4725, %v4727
        %v4766 = vrot.slane %v4765, 4
        %v4767 = vadd.f32 %v4765, %v4766
        %v4768 = vrot.slane %v4767, 2
        %v4769 = vadd.f32 %v4767, %v4768
        %v4770 = vrot.slane %v4769, 1
        %v4771 = vadd.f32 %v4769, %v4770
        %v4772 = vadd.f32 %v4729, %v4731
        %v4773 = vrot.slane %v4772, 4
        %v4774 = vadd.f32 %v4772, %v4773
        %v4775 = vrot.slane %v4774, 2
        %v4776 = vadd.f32 %v4774, %v4775
        %v4777 = vrot.slane %v4776, 1
        %v4778 = vadd.f32 %v4776, %v4777
        %v4779 = vadd.f32 %v4733, %v4735
        %v4780 = vrot.slane %v4779, 4
        %v4781 = vadd.f32 %v4779, %v4780
        %v4782 = vrot.slane %v4781, 2
        %v4783 = vadd.f32 %v4781, %v4782
        %v4784 = vrot.slane %v4783, 1
        %v4785 = vadd.f32 %v4783, %v4784
        %v4786 = vadd.f32 %v4737, %v4739
        %v4787 = vrot.slane %v4786, 4
        %v4788 = vadd.f32 %v4786, %v4787
        %v4789 = vrot.slane %v4788, 2
        %v4790 = vadd.f32 %v4788, %v4789
        %v4791 = vrot.slane %v4790, 1
        %v4792 = vadd.f32 %v4790, %v4791
        %v4793 = vadd.f32 %v4741, %v4743
        %v4794 = vrot.slane %v4793, 4
        %v4795 = vadd.f32 %v4793, %v4794
        %v4796 = vrot.slane %v4795, 2
        %v4797 = vadd.f32 %v4795, %v4796
        %v4798 = vrot.slane %v4797, 1
        %v4799 = vadd.f32 %v4797, %v4798
        %v4800 = vrcp.pop %v4750
        %v4801 = vrcp.pop %v4757
        %v4802 = vrcp.pop %v4764
        %v4803 = vrcp.pop %v4771
        %v4804 = vrcp.pop %v4778
        %v4805 = vrcp.pop %v4785
        %v4806 = vrcp.pop %v4792
        %v4807 = vrcp.pop %v4799
        %v4808 = vmul.f32 %v4713, %v4800
        %v4809 = vmul.f32 %v4715, %v4800
        %v4810 = vmul.f32 %v4717, %v4801
        %v4811 = vmul.f32 %v4719, %v4801
        %v4812 = vmul.f32 %v4721, %v4802
        %v4813 = vmul.f32 %v4723, %v4802
        %v4814 = vmul.f32 %v4725, %v4803
        %v4815 = vmul.f32 %v4727, %v4803
        %v4816 = vmul.f32 %v4729, %v4804
        %v4817 = vmul.f32 %v4731, %v4804
        %v4818 = vmul.f32 %v4733, %v4805
        %v4819 = vmul.f32 %v4735, %v4805
        %v4820 = vmul.f32 %v4737, %v4806
        %v4821 = vmul.f32 %v4739, %v4806
        %v4822 = vmul.f32 %v4741, %v4807
        %v4823 = vmul.f32 %v4743, %v4807
        %v4824 = vmul.f32 %v4552, %v4808
        %v4825 = vmul.f32 %v4553, %v4809
        %v4826 = vmul.f32 %v4554, %v4810
        %v4827 = vmul.f32 %v4555, %v4811
        %v4828 = vmul.f32 %v4556, %v4812
        %v4829 = vmul.f32 %v4557, %v4813
        %v4830 = vmul.f32 %v4558, %v4814
        %v4831 = vmul.f32 %v4559, %v4815
        %v4832 = vmul.f32 %v4560, %v4816
        %v4833 = vmul.f32 %v4561, %v4817
        %v4834 = vmul.f32 %v4562, %v4818
        %v4835 = vmul.f32 %v4563, %v4819
        %v4836 = vmul.f32 %v4564, %v4820
        %v4837 = vmul.f32 %v4565, %v4821
        %v4838 = vmul.f32 %v4566, %v4822
        %v4839 = vmul.f32 %v4567, %v4823
        %v4840 = vsel %vm1347, %v4824, 0.0
        %v4841 = vsel %vm1347, %v4825, 0.0
        %v4842 = vadd.f32 %v4840, %v4841
        %v4843 = vrot.slane %v4842, 4
        %v4844 = vadd.f32 %v4842, %v4843
        %v4845 = vrot.slane %v4844, 2
        %v4846 = vadd.f32 %v4844, %v4845
        %v4847 = vrot.slane %v4846, 1
        %v4848 = vadd.f32 %v4846, %v4847
        %v4849 = vsel %vm1347, %v4826, 0.0
        %v4850 = vsel %vm1347, %v4827, 0.0
        %v4851 = vadd.f32 %v4849, %v4850
        %v4852 = vrot.slane %v4851, 4
        %v4853 = vadd.f32 %v4851, %v4852
        %v4854 = vrot.slane %v4853, 2
        %v4855 = vadd.f32 %v4853, %v4854
        %v4856 = vrot.slane %v4855, 1
        %v4857 = vadd.f32 %v4855, %v4856
        %v4858 = vsel %vm1347, %v4828, 0.0
        %v4859 = vsel %vm1347, %v4829, 0.0
        %v4860 = vadd.f32 %v4858, %v4859
        %v4861 = vrot.slane %v4860, 4
        %v4862 = vadd.f32 %v4860, %v4861
        %v4863 = vrot.slane %v4862, 2
        %v4864 = vadd.f32 %v4862, %v4863
        %v4865 = vrot.slane %v4864, 1
        %v4866 = vadd.f32 %v4864, %v4865
        %v4867 = vsel %vm1347, %v4830, 0.0
        %v4868 = vsel %vm1347, %v4831, 0.0
        %v4869 = vadd.f32 %v4867, %v4868
        %v4870 = vrot.slane %v4869, 4
        %v4871 = vadd.f32 %v4869, %v4870
        %v4872 = vrot.slane %v4871, 2
        %v4873 = vadd.f32 %v4871, %v4872
        %v4874 = vrot.slane %v4873, 1
        %v4875 = vadd.f32 %v4873, %v4874
        %v4876 = vsel %vm1347, %v4832, 0.0
        %v4877 = vsel %vm1347, %v4833, 0.0
        %v4878 = vadd.f32 %v4876, %v4877
        %v4879 = vrot.slane %v4878, 4
        %v4880 = vadd.f32 %v4878, %v4879
        %v4881 = vrot.slane %v4880, 2
        %v4882 = vadd.f32 %v4880, %v4881
        %v4883 = vrot.slane %v4882, 1
        %v4884 = vadd.f32 %v4882, %v4883
        %v4885 = vsel %vm1347, %v4834, 0.0
        %v4886 = vsel %vm1347, %v4835, 0.0
        %v4887 = vadd.f32 %v4885, %v4886
        %v4888 = vrot.slane %v4887, 4
        %v4889 = vadd.f32 %v4887, %v4888
        %v4890 = vrot.slane %v4889, 2
        %v4891 = vadd.f32 %v4889, %v4890
        %v4892 = vrot.slane %v4891, 1
        %v4893 = vadd.f32 %v4891, %v4892
        %v4894 = vsel %vm1347, %v4836, 0.0
        %v4895 = vsel %vm1347, %v4837, 0.0
        %v4896 = vadd.f32 %v4894, %v4895
        %v4897 = vrot.slane %v4896, 4
        %v4898 = vadd.f32 %v4896, %v4897
        %v4899 = vrot.slane %v4898, 2
        %v4900 = vadd.f32 %v4898, %v4899
        %v4901 = vrot.slane %v4900, 1
        %v4902 = vadd.f32 %v4900, %v4901
        %v4903 = vsel %vm1347, %v4838, 0.0
        %v4904 = vsel %vm1347, %v4839, 0.0
        %v4905 = vadd.f32 %v4903, %v4904
        %v4906 = vrot.slane %v4905, 4
        %v4907 = vadd.f32 %v4905, %v4906
        %v4908 = vrot.slane %v4907, 2
        %v4909 = vadd.f32 %v4907, %v4908
        %v4910 = vrot.slane %v4909, 1
        %v4911 = vadd.f32 %v4909, %v4910
        %vm4920 = vcmask 1041409
        %v4921 = vsel %vm4920, %v2053, %v2044
        %vm4922 = vcmask 1042434
        %v4923 = vsel %vm4922, %v2062, %v4921
        %vm4924 = vcmask 1043459
        %v4925 = vsel %vm4924, %v2071, %v4923
        %vm4926 = vcmask 1044484
        %v4927 = vsel %vm4926, %v2080, %v4925
        %vm4928 = vcmask 1045509
        %v4929 = vsel %vm4928, %v2089, %v4927
        %vm4930 = vcmask 1046534
        %v4931 = vsel %vm4930, %v2098, %v4929
        %vm4932 = vcmask 1047559
        %v4933 = vsel %vm4932, %v2107, %v4931
        %v4942 = vsel %vm4920, %v3455, %v3446
        %v4943 = vsel %vm4922, %v3464, %v4942
        %v4944 = vsel %vm4924, %v3473, %v4943
        %v4945 = vsel %vm4926, %v3482, %v4944
        %v4946 = vsel %vm4928, %v3491, %v4945
        %v4947 = vsel %vm4930, %v3500, %v4946
        %v4948 = vsel %vm4932, %v3509, %v4947
        %v4957 = vsel %vm4920, %v4857, %v4848
        %v4958 = vsel %vm4922, %v4866, %v4957
        %v4959 = vsel %vm4924, %v4875, %v4958
        %v4960 = vsel %vm4926, %v4884, %v4959
        %v4961 = vsel %vm4928, %v4893, %v4960
        %v4962 = vsel %vm4930, %v4902, %v4961
        %v4963 = vsel %vm4932, %v4911, %v4962
        %v4964 = vld [vmem:[%s6] sm:$0xff]
        %v4965 = vld [vmem:[%s6 + $0x8] sm:$0xff]
        %v4966 = vld [vmem:[%s6 + $0x10] sm:$0xff]
        %v4967 = vld [vmem:[%s6 + $0x18] sm:$0xff]
        %v4968 = vld [vmem:[%s6 + $0x20] sm:$0xff]
        %v4969 = vld [vmem:[%s6 + $0x28] sm:$0xff]
        %v4970 = vld [vmem:[%s6 + $0x30] sm:$0xff]
        %v4971 = vld [vmem:[%s6 + $0x38] sm:$0xff]
        %v4972 = vld [vmem:[%s6 + $0x40] sm:$0xff]
        %v4973 = vld [vmem:[%s6 + $0x48] sm:$0xff]
        %v4974 = vld [vmem:[%s6 + $0x50] sm:$0xff]
        %v4975 = vld [vmem:[%s6 + $0x58] sm:$0xff]
        %v4976 = vld [vmem:[%s6 + $0x60] sm:$0xff]
        %v4977 = vld [vmem:[%s6 + $0x68] sm:$0xff]
        %v4978 = vld [vmem:[%s6 + $0x70] sm:$0xff]
        %v4979 = vld [vmem:[%s6 + $0x78] sm:$0xff]
        %v4980 = vld [vmem:[%s7] sm:$0x3]
        %v4982 = vlaneseq
        %v4983 = vshrl.u32 %v4982, 7
        %v4984 = vsub.s32 0, %v4983
        %v4985 = vrot.slane %v4980, %v4984
        %v4986 = vlaneseq
        %v4987 = vshrl.u32 %v4986, 7
        %v4988 = vsub.s32 1, %v4987
        %v4989 = vrot.slane %v4980, %v4988
        %v4992 = vsel %vm1347, %v4933, 0
        %v4994 = vsel %vm1347, %v4948, 0
        %v4996 = vsel %vm1347, %v4963, 0
        %4998 = vmatprep.subr.mxu0 %v4965
        %4999 = vmatpush1.msra.mxu0 %v4964
        %5000 = vmatprep.subr.mxu0 %v4967
        %5001 = vmatpush1.msra.mxu0 %v4966
        %5002 = vmatprep.subr.mxu0 %v4969
        %5003 = vmatpush1.msra.mxu0 %v4968
        %5004 = vmatprep.subr.mxu0 %v4971
        %5005 = vmatpush1.msra.mxu0 %v4970
        %5006 = vmatprep.subr.mxu0 %v4973
        %5007 = vmatpush1.msra.mxu0 %v4972
        %5008 = vmatprep.subr.mxu0 %v4975
        %5009 = vmatpush1.msra.mxu0 %v4974
        %5010 = vmatprep.subr.mxu0 %v4977
        %5011 = vmatpush1.msra.mxu0 %v4976
        %5012 = vmatprep.subr.mxu0 %v4979
        %5013 = vmatpush1.msra.mxu0 %v4978
        %5014 = vmatprep.subr.mxu0 0.0
        %5015 = vmatpush1.msra.mxu0 0.0
        %5016 = vmatprep.subr.mxu0 0.0
        %5017 = vmatpush1.msra.mxu0 0.0
        %5018 = vmatprep.subr.mxu0 0.0
        %5019 = vmatpush1.msra.mxu0 0.0
        %5020 = vmatprep.subr.mxu0 0.0
        %5021 = vmatpush1.msra.mxu0 0.0
        %5022 = vmatprep.subr.mxu0 0.0
        %5023 = vmatpush1.msra.mxu0 0.0
        %5024 = vmatprep.subr.mxu0 0.0
        %5025 = vmatpush1.msra.mxu0 0.0
        %5026 = vmatprep.subr.mxu0 0.0
        %5027 = vmatpush1.msra.mxu0 0.0
        %5028 = vmatprep.subr.mxu0 0.0
        %5029 = vmatpush1.msra.mxu0 0.0
        %5030 = vmatprep.subr.mxu0 0.0
        %5031 = vmatpush1.msra.mxu0 0.0
        %5032 = vmatprep.subr.mxu0 0.0
        %5033 = vmatpush1.msra.mxu0 0.0
        %5034 = vmatprep.subr.mxu0 0.0
        %5035 = vmatpush1.msra.mxu0 0.0
        %5036 = vmatprep.subr.mxu0 0.0
        %5037 = vmatpush1.msra.mxu0 0.0
        %5038 = vmatprep.subr.mxu0 0.0
        %5039 = vmatpush1.msra.mxu0 0.0
        %5040 = vmatprep.subr.mxu0 0.0
        %5041 = vmatpush1.msra.mxu0 0.0
        %5042 = vmatprep.subr.mxu0 0.0
        %5043 = vmatpush1.msra.mxu0 0.0
        %5044 = vmatprep.subr.mxu0 0.0
        %5045 = vmatpush1.msra.mxu0 0.0
        %5046 = vmatprep.subr.mxu0 0.0
        %5047 = vmatpush1.msra.mxu0 0.0
        %5048 = vmatprep.subr.mxu0 0.0
        %5049 = vmatpush1.msra.mxu0 0.0
        %5050 = vmatprep.subr.mxu0 0.0
        %5051 = vmatpush1.msra.mxu0 0.0
        %5052 = vmatprep.subr.mxu0 0.0
        %5053 = vmatpush1.msra.mxu0 0.0
        %5054 = vmatprep.subr.mxu0 0.0
        %5055 = vmatpush1.msra.mxu0 0.0
        %5056 = vmatprep.subr.mxu0 0.0
        %5057 = vmatpush1.msra.mxu0 0.0
        %5058 = vmatprep.subr.mxu0 0.0
        %5059 = vmatpush1.msra.mxu0 0.0
        %5060 = vmatprep.subr.mxu0 0.0
        %5061 = vmatpush1.msra.mxu0 0.0
        %5062 = vmatprep.mubr.f32.mxu0 0.0
        %5063 = vmatmul.mubr.f32.gmra.mrb[0].mxu0 %v4992
        %v5064 = vpop.f32.mrb[0].mxu0
        %v5065 = vadd.f32 %v4985, %v5064
        %v5066 = vpop.f32.mrb[0].mxu0
        %v5067 = vadd.f32 %v4989, %v5066
        %5068 = vmatprep.mubr.f32.mxu0 0.0
        %5069 = vmatmul.mubr.f32.gmra.mrb[0].mxu0 %v4994
        %v5070 = vpop.f32.mrb[0].mxu0
        %v5071 = vadd.f32 %v4985, %v5070
        %v5072 = vpop.f32.mrb[0].mxu0
        %v5073 = vadd.f32 %v4989, %v5072
        %5074 = vmatprep.mubr.f32.mxu0 0.0
        %5075 = vmatmul.mubr.f32.gmra.mrb[0].mxu0 %v4996
        %v5076 = vpop.f32.mrb[0].mxu0
        %v5077 = vadd.f32 %v4985, %v5076
        %v5078 = vpop.f32.mrb[0].mxu0
        %v5079 = vadd.f32 %v4989, %v5078
        %5080 = vdwg.mxu0
        %5082 = vrot.lane.b32.xlu0 %v5065, 64
        %v5083 = vpop.permute.xlu0 %5082
        %v5085 = vmul.f32 %v5065, %v5083
        %5087 = vrot.lane.b32.xlu0 %v5071, 64
        %v5088 = vpop.permute.xlu0 %5087
        %v5090 = vmul.f32 %v5065, %v5088
        %5092 = vrot.lane.b32.xlu0 %v5077, 64
        %v5093 = vpop.permute.xlu0 %5092
        %v5095 = vmul.f32 %v5065, %v5093
        %v5096 = vmul.f32 %v5071, %v5083
        %v5097 = vmul.f32 %v5071, %v5088
        %v5098 = vmul.f32 %v5071, %v5093
        %v5099 = vmul.f32 %v5077, %v5083
        %v5100 = vmul.f32 %v5077, %v5088
        %v5101 = vmul.f32 %v5077, %v5093
        %v5102 = vld [vmem:[%s10] sm:$0xff]
        %v5103 = vld [vmem:[%s10 + $0x8] sm:$0xff]
        %v5104 = vld [vmem:[%s10 + $0x10] sm:$0xff]
        %v5105 = vld [vmem:[%s10 + $0x18] sm:$0xff]
        %v5106 = vld [vmem:[%s10 + $0x20] sm:$0xff]
        %v5107 = vld [vmem:[%s10 + $0x28] sm:$0xff]
        %v5108 = vld [vmem:[%s10 + $0x30] sm:$0xff]
        %v5109 = vld [vmem:[%s10 + $0x38] sm:$0xff]
        %v5111 = vsel %vm1347, %v5085, 0
        %v5114 = vsel %vm1347, %v5090, 0
        %v5117 = vsel %vm1347, %v5095, 0
        %v5120 = vsel %vm1347, %v5096, 0
        %v5123 = vsel %vm1347, %v5097, 0
        %v5126 = vsel %vm1347, %v5098, 0
        %v5129 = vsel %vm1347, %v5099, 0
        %v5132 = vsel %vm1347, %v5100, 0
        %v5135 = vsel %vm1347, %v5101, 0
        %5137 = vmatprep.subr.mxu0 0.0
        %5138 = vmatpush1.msra.mxu0 %v5102
        %5139 = vmatprep.subr.mxu0 0.0
        %5140 = vmatpush1.msra.mxu0 %v5103
        %5141 = vmatprep.subr.mxu0 0.0
        %5142 = vmatpush1.msra.mxu0 %v5104
        %5143 = vmatprep.subr.mxu0 0.0
        %5144 = vmatpush1.msra.mxu0 %v5105
        %5145 = vmatprep.subr.mxu0 0.0
        %5146 = vmatpush1.msra.mxu0 %v5106
        %5147 = vmatprep.subr.mxu0 0.0
        %5148 = vmatpush1.msra.mxu0 %v5107
        %5149 = vmatprep.subr.mxu0 0.0
        %5150 = vmatpush1.msra.mxu0 %v5108
        %5151 = vmatprep.subr.mxu0 0.0
        %5152 = vmatpush1.msra.mxu0 %v5109
        %5153 = vmatprep.subr.mxu0 0.0
        %5154 = vmatpush1.msra.mxu0 0.0
        %5155 = vmatprep.subr.mxu0 0.0
        %5156 = vmatpush1.msra.mxu0 0.0
        %5157 = vmatprep.subr.mxu0 0.0
        %5158 = vmatpush1.msra.mxu0 0.0
        %5159 = vmatprep.subr.mxu0 0.0
        %5160 = vmatpush1.msra.mxu0 0.0
        %5161 = vmatprep.subr.mxu0 0.0
        %5162 = vmatpush1.msra.mxu0 0.0
        %5163 = vmatprep.subr.mxu0 0.0
        %5164 = vmatpush1.msra.mxu0 0.0
        %5165 = vmatprep.subr.mxu0 0.0
        %5166 = vmatpush1.msra.mxu0 0.0
        %5167 = vmatprep.subr.mxu0 0.0
        %5168 = vmatpush1.msra.mxu0 0.0
        %5169 = vmatprep.subr.mxu0 0.0
        %5170 = vmatpush1.msra.mxu0 0.0
        %5171 = vmatprep.subr.mxu0 0.0
        %5172 = vmatpush1.msra.mxu0 0.0
        %5173 = vmatprep.subr.mxu0 0.0
        %5174 = vmatpush1.msra.mxu0 0.0
        %5175 = vmatprep.subr.mxu0 0.0
        %5176 = vmatpush1.msra.mxu0 0.0
        %5177 = vmatprep.subr.mxu0 0.0
        %5178 = vmatpush1.msra.mxu0 0.0
        %5179 = vmatprep.subr.mxu0 0.0
        %5180 = vmatpush1.msra.mxu0 0.0
        %5181 = vmatprep.subr.mxu0 0.0
        %5182 = vmatpush1.msra.mxu0 0.0
        %5183 = vmatprep.subr.mxu0 0.0
        %5184 = vmatpush1.msra.mxu0 0.0
        %5185 = vmatprep.subr.mxu0 0.0
        %5186 = vmatpush1.msra.mxu0 0.0
        %5187 = vmatprep.subr.mxu0 0.0
        %5188 = vmatpush1.msra.mxu0 0.0
        %5189 = vmatprep.subr.mxu0 0.0
        %5190 = vmatpush1.msra.mxu0 0.0
        %5191 = vmatprep.subr.mxu0 0.0
        %5192 = vmatpush1.msra.mxu0 0.0
        %5193 = vmatprep.subr.mxu0 0.0
        %5194 = vmatpush1.msra.mxu0 0.0
        %5195 = vmatprep.subr.mxu0 0.0
        %5196 = vmatpush1.msra.mxu0 0.0
        %5197 = vmatprep.subr.mxu0 0.0
        %5198 = vmatpush1.msra.mxu0 0.0
        %5199 = vmatprep.subr.mxu0 0.0
        %5200 = vmatpush1.msra.mxu0 0.0
        %5201 = vmatprep.mubr.f32.mxu0 0.0
        %5202 = vmatmul.mubr.f32.gmra.mrb[0].mxu0 %v5111
        %v5203 = vpop.f32.mrb[0].mxu0
        %v5204 = vadd.f32 0.0, %v5203
        %v5205 = vpop.f32.mrb[0].mxu0
        %5206 = vmatprep.mubr.f32.mxu0 0.0
        %5207 = vmatmul.mubr.f32.gmra.mrb[0].mxu0 %v5114
        %v5208 = vpop.f32.mrb[0].mxu0
        %v5209 = vadd.f32 0.0, %v5208
        %v5210 = vpop.f32.mrb[0].mxu0
        %5211 = vmatprep.mubr.f32.mxu0 0.0
        %5212 = vmatmul.mubr.f32.gmra.mrb[0].mxu0 %v5117
        %v5213 = vpop.f32.mrb[0].mxu0
        %v5214 = vadd.f32 0.0, %v5213
        %v5215 = vpop.f32.mrb[0].mxu0
        %5216 = vmatprep.mubr.f32.mxu0 0.0
        %5217 = vmatmul.mubr.f32.gmra.mrb[0].mxu0 %v5120
        %v5218 = vpop.f32.mrb[0].mxu0
        %v5219 = vadd.f32 0.0, %v5218
        %v5220 = vpop.f32.mrb[0].mxu0
        %5221 = vmatprep.mubr.f32.mxu0 0.0
        %5222 = vmatmul.mubr.f32.gmra.mrb[0].mxu0 %v5123
        %v5223 = vpop.f32.mrb[0].mxu0
        %v5224 = vadd.f32 0.0, %v5223
        %v5225 = vpop.f32.mrb[0].mxu0
        %5226 = vmatprep.mubr.f32.mxu0 0.0
        %5227 = vmatmul.mubr.f32.gmra.mrb[0].mxu0 %v5126
        %v5228 = vpop.f32.mrb[0].mxu0
        %v5229 = vadd.f32 0.0, %v5228
        %v5230 = vpop.f32.mrb[0].mxu0
        %5231 = vmatprep.mubr.f32.mxu0 0.0
        %5232 = vmatmul.mubr.f32.gmra.mrb[0].mxu0 %v5129
        %v5233 = vpop.f32.mrb[0].mxu0
        %v5234 = vadd.f32 0.0, %v5233
        %v5235 = vpop.f32.mrb[0].mxu0
        %5236 = vmatprep.mubr.f32.mxu0 0.0
        %5237 = vmatmul.mubr.f32.gmra.mrb[0].mxu0 %v5132
        %v5238 = vpop.f32.mrb[0].mxu0
        %v5239 = vadd.f32 0.0, %v5238
        %v5240 = vpop.f32.mrb[0].mxu0
        %5241 = vmatprep.mubr.f32.mxu0 0.0
        %5242 = vmatmul.mubr.f32.gmra.mrb[0].mxu0 %v5135
        %v5243 = vpop.f32.mrb[0].mxu0
        %v5244 = vadd.f32 0.0, %v5243
        %v5245 = vpop.f32.mrb[0].mxu0
        %5246 = vdwg.mxu0
        %v5247 = vmax.f32 %v5204, %v5209
        %v5248 = vmax.f32 %v5247, %v5214
        %v5249 = vsub.f32 %v5204, %v5248
        %v5250 = vmul.f32 %v5249, 1.442695
        %v5251 = vpow.pop %v5250
        %v5252 = vsub.f32 %v5209, %v5248
        %v5253 = vmul.f32 %v5252, 1.442695
        %v5254 = vpow.pop %v5253
        %v5255 = vsub.f32 %v5214, %v5248
        %v5256 = vmul.f32 %v5255, 1.442695
        %v5257 = vpow.pop %v5256
        %v5258 = vadd.f32 %v5251, %v5254
        %v5259 = vadd.f32 %v5258, %v5257
        %v5260 = vrcp.pop %v5259
        %v5261 = vmul.f32 %v5251, %v5067
        %v5262 = vmul.f32 %v5254, %v5073
        %v5263 = vadd.f32 %v5261, %v5262
        %v5264 = vmul.f32 %v5257, %v5079
        %v5265 = vadd.f32 %v5263, %v5264
        %v5266 = vmul.f32 %v5265, %v5260
        %v5267 = vmax.f32 %v5219, %v5224
        %v5268 = vmax.f32 %v5267, %v5229
        %v5269 = vsub.f32 %v5219, %v5268
        %v5270 = vmul.f32 %v5269, 1.442695
        %v5271 = vpow.pop %v5270
        %v5272 = vsub.f32 %v5224, %v5268
        %v5273 = vmul.f32 %v5272, 1.442695
        %v5274 = vpow.pop %v5273
        %v5275 = vsub.f32 %v5229, %v5268
        %v5276 = vmul.f32 %v5275, 1.442695
        %v5277 = vpow.pop %v5276
        %v5278 = vadd.f32 %v5271, %v5274
        %v5279 = vadd.f32 %v5278, %v5277
        %v5280 = vrcp.pop %v5279
        %v5281 = vmul.f32 %v5271, %v5067
        %v5282 = vmul.f32 %v5274, %v5073
        %v5283 = vadd.f32 %v5281, %v5282
        %v5284 = vmul.f32 %v5277, %v5079
        %v5285 = vadd.f32 %v5283, %v5284
        %v5286 = vmul.f32 %v5285, %v5280
        %v5287 = vmax.f32 %v5234, %v5239
        %v5288 = vmax.f32 %v5287, %v5244
        %v5289 = vsub.f32 %v5234, %v5288
        %v5290 = vmul.f32 %v5289, 1.442695
        %v5291 = vpow.pop %v5290
        %v5292 = vsub.f32 %v5239, %v5288
        %v5293 = vmul.f32 %v5292, 1.442695
        %v5294 = vpow.pop %v5293
        %v5295 = vsub.f32 %v5244, %v5288
        %v5296 = vmul.f32 %v5295, 1.442695
        %v5297 = vpow.pop %v5296
        %v5298 = vadd.f32 %v5291, %v5294
        %v5299 = vadd.f32 %v5298, %v5297
        %v5300 = vrcp.pop %v5299
        %v5301 = vmul.f32 %v5291, %v5067
        %v5302 = vmul.f32 %v5294, %v5073
        %v5303 = vadd.f32 %v5301, %v5302
        %v5304 = vmul.f32 %v5297, %v5079
        %v5305 = vadd.f32 %v5303, %v5304
        %v5306 = vmul.f32 %v5305, %v5300
        %v5307 = vld [vmem:[%s8] sm:$0xff]
        %v5308 = vld [vmem:[%s8 + $0x8] sm:$0xff]
        %v5309 = vld [vmem:[%s8 + $0x10] sm:$0xff]
        %v5310 = vld [vmem:[%s8 + $0x18] sm:$0xff]
        %v5311 = vld [vmem:[%s8 + $0x20] sm:$0xff]
        %v5312 = vld [vmem:[%s8 + $0x28] sm:$0xff]
        %v5313 = vld [vmem:[%s8 + $0x30] sm:$0xff]
        %v5314 = vld [vmem:[%s8 + $0x38] sm:$0xff]
        %v5315 = vld [vmem:[%s9] sm:$0x1]
        %v5317 = vlaneseq
        %v5318 = vshrl.u32 %v5317, 7
        %v5319 = vsub.s32 0, %v5318
        %v5320 = vrot.slane %v5315, %v5319
        %v5323 = vsel %vm1347, %v5266, 0
        %v5326 = vsel %vm1347, %v5286, 0
        %v5329 = vsel %vm1347, %v5306, 0
        %5331 = vmatprep.subr.mxu0 0.0
        %5332 = vmatpush1.msra.mxu0 %v5307
        %5333 = vmatprep.subr.mxu0 0.0
        %5334 = vmatpush1.msra.mxu0 %v5308
        %5335 = vmatprep.subr.mxu0 0.0
        %5336 = vmatpush1.msra.mxu0 %v5309
        %5337 = vmatprep.subr.mxu0 0.0
        %5338 = vmatpush1.msra.mxu0 %v5310
        %5339 = vmatprep.subr.mxu0 0.0
        %5340 = vmatpush1.msra.mxu0 %v5311
        %5341 = vmatprep.subr.mxu0 0.0
        %5342 = vmatpush1.msra.mxu0 %v5312
        %5343 = vmatprep.subr.mxu0 0.0
        %5344 = vmatpush1.msra.mxu0 %v5313
        %5345 = vmatprep.subr.mxu0 0.0
        %5346 = vmatpush1.msra.mxu0 %v5314
        %5347 = vmatprep.subr.mxu0 0.0
        %5348 = vmatpush1.msra.mxu0 0.0
        %5349 = vmatprep.subr.mxu0 0.0
        %5350 = vmatpush1.msra.mxu0 0.0
        %5351 = vmatprep.subr.mxu0 0.0
        %5352 = vmatpush1.msra.mxu0 0.0
        %5353 = vmatprep.subr.mxu0 0.0
        %5354 = vmatpush1.msra.mxu0 0.0
        %5355 = vmatprep.subr.mxu0 0.0
        %5356 = vmatpush1.msra.mxu0 0.0
        %5357 = vmatprep.subr.mxu0 0.0
        %5358 = vmatpush1.msra.mxu0 0.0
        %5359 = vmatprep.subr.mxu0 0.0
        %5360 = vmatpush1.msra.mxu0 0.0
        %5361 = vmatprep.subr.mxu0 0.0
        %5362 = vmatpush1.msra.mxu0 0.0
        %5363 = vmatprep.subr.mxu0 0.0
        %5364 = vmatpush1.msra.mxu0 0.0
        %5365 = vmatprep.subr.mxu0 0.0
        %5366 = vmatpush1.msra.mxu0 0.0
        %5367 = vmatprep.subr.mxu0 0.0
        %5368 = vmatpush1.msra.mxu0 0.0
        %5369 = vmatprep.subr.mxu0 0.0
        %5370 = vmatpush1.msra.mxu0 0.0
        %5371 = vmatprep.subr.mxu0 0.0
        %5372 = vmatpush1.msra.mxu0 0.0
        %5373 = vmatprep.subr.mxu0 0.0
        %5374 = vmatpush1.msra.mxu0 0.0
        %5375 = vmatprep.subr.mxu0 0.0
        %5376 = vmatpush1.msra.mxu0 0.0
        %5377 = vmatprep.subr.mxu0 0.0
        %5378 = vmatpush1.msra.mxu0 0.0
        %5379 = vmatprep.subr.mxu0 0.0
        %5380 = vmatpush1.msra.mxu0 0.0
        %5381 = vmatprep.subr.mxu0 0.0
        %5382 = vmatpush1.msra.mxu0 0.0
        %5383 = vmatprep.subr.mxu0 0.0
        %5384 = vmatpush1.msra.mxu0 0.0
        %5385 = vmatprep.subr.mxu0 0.0
        %5386 = vmatpush1.msra.mxu0 0.0
        %5387 = vmatprep.subr.mxu0 0.0
        %5388 = vmatpush1.msra.mxu0 0.0
        %5389 = vmatprep.subr.mxu0 0.0
        %5390 = vmatpush1.msra.mxu0 0.0
        %5391 = vmatprep.subr.mxu0 0.0
        %5392 = vmatpush1.msra.mxu0 0.0
        %5393 = vmatprep.subr.mxu0 0.0
        %5394 = vmatpush1.msra.mxu0 0.0
        %5395 = vmatprep.mubr.f32.mxu0 0.0
        %5396 = vmatmul.mubr.f32.gmra.mrb[0].mxu0 %v5323
        %v5397 = vpop.f32.mrb[0].mxu0
        %v5398 = vadd.f32 %v5320, %v5397
        %v5399 = vpop.f32.mrb[0].mxu0
        %5400 = vmatprep.mubr.f32.mxu0 0.0
        %5401 = vmatmul.mubr.f32.gmra.mrb[0].mxu0 %v5326
        %v5402 = vpop.f32.mrb[0].mxu0
        %v5403 = vadd.f32 %v5320, %v5402
        %v5404 = vpop.f32.mrb[0].mxu0
        %5405 = vmatprep.mubr.f32.mxu0 0.0
        %5406 = vmatmul.mubr.f32.gmra.mrb[0].mxu0 %v5329
        %v5407 = vpop.f32.mrb[0].mxu0
        %v5408 = vadd.f32 %v5320, %v5407
        %v5409 = vpop.f32.mrb[0].mxu0
        %5410 = vdwg.mxu0
        %v5411 = vsel %vm1347, %v5398, 0.0
        %5412 = vadd.xlane.f32.xlu0 %v5411
        %v5413 = vpop.xlane.xlu0 %5412
        %v5414 = vsel %vm1347, %v5403, 0.0
        %5415 = vadd.xlane.f32.xlu0 %v5414
        %v5416 = vpop.xlane.xlu0 %5415
        %v5417 = vsel %vm1347, %v5408, 0.0
        %5418 = vadd.xlane.f32.xlu0 %v5417
        %v5419 = vpop.xlane.xlu0 %5418
        %v5420 = vrcp.pop 64.0
        %v5421 = vmul.f32 %v5413, %v5420
        %v5422 = vmul.f32 %v5416, %v5420
        %v5423 = vmul.f32 %v5419, %v5420
        %v5424 = vsub.f32 %v5398, %v5421
        %v5425 = vsub.f32 %v5403, %v5422
        %v5426 = vsub.f32 %v5408, %v5423
        %v5427 = vmul.f32 %v5424, %v5424
        %v5428 = vmul.f32 %v5425, %v5425
        %v5429 = vmul.f32 %v5426, %v5426
        %v5430 = vsel %vm1347, %v5427, 0.0
        %5431 = vadd.xlane.f32.xlu0 %v5430
        %v5432 = vpop.xlane.xlu0 %5431
        %v5433 = vsel %vm1347, %v5428, 0.0
        %5434 = vadd.xlane.f32.xlu0 %v5433
        %v5435 = vpop.xlane.xlu0 %5434
        %v5436 = vsel %vm1347, %v5429, 0.0
        %5437 = vadd.xlane.f32.xlu0 %v5436
        %v5438 = vpop.xlane.xlu0 %5437
        %v5439 = vmul.f32 %v5432, %v5420
        %v5440 = vmul.f32 %v5435, %v5420
        %v5441 = vmul.f32 %v5438, %v5420
        %v5442 = vadd.f32 %v5439, 1e-05
        %v5443 = vadd.f32 %v5440, 1e-05
        %v5444 = vadd.f32 %v5441, 1e-05
        %v5445 = vrsqrt.pop %v5442
        %v5446 = vrsqrt.pop %v5443
        %v5447 = vrsqrt.pop %v5444
        %v5448 = vmul.f32 %v5424, %v5445
        %v5449 = vmul.f32 %v5425, %v5446
        %v5450 = vmul.f32 %v5426, %v5447
        %v5451 = vld [vmem:[%s11] sm:$0x1]
        %v5453 = vlaneseq
        %v5454 = vshrl.u32 %v5453, 7
        %v5455 = vsub.s32 0, %v5454
        %v5456 = vrot.slane %v5451, %v5455
        %v5458 = vmul.f32 %v5448, %v5456
        %v5459 = vmul.f32 %v5449, %v5456
        %v5460 = vmul.f32 %v5450, %v5456
        %v5461 = vld [vmem:[%s12] sm:$0x1]
        %v5463 = vlaneseq
        %v5464 = vshrl.u32 %v5463, 7
        %v5465 = vsub.s32 0, %v5464
        %v5466 = vrot.slane %v5461, %v5465
        %v5468 = vadd.f32 %v5458, %v5466
        %v5469 = vadd.f32 %v5459, %v5466
        %v5470 = vadd.f32 %v5460, %v5466
        %v5471 = vld [vmem:[%s13] sm:$0xff]
        %v5472 = vld [vmem:[%s13 + $0x8] sm:$0xff]
        %v5473 = vld [vmem:[%s13 + $0x10] sm:$0xff]
        %v5474 = vld [vmem:[%s13 + $0x18] sm:$0xff]
        %v5475 = vld [vmem:[%s13 + $0x20] sm:$0xff]
        %v5476 = vld [vmem:[%s13 + $0x28] sm:$0xff]
        %v5477 = vld [vmem:[%s13 + $0x30] sm:$0xff]
        %v5478 = vld [vmem:[%s13 + $0x38] sm:$0xff]
        %s5479 = scalar_lea.vmem %s13, 64
        %v5480 = vld [vmem:[%s5479] sm:$0xff]
        %v5481 = vld [vmem:[%s5479 + $0x8] sm:$0xff]
        %v5482 = vld [vmem:[%s5479 + $0x10] sm:$0xff]
        %v5483 = vld [vmem:[%s5479 + $0x18] sm:$0xff]
        %v5484 = vld [vmem:[%s5479 + $0x20] sm:$0xff]
        %v5485 = vld [vmem:[%s5479 + $0x28] sm:$0xff]
        %v5486 = vld [vmem:[%s5479 + $0x30] sm:$0xff]
        %v5487 = vld [vmem:[%s5479 + $0x38] sm:$0xff]
        %v5489 = vsel %vm1347, %v5469, 0
        %5491 = vmatprep.subr.mxu0 0.0
        %5492 = vmatpush1.msra.mxu0 %v5480
        %5493 = vmatprep.subr.mxu0 0.0
        %5494 = vmatpush1.msra.mxu0 %v5481
        %5495 = vmatprep.subr.mxu0 0.0
        %5496 = vmatpush1.msra.mxu0 %v5482
        %5497 = vmatprep.subr.mxu0 0.0
        %5498 = vmatpush1.msra.mxu0 %v5483
        %5499 = vmatprep.subr.mxu0 0.0
        %5500 = vmatpush1.msra.mxu0 %v5484
        %5501 = vmatprep.subr.mxu0 0.0
        %5502 = vmatpush1.msra.mxu0 %v5485
        %5503 = vmatprep.subr.mxu0 0.0
        %5504 = vmatpush1.msra.mxu0 %v5486
        %5505 = vmatprep.subr.mxu0 0.0
        %5506 = vmatpush1.msra.mxu0 %v5487
        %5507 = vmatprep.subr.mxu0 0.0
        %5508 = vmatpush1.msra.mxu0 0.0
        %5509 = vmatprep.subr.mxu0 0.0
        %5510 = vmatpush1.msra.mxu0 0.0
        %5511 = vmatprep.subr.mxu0 0.0
        %5512 = vmatpush1.msra.mxu0 0.0
        %5513 = vmatprep.subr.mxu0 0.0
        %5514 = vmatpush1.msra.mxu0 0.0
        %5515 = vmatprep.subr.mxu0 0.0
        %5516 = vmatpush1.msra.mxu0 0.0
        %5517 = vmatprep.subr.mxu0 0.0
        %5518 = vmatpush1.msra.mxu0 0.0
        %5519 = vmatprep.subr.mxu0 0.0
        %5520 = vmatpush1.msra.mxu0 0.0
        %5521 = vmatprep.subr.mxu0 0.0
        %5522 = vmatpush1.msra.mxu0 0.0
        %5523 = vmatprep.subr.mxu0 0.0
        %5524 = vmatpush1.msra.mxu0 0.0
        %5525 = vmatprep.subr.mxu0 0.0
        %5526 = vmatpush1.msra.mxu0 0.0
        %5527 = vmatprep.subr.mxu0 0.0
        %5528 = vmatpush1.msra.mxu0 0.0
        %5529 = vmatprep.subr.mxu0 0.0
        %5530 = vmatpush1.msra.mxu0 0.0
        %5531 = vmatprep.subr.mxu0 0.0
        %5532 = vmatpush1.msra.mxu0 0.0
        %5533 = vmatprep.subr.mxu0 0.0
        %5534 = vmatpush1.msra.mxu0 0.0
        %5535 = vmatprep.subr.mxu0 0.0
        %5536 = vmatpush1.msra.mxu0 0.0
        %5537 = vmatprep.subr.mxu0 0.0
        %5538 = vmatpush1.msra.mxu0 0.0
        %5539 = vmatprep.subr.mxu0 0.0
        %5540 = vmatpush1.msra.mxu0 0.0
        %5541 = vmatprep.subr.mxu0 0.0
        %5542 = vmatpush1.msra.mxu0 0.0
        %5543 = vmatprep.subr.mxu0 0.0
        %5544 = vmatpush1.msra.mxu0 0.0
        %5545 = vmatprep.subr.mxu0 0.0
        %5546 = vmatpush1.msra.mxu0 0.0
        %5547 = vmatprep.subr.mxu0 0.0
        %5548 = vmatpush1.msra.mxu0 0.0
        %5549 = vmatprep.subr.mxu0 0.0
        %5550 = vmatpush1.msra.mxu0 0.0
        %5551 = vmatprep.subr.mxu0 0.0
        %5552 = vmatpush1.msra.mxu0 0.0
        %5553 = vmatprep.subr.mxu0 0.0
        %5554 = vmatpush1.msra.mxu0 0.0
        %5555 = vmatprep.mubr.f32.mxu0 0.0
        %5556 = vmatmul.mubr.f32.gmra.mrb[0].mxu0 %v5489
        %v5557 = vpop.f32.mrb[0].mxu0
        %v5558 = vadd.f32 0.0, %v5557
        %v5559 = vpop.f32.mrb[0].mxu0
        %5560 = vdwg.mxu0
        %v5562 = vsel %vm1347, %v5468, 0
        %5564 = vmatprep.subr.mxu0 0.0
        %5565 = vmatpush1.msra.mxu0 %v5471
        %5566 = vmatprep.subr.mxu0 0.0
        %5567 = vmatpush1.msra.mxu0 %v5472
        %5568 = vmatprep.subr.mxu0 0.0
        %5569 = vmatpush1.msra.mxu0 %v5473
        %5570 = vmatprep.subr.mxu0 0.0
        %5571 = vmatpush1.msra.mxu0 %v5474
        %5572 = vmatprep.subr.mxu0 0.0
        %5573 = vmatpush1.msra.mxu0 %v5475
        %5574 = vmatprep.subr.mxu0 0.0
        %5575 = vmatpush1.msra.mxu0 %v5476
        %5576 = vmatprep.subr.mxu0 0.0
        %5577 = vmatpush1.msra.mxu0 %v5477
        %5578 = vmatprep.subr.mxu0 0.0
        %5579 = vmatpush1.msra.mxu0 %v5478
        %5580 = vmatprep.subr.mxu0 0.0
        %5581 = vmatpush1.msra.mxu0 0.0
        %5582 = vmatprep.subr.mxu0 0.0
        %5583 = vmatpush1.msra.mxu0 0.0
        %5584 = vmatprep.subr.mxu0 0.0
        %5585 = vmatpush1.msra.mxu0 0.0
        %5586 = vmatprep.subr.mxu0 0.0
        %5587 = vmatpush1.msra.mxu0 0.0
        %5588 = vmatprep.subr.mxu0 0.0
        %5589 = vmatpush1.msra.mxu0 0.0
        %5590 = vmatprep.subr.mxu0 0.0
        %5591 = vmatpush1.msra.mxu0 0.0
        %5592 = vmatprep.subr.mxu0 0.0
        %5593 = vmatpush1.msra.mxu0 0.0
        %5594 = vmatprep.subr.mxu0 0.0
        %5595 = vmatpush1.msra.mxu0 0.0
        %5596 = vmatprep.subr.mxu0 0.0
        %5597 = vmatpush1.msra.mxu0 0.0
        %5598 = vmatprep.subr.mxu0 0.0
        %5599 = vmatpush1.msra.mxu0 0.0
        %5600 = vmatprep.subr.mxu0 0.0
        %5601 = vmatpush1.msra.mxu0 0.0
        %5602 = vmatprep.subr.mxu0 0.0
        %5603 = vmatpush1.msra.mxu0 0.0
        %5604 = vmatprep.subr.mxu0 0.0
        %5605 = vmatpush1.msra.mxu0 0.0
        %5606 = vmatprep.subr.mxu0 0.0
        %5607 = vmatpush1.msra.mxu0 0.0
        %5608 = vmatprep.subr.mxu0 0.0
        %5609 = vmatpush1.msra.mxu0 0.0
        %5610 = vmatprep.subr.mxu0 0.0
        %5611 = vmatpush1.msra.mxu0 0.0
        %5612 = vmatprep.subr.mxu0 0.0
        %5613 = vmatpush1.msra.mxu0 0.0
        %5614 = vmatprep.subr.mxu0 0.0
        %5615 = vmatpush1.msra.mxu0 0.0
        %5616 = vmatprep.subr.mxu0 0.0
        %5617 = vmatpush1.msra.mxu0 0.0
        %5618 = vmatprep.subr.mxu0 0.0
        %5619 = vmatpush1.msra.mxu0 0.0
        %5620 = vmatprep.subr.mxu0 0.0
        %5621 = vmatpush1.msra.mxu0 0.0
        %5622 = vmatprep.subr.mxu0 0.0
        %5623 = vmatpush1.msra.mxu0 0.0
        %5624 = vmatprep.subr.mxu0 0.0
        %5625 = vmatpush1.msra.mxu0 0.0
        %5626 = vmatprep.subr.mxu0 0.0
        %5627 = vmatpush1.msra.mxu0 0.0
        %5628 = vmatprep.mubr.f32.mxu0 0.0
        %5629 = vmatmul.mubr.f32.gmra.mrb[0].mxu0 %v5562
        %v5630 = vpop.f32.mrb[0].mxu0
        %v5631 = vadd.f32 %v5558, %v5630
        %v5632 = vpop.f32.mrb[0].mxu0
        %5633 = vdwg.mxu0
        %s5634 = scalar_lea.vmem %s13, 128
        %v5635 = vld [vmem:[%s5634] sm:$0xff]
        %v5636 = vld [vmem:[%s5634 + $0x8] sm:$0xff]
        %v5637 = vld [vmem:[%s5634 + $0x10] sm:$0xff]
        %v5638 = vld [vmem:[%s5634 + $0x18] sm:$0xff]
        %v5639 = vld [vmem:[%s5634 + $0x20] sm:$0xff]
        %v5640 = vld [vmem:[%s5634 + $0x28] sm:$0xff]
        %v5641 = vld [vmem:[%s5634 + $0x30] sm:$0xff]
        %v5642 = vld [vmem:[%s5634 + $0x38] sm:$0xff]
        %v5644 = vsel %vm1347, %v5470, 0
        %5646 = vmatprep.subr.mxu0 0.0
        %5647 = vmatpush1.msra.mxu0 %v5635
        %5648 = vmatprep.subr.mxu0 0.0
        %5649 = vmatpush1.msra.mxu0 %v5636
        %5650 = vmatprep.subr.mxu0 0.0
        %5651 = vmatpush1.msra.mxu0 %v5637
        %5652 = vmatprep.subr.mxu0 0.0
        %5653 = vmatpush1.msra.mxu0 %v5638
        %5654 = vmatprep.subr.mxu0 0.0
        %5655 = vmatpush1.msra.mxu0 %v5639
        %5656 = vmatprep.subr.mxu0 0.0
        %5657 = vmatpush1.msra.mxu0 %v5640
        %5658 = vmatprep.subr.mxu0 0.0
        %5659 = vmatpush1.msra.mxu0 %v5641
        %5660 = vmatprep.subr.mxu0 0.0
        %5661 = vmatpush1.msra.mxu0 %v5642
        %5662 = vmatprep.subr.mxu0 0.0
        %5663 = vmatpush1.msra.mxu0 0.0
        %5664 = vmatprep.subr.mxu0 0.0
        %5665 = vmatpush1.msra.mxu0 0.0
        %5666 = vmatprep.subr.mxu0 0.0
        %5667 = vmatpush1.msra.mxu0 0.0
        %5668 = vmatprep.subr.mxu0 0.0
        %5669 = vmatpush1.msra.mxu0 0.0
        %5670 = vmatprep.subr.mxu0 0.0
        %5671 = vmatpush1.msra.mxu0 0.0
        %5672 = vmatprep.subr.mxu0 0.0
        %5673 = vmatpush1.msra.mxu0 0.0
        %5674 = vmatprep.subr.mxu0 0.0
        %5675 = vmatpush1.msra.mxu0 0.0
        %5676 = vmatprep.subr.mxu0 0.0
        %5677 = vmatpush1.msra.mxu0 0.0
        %5678 = vmatprep.subr.mxu0 0.0
        %5679 = vmatpush1.msra.mxu0 0.0
        %5680 = vmatprep.subr.mxu0 0.0
        %5681 = vmatpush1.msra.mxu0 0.0
        %5682 = vmatprep.subr.mxu0 0.0
        %5683 = vmatpush1.msra.mxu0 0.0
        %5684 = vmatprep.subr.mxu0 0.0
        %5685 = vmatpush1.msra.mxu0 0.0
        %5686 = vmatprep.subr.mxu0 0.0
        %5687 = vmatpush1.msra.mxu0 0.0
        %5688 = vmatprep.subr.mxu0 0.0
        %5689 = vmatpush1.msra.mxu0 0.0
        %5690 = vmatprep.subr.mxu0 0.0
        %5691 = vmatpush1.msra.mxu0 0.0
        %5692 = vmatprep.subr.mxu0 0.0
        %5693 = vmatpush1.msra.mxu0 0.0
        %5694 = vmatprep.subr.mxu0 0.0
        %5695 = vmatpush1.msra.mxu0 0.0
        %5696 = vmatprep.subr.mxu0 0.0
        %5697 = vmatpush1.msra.mxu0 0.0
        %5698 = vmatprep.subr.mxu0 0.0
        %5699 = vmatpush1.msra.mxu0 0.0
        %5700 = vmatprep.subr.mxu0 0.0
        %5701 = vmatpush1.msra.mxu0 0.0
        %5702 = vmatprep.subr.mxu0 0.0
        %5703 = vmatpush1.msra.mxu0 0.0
        %5704 = vmatprep.subr.mxu0 0.0
        %5705 = vmatpush1.msra.mxu0 0.0
        %5706 = vmatprep.subr.mxu0 0.0
        %5707 = vmatpush1.msra.mxu0 0.0
        %5708 = vmatprep.subr.mxu0 0.0
        %5709 = vmatpush1.msra.mxu0 0.0
        %5710 = vmatprep.mubr.f32.mxu0 0.0
        %5711 = vmatmul.mubr.f32.gmra.mrb[0].mxu0 %v5644
        %v5712 = vpop.f32.mrb[0].mxu0
        %v5713 = vadd.f32 0.0, %v5712
        %v5714 = vpop.f32.mrb[0].mxu0
        %5715 = vdwg.mxu0
        %v5716 = vadd.f32 %v5631, %v5713
        %v5717 = vld [vmem:[%s14] sm:$0x1]
        %v5719 = vlaneseq
        %v5720 = vshrl.u32 %v5719, 7
        %v5721 = vsub.s32 0, %v5720
        %v5722 = vrot.slane %v5717, %v5721
        %v5724 = vadd.f32 %v5716, %v5722
        %5725 = vst [vmem:[%s703] sm:$0xff] %v5724
        %s5726 = sand.u32 %s357, 1
        %s5727 = scalar_lea.sflag [#allocation4], %s5726
        %s5728 = sand.u32 %s357, 1
        %s5729 = smul.addr %s5728, 8
        %s5730 = scalar_lea.vmem [#allocation3], %s5729
        // Predicated region
        $region104: #{tpu_custom_call.1} parent=98 // pred_check
          %p5731 = pneg %p367
        $region105: #{tpu_custom_call.1} parent=98 // pred_check_branch
          %5733 = sbr.rel (%p5731) target = $region107
        $region106: #{tpu_custom_call.1} parent=98 // pred_region
          %s5735 = ssub.s32 128, 128
          %5736 = vsyncadd %s5727, %s5735
          %s5737 = smul.addr %s29, 128
          %s5738 = scalar_lea.hbm %s15, %s5737
          %s5740 = sshll.u32 %s5730, 4
          %s5741 = int_to_ptr.vmem [resolvable:$true] %s5740
          %5743 = dma.vmem_to_hbm [thread:$0]  %s5741, 128, %s5738, %s5727
        $region107: #{tpu_custom_call.1} parent=98 // pred_fallthru
          _
      $region99: #{tpu_custom_call.1} parent=5 // pred_fallthru
        _
      %p5744 = scmp.le.s32.totalorder 2, %s24
      // Predicated region
      $region108: #{tpu_custom_call.1} parent=5 // pred_check
        %p5745 = pneg %p5744
      $region109: #{tpu_custom_call.1} parent=5 // pred_check_branch
        %5747 = sbr.rel (%p5745) target = $region111
      $region110: #{tpu_custom_call.1} parent=5 // pred_region
        %s5748 = ssub.s32 %s24, 2
        // Predicated region
        $region112: #{tpu_custom_call.1} parent=110 // pred_check
          %p5749 = pneg %p373
        $region113: #{tpu_custom_call.1} parent=110 // pred_check_branch
          %5751 = sbr.rel (%p5749) target = $region115
        $region114: #{tpu_custom_call.1} parent=110 // pred_region
          %s5752 = sand.u32 %s358, 1
          %s5753 = scalar_lea.sflag [#allocation4], %s5752
          %s5754 = sand.u32 %s358, 1
          %s5755 = smul.addr %s5754, 8
          %s5756 = scalar_lea.vmem [#allocation3], %s5755
          %5757 = dma.done %s5753, 128
        $region115: #{tpu_custom_call.1} parent=110 // pred_fallthru
          _
      $region111: #{tpu_custom_call.1} parent=5 // pred_fallthru
        _
    $region6: #{tpu_custom_call.1} parent=1 // loop_footer
      %s28 = sadd.s32 1, %s24
    $region7: #{tpu_custom_call.1} parent=1 // loop_footer_branch
      %23 = sbr.rel target = $region3
    $region8: #{tpu_custom_call.1} parent=1 // loop_exit
      _
    %5758 = vsyncpa [#allocation4], 1
    %s5759 = scalar_lea.sflag [#allocation4], 1
    %5760 = vsyncpa %s5759, 1

</llo_original>
